<compile_context>
chip_gen: v6e
topology: v6e:2x2x1
jax: 0.10.0
libtpu: 0.0.40
codegen_flags: <defaults>
</compile_context>

<pallas_src>
import jax
import jax.numpy as jnp
from jax.experimental import pallas as pl
from jax.experimental.pallas import tpu as pltpu

EPS = 1e-5
HIDDEN = 512


# ----------------------------------------------------------------------------
# Kernel
# ----------------------------------------------------------------------------
def _mlp_kernel(x_ref,
                s1_ref, t1_ref,
                w1_ref, b1_ref,
                w2_ref, b2_ref,
                w3_ref, b3_ref,
                o_ref):
    # x may arrive as f32 or bf16; elementwise math stays in f32.
    x = x_ref[...].astype(jnp.float32)                        # (TILE_M, 512)

    # bn1 (folded affine) -> relu -> (dropout = id)
    h = jnp.maximum(x * s1_ref[...] + t1_ref[...], 0.0)

    # fc1 with BN2 pre-folded into W1/b1; bf16 operands, f32 accumulation
    h = jnp.dot(h.astype(jnp.bfloat16), w1_ref[...],
                preferred_element_type=jnp.float32) + b1_ref[...]
    h = jnp.maximum(h, 0.0)                                   # bn2+relu (folded)

    # fc2 with BN3 pre-folded into W2/b2
    h = jnp.dot(h.astype(jnp.bfloat16), w2_ref[...],
                preferred_element_type=jnp.float32) + b2_ref[...]
    h = jnp.maximum(h, 0.0)                                   # bn3+relu (folded)

    # fc3 (512 -> 1): VPU multiply + lane reduction
    y = jnp.sum(h * w3_ref[...], axis=-1, keepdims=True) + b3_ref[...]
    o_ref[...] = jax.nn.sigmoid(y)


# ----------------------------------------------------------------------------
# Chip-aware tiling
# ----------------------------------------------------------------------------
def _round_up(v, m):
    return ((v + m - 1) // m) * m


def _chip_defaults():
    """(default_tile_m, vmem_limit_bytes) per TPU generation."""
    kind = ""
    try:
        kind = jax.devices()[0].device_kind.lower()
    except Exception:
        pass
    if "v2" in kind or "v3" in kind:
        # Legacy small-VMEM chips: keep the scoped default limit.
        return 512, None
    if "v5 lite" in kind or "v5e" in kind or "v5lite" in kind:
        # v5e: scoped default is only 16 MiB — raise it to keep the big tile.
        return 1024, 48 * 1024 * 1024
    # v6e / v7x / v5p / v4 / unknown-newer: ~22 MiB used at tile 2048.
    return 2048, 48 * 1024 * 1024


def _pick_tile_m(n, requested):
    """Clamp the tile so the grid has >=2 steps (v7x megacore) when possible."""
    if n <= 128:
        return n                       # one block equal to the full batch dim
    half = _round_up(pl.cdiv(n, 2), 128)
    return min(requested, half)


# ----------------------------------------------------------------------------
# Wrapper
# ----------------------------------------------------------------------------
def ahp_hsf_keras_forward(x, params, *, tile_m=None, vmem_limit_bytes=None):
    """x: (N, 512) float32 or bfloat16.  params: folded dict (see fold_params)."""
    n = x.shape[0]
    default_tm, default_vmem = _chip_defaults()
    if tile_m is None:
        tile_m = _pick_tile_m(n, default_tm)
    if vmem_limit_bytes is None:
        vmem_limit_bytes = default_vmem

    grid = (pl.cdiv(n, tile_m),)       # ragged last block handled by Pallas
                                       # boundary masking (no jnp.pad HBM copy)

    x_spec = pl.BlockSpec((tile_m, HIDDEN), lambda i: (i, 0))
    out_spec = pl.BlockSpec((tile_m, 1), lambda i: (i, 0))
    # Parameters: full-array blocks with a constant index_map -> VMEM-resident
    # across grid steps while x/out DMAs are double-buffered behind MXU work.
    vec_spec = pl.BlockSpec((1, HIDDEN), lambda i: (0, 0))
    mat_spec = pl.BlockSpec((HIDDEN, HIDDEN), lambda i: (0, 0))
    scl_spec = pl.BlockSpec((1, 1), lambda i: (0, 0))

    weight_bytes = (2 * HIDDEN * HIDDEN * 2      # w1, w2 bf16
                    + 6 * HIDDEN * 4 + 4)        # s1,t1,b1,b2,w3,b3 f32
    cost = pl.CostEstimate(
        flops=int(n) * (4 * HIDDEN * HIDDEN + 8 * HIDDEN),
        transcendentals=int(n),
        bytes_accessed=int(n * HIDDEN * x.dtype.itemsize + n * 4 + weight_bytes),
    )

    out = pl.pallas_call(
        _mlp_kernel,
        out_shape=jax.ShapeDtypeStruct((n, 1), jnp.float32),
        grid=grid,
        in_specs=[
            x_spec,
            vec_spec, vec_spec,          # s1, t1
            mat_spec, vec_spec,          # w1 (bf16), b1
            mat_spec, vec_spec,          # w2 (bf16), b2
            vec_spec, scl_spec,          # w3 row, b3
        ],
        out_specs=out_spec,
        compiler_params=pltpu.CompilerParams(
            dimension_semantics=("parallel",),
            vmem_limit_bytes=vmem_limit_bytes),
        cost_estimate=cost,
    )(x,
      params["s1"], params["t1"],
      params["w1"], params["b1"],
      params["w2"], params["b2"],
      params["w3"], params["b3"])

    return out


# ----------------------------------------------------------------------------
# Parameter construction (PyTorch-layout raw params) and offline folding.
# ----------------------------------------------------------------------------
def make_raw_params(key):
    """Deterministic raw params matching the PyTorch module's shapes/layout."""
    ks = jax.random.split(key, 20)

    def bn(kg, kb, km, kv):
        gamma = 1.0 + 0.1 * jax.random.normal(kg, (HIDDEN,), jnp.float32)
        beta = 0.1 * jax.random.normal(kb, (HIDDEN,), jnp.float32)
        mean = 0.1 * jax.random.normal(km, (HIDDEN,), jnp.float32)
        var = jnp.abs(1.0 + 0.1 * jax.random.normal(kv, (HIDDEN,), jnp.float32))
        return gamma, beta, mean, var

    lim = 1.0 / jnp.sqrt(jnp.float32(HIDDEN))
    raw = {}
    raw["bn1"] = bn(ks[0], ks[1], ks[2], ks[3])
    raw["bn2"] = bn(ks[4], ks[5], ks[6], ks[7])
    raw["bn3"] = bn(ks[8], ks[9], ks[10], ks[11])
    # PyTorch Linear layout: W is (out, in), y = x @ W.T + b
    raw["W1"] = jax.random.uniform(ks[12], (HIDDEN, HIDDEN), jnp.float32, -lim, lim)
    raw["b1"] = jax.random.uniform(ks[13], (HIDDEN,), jnp.float32, -lim, lim)
    raw["W2"] = jax.random.uniform(ks[14], (HIDDEN, HIDDEN), jnp.float32, -lim, lim)
    raw["b2"] = jax.random.uniform(ks[15], (HIDDEN,), jnp.float32, -lim, lim)
    raw["W3"] = jax.random.uniform(ks[16], (1, HIDDEN), jnp.float32, -lim, lim)
    raw["b3"] = jax.random.uniform(ks[17], (1,), jnp.float32, -lim, lim)
    return raw


def fold_params(raw):
    """Fold BN1/BN2/BN3 and cast matmul weights to bf16 (one-time host work).

    BN folded to affine: scale = gamma/sqrt(var+eps), shift = beta - mean*scale.
    BN2 folded into fc1:  W1' = W1^T * s2[None,:],  b1' = s2*b1 + t2
    BN3 folded into fc2:  W2' = W2^T * s3[None,:],  b2' = s3*b2 + t3
    fc3 kept as a (1, 512) row for the in-kernel lane reduction.

    NOTE: bf16 weight storage is a deliberate deviation from the f32 PyTorch
    module (~1e-2 relative drift); validate end-to-end accuracy separately.
    """
    def bn_affine(g, b, m, v):
        scale = g / jnp.sqrt(v + EPS)
        shift = b - m * scale
        return scale, shift

    s1, t1 = bn_affine(*raw["bn1"])
    s2, t2 = bn_affine(*raw["bn2"])
    s3, t3 = bn_affine(*raw["bn3"])

    w1 = raw["W1"].T * s2[None, :]          # (in, out), column-scaled by s2
    b1 = raw["b1"] * s2 + t2
    w2 = raw["W2"].T * s3[None, :]
    b2 = raw["b2"] * s3 + t3

    f32 = jnp.float32
    return dict(
        s1=s1.reshape(1, HIDDEN).astype(f32),
        t1=t1.reshape(1, HIDDEN).astype(f32),
        w1=w1.astype(jnp.bfloat16),
        b1=b1.reshape(1, HIDDEN).astype(f32),
        w2=w2.astype(jnp.bfloat16),
        b2=b2.reshape(1, HIDDEN).astype(f32),
        w3=raw["W3"].reshape(1, HIDDEN).astype(f32),
        b3=raw["b3"].reshape(1, 1).astype(f32),
    )


def _reference(x, p):
    """Pure-JAX reference using the same folded/bf16 parameters."""
    h = jnp.maximum(x.astype(jnp.float32) * p["s1"] + p["t1"], 0.0)
    h = jnp.dot(h.astype(jnp.bfloat16), p["w1"],
                preferred_element_type=jnp.float32) + p["b1"]
    h = jnp.maximum(h, 0.0)
    h = jnp.dot(h.astype(jnp.bfloat16), p["w2"],
                preferred_element_type=jnp.float32) + p["b2"]
    h = jnp.maximum(h, 0.0)
    y = jnp.sum(h * p["w3"], axis=-1, keepdims=True) + p["b3"]
    return jax.nn.sigmoid(y)


if __name__ == "__main__":
    key = jax.random.PRNGKey(0)
    kx, kp = jax.random.split(key)

    params = fold_params(make_raw_params(kp))

    # 1) f32 input, batch divisible -> auto tile gives a 2-step parallel grid.
    N1 = 256
    x1 = jax.random.normal(kx, (N1, HIDDEN), jnp.float32)
    out1 = jax.block_until_ready(ahp_hsf_keras_forward(x1, params))
    ref1 = _reference(x1, params)
    assert out1.shape == (N1, 1)
    assert jnp.allclose(out1, ref1, atol=1e-4, rtol=1e-4), \
        float(jnp.max(jnp.abs(out1 - ref1)))

    # 2) ragged batch -> partial last block (no jnp.pad HBM copy).
    N2 = 300
    x2 = jax.random.normal(jax.random.PRNGKey(7), (N2, HIDDEN), jnp.float32)
    out2 = jax.block_until_ready(ahp_hsf_keras_forward(x2, params))
    ref2 = _reference(x2, params)
    assert out2.shape == (N2, 1)
    assert jnp.allclose(out2, ref2, atol=1e-4, rtol=1e-4), \
        float(jnp.max(jnp.abs(out2 - ref2)))

    # 3) bf16 input path (HBM-stream halving for v6e when upstream supplies it).
    x3 = x1.astype(jnp.bfloat16)
    out3 = jax.block_until_ready(ahp_hsf_keras_forward(x3, params))
    ref3 = _reference(x3, params)
    assert jnp.allclose(out3, ref3, atol=1e-4, rtol=1e-4), \
        float(jnp.max(jnp.abs(out3 - ref3)))

    print("KERNEL_OK")
</pallas_src>

<mosaic_0001>
module attributes {stable_mosaic.version = 11 : i64} {
  func.func @_mlp_kernel(%arg0: i32, %arg1: memref<128x512xf32, #tpu.memory_space<vmem>>, %arg2: memref<1x512xf32, #tpu.memory_space<vmem>>, %arg3: memref<1x512xf32, #tpu.memory_space<vmem>>, %arg4: memref<512x512xbf16, #tpu.memory_space<vmem>>, %arg5: memref<1x512xf32, #tpu.memory_space<vmem>>, %arg6: memref<512x512xbf16, #tpu.memory_space<vmem>>, %arg7: memref<1x512xf32, #tpu.memory_space<vmem>>, %arg8: memref<1x512xf32, #tpu.memory_space<vmem>>, %arg9: memref<1x1xf32, #tpu.memory_space<vmem>>, %arg10: memref<128x1xf32, #tpu.memory_space<vmem>>) attributes {dimension_semantics = [#tpu.dimension_semantics<parallel>], iteration_bounds = array<i64: 2>, scalar_prefetch = 0 : i64, scratch_operands = 0 : i64, tpu.core_type = #tpu.core_type<tc>, window_params = [{transform_indices = @transform_0, window_bounds = array<i64: 128, 512>}, {pipeline_mode = #tpu.pipeline_mode<synchronous>, transform_indices = @transform_1, window_bounds = array<i64: 1, 512>}, {pipeline_mode = #tpu.pipeline_mode<synchronous>, transform_indices = @transform_2, window_bounds = array<i64: 1, 512>}, {pipeline_mode = #tpu.pipeline_mode<synchronous>, transform_indices = @transform_3, window_bounds = array<i64: 512, 512>}, {pipeline_mode = #tpu.pipeline_mode<synchronous>, transform_indices = @transform_4, window_bounds = array<i64: 1, 512>}, {pipeline_mode = #tpu.pipeline_mode<synchronous>, transform_indices = @transform_5, window_bounds = array<i64: 512, 512>}, {pipeline_mode = #tpu.pipeline_mode<synchronous>, transform_indices = @transform_6, window_bounds = array<i64: 1, 512>}, {pipeline_mode = #tpu.pipeline_mode<synchronous>, transform_indices = @transform_7, window_bounds = array<i64: 1, 512>}, {pipeline_mode = #tpu.pipeline_mode<synchronous>, transform_indices = @transform_8, window_bounds = array<i64: 1, 1>}, {transform_indices = @transform_9, window_bounds = array<i64: 128, 1>}]} {
    %c0 = arith.constant 0 : index
    %c0_0 = arith.constant 0 : index
    %0 = vector.load %arg1[%c0, %c0_0] : memref<128x512xf32, #tpu.memory_space<vmem>>, vector<128x512xf32>
    %c0_1 = arith.constant 0 : index
    %c0_2 = arith.constant 0 : index
    %1 = vector.load %arg2[%c0_1, %c0_2] : memref<1x512xf32, #tpu.memory_space<vmem>>, vector<1x512xf32>
    %2 = vector.broadcast %1 : vector<1x512xf32> to vector<128x512xf32>
    %3 = arith.mulf %0, %2 : vector<128x512xf32>
    %c0_3 = arith.constant 0 : index
    %c0_4 = arith.constant 0 : index
    %4 = vector.load %arg3[%c0_3, %c0_4] : memref<1x512xf32, #tpu.memory_space<vmem>>, vector<1x512xf32>
    %5 = vector.broadcast %4 : vector<1x512xf32> to vector<128x512xf32>
    %6 = arith.addf %3, %5 : vector<128x512xf32>
    %cst = arith.constant 0.000000e+00 : f32
    %7 = vector.broadcast %cst : f32 to vector<128x512xf32>
    %8 = arith.maximumf %6, %7 : vector<128x512xf32>
    %9 = arith.truncf %8 : vector<128x512xf32> to vector<128x512xbf16>
    %c0_5 = arith.constant 0 : index
    %c0_6 = arith.constant 0 : index
    %10 = vector.load %arg4[%c0_5, %c0_6] : memref<512x512xbf16, #tpu.memory_space<vmem>>, vector<512x512xbf16>
    %cst_7 = arith.constant dense<0.000000e+00> : vector<128x512xf32>
    %11 = tpu.matmul %9, %10, %cst_7 {dimension_numbers = #tpu.dot_dimension_numbers<[1], [0], [0], [1], [0, 0, 1, 1], [], []>} : vector<128x512xbf16>, vector<512x512xbf16>, vector<128x512xf32> -> vector<128x512xf32>
    %c0_8 = arith.constant 0 : index
    %c0_9 = arith.constant 0 : index
    %12 = vector.load %arg5[%c0_8, %c0_9] : memref<1x512xf32, #tpu.memory_space<vmem>>, vector<1x512xf32>
    %13 = vector.broadcast %12 : vector<1x512xf32> to vector<128x512xf32>
    %14 = arith.addf %11, %13 : vector<128x512xf32>
    %cst_10 = arith.constant 0.000000e+00 : f32
    %15 = vector.broadcast %cst_10 : f32 to vector<128x512xf32>
    %16 = arith.maximumf %14, %15 : vector<128x512xf32>
    %17 = arith.truncf %16 : vector<128x512xf32> to vector<128x512xbf16>
    %c0_11 = arith.constant 0 : index
    %c0_12 = arith.constant 0 : index
    %18 = vector.load %arg6[%c0_11, %c0_12] : memref<512x512xbf16, #tpu.memory_space<vmem>>, vector<512x512xbf16>
    %cst_13 = arith.constant dense<0.000000e+00> : vector<128x512xf32>
    %19 = tpu.matmul %17, %18, %cst_13 {dimension_numbers = #tpu.dot_dimension_numbers<[1], [0], [0], [1], [0, 0, 1, 1], [], []>} : vector<128x512xbf16>, vector<512x512xbf16>, vector<128x512xf32> -> vector<128x512xf32>
    %c0_14 = arith.constant 0 : index
    %c0_15 = arith.constant 0 : index
    %20 = vector.load %arg7[%c0_14, %c0_15] : memref<1x512xf32, #tpu.memory_space<vmem>>, vector<1x512xf32>
    %21 = vector.broadcast %20 : vector<1x512xf32> to vector<128x512xf32>
    %22 = arith.addf %19, %21 : vector<128x512xf32>
    %cst_16 = arith.constant 0.000000e+00 : f32
    %23 = vector.broadcast %cst_16 : f32 to vector<128x512xf32>
    %24 = arith.maximumf %22, %23 : vector<128x512xf32>
    %c0_17 = arith.constant 0 : index
    %c0_18 = arith.constant 0 : index
    %25 = vector.load %arg8[%c0_17, %c0_18] : memref<1x512xf32, #tpu.memory_space<vmem>>, vector<1x512xf32>
    %26 = vector.broadcast %25 : vector<1x512xf32> to vector<128x512xf32>
    %27 = arith.mulf %24, %26 : vector<128x512xf32>
    %cst_19 = arith.constant dense<0.000000e+00> : vector<128xf32>
    %28 = vector.multi_reduction <add>, %27, %cst_19 [1] : vector<128x512xf32> to vector<128xf32>
    %29 = vector.shape_cast %28 : vector<128xf32> to vector<128x1xf32>
    %c0_20 = arith.constant 0 : index
    %c0_21 = arith.constant 0 : index
    %30 = vector.load %arg9[%c0_20, %c0_21] : memref<1x1xf32, #tpu.memory_space<vmem>>, vector<1x1xf32>
    %31 = vector.broadcast %30 : vector<1x1xf32> to vector<128x1xf32>
    %32 = arith.addf %29, %31 : vector<128x1xf32>
    %33 = arith.negf %32 : vector<128x1xf32>
    %34 = math.exp %33 : vector<128x1xf32>
    %cst_22 = arith.constant 1.000000e+00 : f32
    %35 = vector.broadcast %cst_22 : f32 to vector<128x1xf32>
    %36 = arith.addf %35, %34 : vector<128x1xf32>
    %37 = arith.divf %35, %36 : vector<128x1xf32>
    %c0_23 = arith.constant 0 : index
    %c0_24 = arith.constant 0 : index
    %38 = vector.load %arg10[%c0_23, %c0_24] : memref<128x1xf32, #tpu.memory_space<vmem>>, vector<128x1xf32>
    tpu.vector_store %arg10[%c0_23, %c0_24], %37 {strides = array<i32>} : memref<128x1xf32, #tpu.memory_space<vmem>>, vector<128x1xf32>,
    return
  }
  func.func @transform_0(%arg0: i32) -> (i32, i32) {
    %c0_i32 = arith.constant 0 : i32
    %c0_i32_0 = arith.constant 0 : i32
    return %arg0, %c0_i32 : i32, i32
  }
  func.func @transform_1(%arg0: i32) -> (i32, i32) {
    %c0_i32 = arith.constant 0 : i32
    %c0_i32_0 = arith.constant 0 : i32
    %c0_i32_1 = arith.constant 0 : i32
    return %c0_i32, %c0_i32_0 : i32, i32
  }
  func.func @transform_2(%arg0: i32) -> (i32, i32) {
    %c0_i32 = arith.constant 0 : i32
    %c0_i32_0 = arith.constant 0 : i32
    %c0_i32_1 = arith.constant 0 : i32
    return %c0_i32, %c0_i32_0 : i32, i32
  }
  func.func @transform_3(%arg0: i32) -> (i32, i32) {
    %c0_i32 = arith.constant 0 : i32
    %c0_i32_0 = arith.constant 0 : i32
    %c0_i32_1 = arith.constant 0 : i32
    return %c0_i32, %c0_i32_0 : i32, i32
  }
  func.func @transform_4(%arg0: i32) -> (i32, i32) {
    %c0_i32 = arith.constant 0 : i32
    %c0_i32_0 = arith.constant 0 : i32
    %c0_i32_1 = arith.constant 0 : i32
    return %c0_i32, %c0_i32_0 : i32, i32
  }
  func.func @transform_5(%arg0: i32) -> (i32, i32) {
    %c0_i32 = arith.constant 0 : i32
    %c0_i32_0 = arith.constant 0 : i32
    %c0_i32_1 = arith.constant 0 : i32
    return %c0_i32, %c0_i32_0 : i32, i32
  }
  func.func @transform_6(%arg0: i32) -> (i32, i32) {
    %c0_i32 = arith.constant 0 : i32
    %c0_i32_0 = arith.constant 0 : i32
    %c0_i32_1 = arith.constant 0 : i32
    return %c0_i32, %c0_i32_0 : i32, i32
  }
  func.func @transform_7(%arg0: i32) -> (i32, i32) {
    %c0_i32 = arith.constant 0 : i32
    %c0_i32_0 = arith.constant 0 : i32
    %c0_i32_1 = arith.constant 0 : i32
    return %c0_i32, %c0_i32_0 : i32, i32
  }
  func.func @transform_8(%arg0: i32) -> (i32, i32) {
    %c0_i32 = arith.constant 0 : i32
    %c0_i32_0 = arith.constant 0 : i32
    %c0_i32_1 = arith.constant 0 : i32
    return %c0_i32, %c0_i32_0 : i32, i32
  }
  func.func @transform_9(%arg0: i32) -> (i32, i32) {
    %c0_i32 = arith.constant 0 : i32
    %c0_i32_0 = arith.constant 0 : i32
    return %arg0, %c0_i32 : i32, i32
  }
}

</mosaic_0001>

<llo_original>
// kernel: tpu_custom_call.1
$region0: #{tpu_custom_call.1}
  #allocation0 [shape = 'u32[]', space=smem, size = 0x4, offset = 0x4, fixed_abs, tag = 'smem constant byte address 0x4 - core index']
  #allocation1 [shape = 'u32[144,128]{1,0:T(1,128)}', space=vmem, size = 0x12000, scoped, tag = 'internal scratch']
  #allocation2 [shape = 'f32[1,1]{1,0:T(1,128)S(1)}', space=vmem, size = 0x200, scoped, tag = 'scoped memory for tpu_custom_call.1']
  %s0 = inlined_call_operand.hbm [shape: f32[256,512], index: 0, kind: input, shape index: {}]
  %s1 = inlined_call_operand.hbm [shape: f32[1,512], index: 1, kind: input, shape index: {}]
  %s2 = inlined_call_operand.vmem [shape: f32[1,512], index: 2, kind: input, shape index: {}]
  %s3 = inlined_call_operand.hbm [shape: bf16[512,512], index: 3, kind: input, shape index: {}]
  %s4 = inlined_call_operand.vmem [shape: f32[1,512], index: 4, kind: input, shape index: {}]
  %s5 = inlined_call_operand.hbm [shape: bf16[512,512], index: 5, kind: input, shape index: {}]
  %s6 = inlined_call_operand.vmem [shape: f32[1,512], index: 6, kind: input, shape index: {}]
  %s7 = inlined_call_operand.hbm [shape: f32[1,512], index: 7, kind: input, shape index: {}]
  %s8 = inlined_call_operand.<no memory space> [shape: f32[1,1], index: 8, kind: input, shape index: {}]
  %s9 = inlined_call_operand.vmem [shape: f32[256,1], index: 9, kind: output, shape index: {}]
  %s10 = sld [smem:[#allocation0]]
  $region89: #{tpu_custom_call.1} parent=0
    _
  %s12 = ssub.s32 1, %s10
  %s13 = scalar_select 0, %s12, %s10
  %v14 = vstv %s8
  %15 = vst [vmem:[#allocation2] sm:$0x1] %v14
  $region1: #{tpu_custom_call.1} parent=0
    #allocation3 [shape = 'u8[524288]{0}', space=vmem, size = 0x80000, scoped, tag = 'input window, operand 0']
    #allocation4 [shape = 's32[2]{0}', space=sflag, size = 0x8, scoped, tag = 'scoped memory for tpu_custom_call.1']
    #allocation5 [shape = 'u8[2048]{0}', space=vmem, size = 0x800, scoped, tag = 'input window, operand 1, single buffered']
    #allocation6 [shape = 's32[1]{0}', space=sflag, size = 0x4, scoped, tag = 'scoped memory for tpu_custom_call.1']
    #allocation7 [shape = 'u8[524288]{0}', space=vmem, size = 0x80000, scoped, tag = 'input window, operand 3, single buffered']
    #allocation8 [shape = 'u8[524288]{0}', space=vmem, size = 0x80000, scoped, tag = 'input window, operand 5, single buffered']
    #allocation9 [shape = 's32[1]{0}', space=sflag, size = 0x4, scoped, tag = 'scoped memory for tpu_custom_call.1']
    #allocation10 [shape = 'u8[2048]{0}', space=vmem, size = 0x800, scoped, tag = 'input window, operand 7, single buffered']
    %16 = vsyncpa [#allocation4], 0
    %s17 = scalar_lea.sflag [#allocation4], 1
    %18 = vsyncpa %s17, 0
    %19 = vsyncpa [#allocation6], 0
    %20 = vsyncpa [#allocation9], 0
    loop: start=0, step=1, limit=4
    $region2: #{tpu_custom_call.1} parent=1 // loop_pre_header
      _
    $region3: #{tpu_custom_call.1} parent=1 // loop_header
      %s22 = sphi 0, %s26
      %p23 = scmp.ge.s32.totalorder %s22, 4
      %s32 = sphi 0, %s34
      %s35 = sphi 0, %s32
      %s36 = sphi 0, %s35
      %s52 = sphi 0, %s36
      %s56 = sphi 0, %s56
      %s58 = sphi 0, %s56
      %s59 = sphi 0, %s58
      %s73 = sphi 0, %s59
      %s77 = sphi 0, %s77
      %s79 = sphi 0, %s77
      %s80 = sphi 0, %s79
      %s94 = sphi 0, %s80
      %s98 = sphi 0, %s98
      %s100 = sphi 0, %s98
      %s101 = sphi 0, %s100
      %s115 = sphi 0, %s101
      %s119 = sphi 0, %s119
      %s121 = sphi 0, %s119
      %s122 = sphi 0, %s121
      %s136 = sphi 0, %s122
      %s140 = sphi 0, %s140
      %s142 = sphi 0, %s140
      %s143 = sphi 0, %s142
      %s157 = sphi 0, %s143
      %s161 = sphi 0, %s161
      %s163 = sphi 0, %s161
      %s164 = sphi 0, %s163
      %s178 = sphi 0, %s164
      %s182 = sphi 0, %s182
      %s184 = sphi 0, %s182
      %s185 = sphi 0, %s184
      %s199 = sphi 0, %s185
      %s203 = sphi 0, %s203
      %s205 = sphi 0, %s203
      %s206 = sphi 0, %s205
      %s220 = sphi 0, %s206
      %s226 = sphi 0, %s228
      %s229 = sphi 0, %s226
      %s230 = sphi 0, %s229
      %s246 = sphi 0, %s230
    $region4: #{tpu_custom_call.1} parent=1 // loop_header_branch
      %25 = sbr.rel (%p23) target = $region8
    $region5: #{tpu_custom_call.1} parent=1 // loop_body
      %s27 = ssub.s32 %s22, 1
      %s28 = ssub.s32 %s22, 2
      %s29 = sadd.s32 %s22, 1
      %s30 = ssub.s32 %s22, %s29
      %p31 = scmp.eq.s32.totalorder %s30, 0
      %s33 = sadd.s32 %s32, 1
      %s34 = scalar_select %p31, %s32, %s33
      %p37 = pneg %p31
      %p38 = scmp.eq.s32.totalorder %s22, 1
      %p39 = por %p37, %p38
      %p40 = scmp.ne.s32.totalorder %s32, %s35
      %p41 = scmp.eq.s32.totalorder %s22, 0
      %p42 = por %p40, %p41
      %p43 = scmp.ne.s32.totalorder %s32, %s35
      %p44 = scmp.eq.s32.totalorder %s27, 1
      %p45 = por %p43, %p44
      %p46 = scmp.ne.s32.totalorder %s35, %s36
      %p47 = scmp.eq.s32.totalorder %s27, 0
      %p48 = por %p46, %p47
      %p49 = scmp.ne.s32.totalorder %s35, %s36
      %p50 = scmp.eq.s32.totalorder %s28, 1
      %p51 = por %p49, %p50
      %p53 = scmp.ne.s32.totalorder %s36, %s52
      %p54 = scmp.eq.s32.totalorder %s28, 0
      %p55 = por %p53, %p54
      %s57 = sadd.s32 %s56, 1
      %p60 = scmp.eq.s32.totalorder %s22, 1
      %p61 = scmp.ne.s32.totalorder %s56, %s58
      %p62 = scmp.eq.s32.totalorder %s22, 0
      %p63 = por %p61, %p62
      %p64 = scmp.ne.s32.totalorder %s56, %s58
      %p65 = scmp.eq.s32.totalorder %s27, 1
      %p66 = por %p64, %p65
      %p67 = scmp.ne.s32.totalorder %s58, %s59
      %p68 = scmp.eq.s32.totalorder %s27, 0
      %p69 = por %p67, %p68
      %p70 = scmp.ne.s32.totalorder %s58, %s59
      %p71 = scmp.eq.s32.totalorder %s28, 1
      %p72 = por %p70, %p71
      %p74 = scmp.ne.s32.totalorder %s59, %s73
      %p75 = scmp.eq.s32.totalorder %s28, 0
      %p76 = por %p74, %p75
      %s78 = sadd.s32 %s77, 1
      %p81 = scmp.eq.s32.totalorder %s22, 1
      %p82 = scmp.ne.s32.totalorder %s77, %s79
      %p83 = scmp.eq.s32.totalorder %s22, 0
      %p84 = por %p82, %p83
      %p85 = scmp.ne.s32.totalorder %s77, %s79
      %p86 = scmp.eq.s32.totalorder %s27, 1
      %p87 = por %p85, %p86
      %p88 = scmp.ne.s32.totalorder %s79, %s80
      %p89 = scmp.eq.s32.totalorder %s27, 0
      %p90 = por %p88, %p89
      %p91 = scmp.ne.s32.totalorder %s79, %s80
      %p92 = scmp.eq.s32.totalorder %s28, 1
      %p93 = por %p91, %p92
      %p95 = scmp.ne.s32.totalorder %s80, %s94
      %p96 = scmp.eq.s32.totalorder %s28, 0
      %p97 = por %p95, %p96
      %s99 = sadd.s32 %s98, 1
      %p102 = scmp.eq.s32.totalorder %s22, 1
      %p103 = scmp.ne.s32.totalorder %s98, %s100
      %p104 = scmp.eq.s32.totalorder %s22, 0
      %p105 = por %p103, %p104
      %p106 = scmp.ne.s32.totalorder %s98, %s100
      %p107 = scmp.eq.s32.totalorder %s27, 1
      %p108 = por %p106, %p107
      %p109 = scmp.ne.s32.totalorder %s100, %s101
      %p110 = scmp.eq.s32.totalorder %s27, 0
      %p111 = por %p109, %p110
      %p112 = scmp.ne.s32.totalorder %s100, %s101
      %p113 = scmp.eq.s32.totalorder %s28, 1
      %p114 = por %p112, %p113
      %p116 = scmp.ne.s32.totalorder %s101, %s115
      %p117 = scmp.eq.s32.totalorder %s28, 0
      %p118 = por %p116, %p117
      %s120 = sadd.s32 %s119, 1
      %p123 = scmp.eq.s32.totalorder %s22, 1
      %p124 = scmp.ne.s32.totalorder %s119, %s121
      %p125 = scmp.eq.s32.totalorder %s22, 0
      %p126 = por %p124, %p125
      %p127 = scmp.ne.s32.totalorder %s119, %s121
      %p128 = scmp.eq.s32.totalorder %s27, 1
      %p129 = por %p127, %p128
      %p130 = scmp.ne.s32.totalorder %s121, %s122
      %p131 = scmp.eq.s32.totalorder %s27, 0
      %p132 = por %p130, %p131
      %p133 = scmp.ne.s32.totalorder %s121, %s122
      %p134 = scmp.eq.s32.totalorder %s28, 1
      %p135 = por %p133, %p134
      %p137 = scmp.ne.s32.totalorder %s122, %s136
      %p138 = scmp.eq.s32.totalorder %s28, 0
      %p139 = por %p137, %p138
      %s141 = sadd.s32 %s140, 1
      %p144 = scmp.eq.s32.totalorder %s22, 1
      %p145 = scmp.ne.s32.totalorder %s140, %s142
      %p146 = scmp.eq.s32.totalorder %s22, 0
      %p147 = por %p145, %p146
      %p148 = scmp.ne.s32.totalorder %s140, %s142
      %p149 = scmp.eq.s32.totalorder %s27, 1
      %p150 = por %p148, %p149
      %p151 = scmp.ne.s32.totalorder %s142, %s143
      %p152 = scmp.eq.s32.totalorder %s27, 0
      %p153 = por %p151, %p152
      %p154 = scmp.ne.s32.totalorder %s142, %s143
      %p155 = scmp.eq.s32.totalorder %s28, 1
      %p156 = por %p154, %p155
      %p158 = scmp.ne.s32.totalorder %s143, %s157
      %p159 = scmp.eq.s32.totalorder %s28, 0
      %p160 = por %p158, %p159
      %s162 = sadd.s32 %s161, 1
      %p165 = scmp.eq.s32.totalorder %s22, 1
      %p166 = scmp.ne.s32.totalorder %s161, %s163
      %p167 = scmp.eq.s32.totalorder %s22, 0
      %p168 = por %p166, %p167
      %p169 = scmp.ne.s32.totalorder %s161, %s163
      %p170 = scmp.eq.s32.totalorder %s27, 1
      %p171 = por %p169, %p170
      %p172 = scmp.ne.s32.totalorder %s163, %s164
      %p173 = scmp.eq.s32.totalorder %s27, 0
      %p174 = por %p172, %p173
      %p175 = scmp.ne.s32.totalorder %s163, %s164
      %p176 = scmp.eq.s32.totalorder %s28, 1
      %p177 = por %p175, %p176
      %p179 = scmp.ne.s32.totalorder %s164, %s178
      %p180 = scmp.eq.s32.totalorder %s28, 0
      %p181 = por %p179, %p180
      %s183 = sadd.s32 %s182, 1
      %p186 = scmp.eq.s32.totalorder %s22, 1
      %p187 = scmp.ne.s32.totalorder %s182, %s184
      %p188 = scmp.eq.s32.totalorder %s22, 0
      %p189 = por %p187, %p188
      %p190 = scmp.ne.s32.totalorder %s182, %s184
      %p191 = scmp.eq.s32.totalorder %s27, 1
      %p192 = por %p190, %p191
      %p193 = scmp.ne.s32.totalorder %s184, %s185
      %p194 = scmp.eq.s32.totalorder %s27, 0
      %p195 = por %p193, %p194
      %p196 = scmp.ne.s32.totalorder %s184, %s185
      %p197 = scmp.eq.s32.totalorder %s28, 1
      %p198 = por %p196, %p197
      %p200 = scmp.ne.s32.totalorder %s185, %s199
      %p201 = scmp.eq.s32.totalorder %s28, 0
      %p202 = por %p200, %p201
      %s204 = sadd.s32 %s203, 1
      %p207 = scmp.eq.s32.totalorder %s22, 1
      %p208 = scmp.ne.s32.totalorder %s203, %s205
      %p209 = scmp.eq.s32.totalorder %s22, 0
      %p210 = por %p208, %p209
      %p211 = scmp.ne.s32.totalorder %s203, %s205
      %p212 = scmp.eq.s32.totalorder %s27, 1
      %p213 = por %p211, %p212
      %p214 = scmp.ne.s32.totalorder %s205, %s206
      %p215 = scmp.eq.s32.totalorder %s27, 0
      %p216 = por %p214, %p215
      %p217 = scmp.ne.s32.totalorder %s205, %s206
      %p218 = scmp.eq.s32.totalorder %s28, 1
      %p219 = por %p217, %p218
      %p221 = scmp.ne.s32.totalorder %s206, %s220
      %p222 = scmp.eq.s32.totalorder %s28, 0
      %p223 = por %p221, %p222
      %s224 = ssub.s32 %s22, %s29
      %p225 = scmp.eq.s32.totalorder %s224, 0
      %s227 = sadd.s32 %s226, 1
      %s228 = scalar_select %p225, %s226, %s227
      %p231 = pneg %p225
      %p232 = scmp.eq.s32.totalorder %s22, 1
      %p233 = por %p231, %p232
      %p234 = scmp.ne.s32.totalorder %s226, %s229
      %p235 = scmp.eq.s32.totalorder %s22, 0
      %p236 = por %p234, %p235
      %p237 = scmp.ne.s32.totalorder %s226, %s229
      %p238 = scmp.eq.s32.totalorder %s27, 1
      %p239 = por %p237, %p238
      %p240 = scmp.ne.s32.totalorder %s229, %s230
      %p241 = scmp.eq.s32.totalorder %s27, 0
      %p242 = por %p240, %p241
      %p243 = scmp.ne.s32.totalorder %s229, %s230
      %p244 = scmp.eq.s32.totalorder %s28, 1
      %p245 = por %p243, %p244
      %p247 = scmp.ne.s32.totalorder %s230, %s246
      %p248 = scmp.eq.s32.totalorder %s28, 0
      %p249 = por %p247, %p248
      %p250 = scmp.le.s32.totalorder 1, %s22
      %p251 = scmp.lt.s32.totalorder %s22, 3
      %p252 = pnand %p250, %p251
      %p253 = pneg %p252
      // Predicated region
      $region9: #{tpu_custom_call.1} parent=5 // pred_check
        _
      $region10: #{tpu_custom_call.1} parent=5 // pred_check_branch
        %255 = sbr.rel (%p252) target = $region12
      $region11: #{tpu_custom_call.1} parent=5 // pred_region
        %s256 = ssub.s32 %s22, 1
        // Predicated region
        $region13: #{tpu_custom_call.1} parent=11 // pred_check
          %p257 = pneg %p69
        $region14: #{tpu_custom_call.1} parent=11 // pred_check_branch
          %259 = sbr.rel (%p257) target = $region16
        $region15: #{tpu_custom_call.1} parent=11 // pred_region
          %s261 = ssub.s32 64, 64
          %262 = vsyncadd [#allocation6], %s261
          %s264 = sshll.u32 [#allocation5], 4
          %s265 = int_to_ptr.vmem [resolvable:$true] %s264
          %267 = dma.hbm_to_vmem [thread:$0]  %s1, 64, %s265, [#allocation6]
        $region16: #{tpu_custom_call.1} parent=11 // pred_fallthru
          _
        // Predicated region
        $region17: #{tpu_custom_call.1} parent=11 // pred_check
          %p268 = pneg %p90
        $region18: #{tpu_custom_call.1} parent=11 // pred_check_branch
          %270 = sbr.rel (%p268) target = $region20
        $region19: #{tpu_custom_call.1} parent=11 // pred_region
          _
        $region20: #{tpu_custom_call.1} parent=11 // pred_fallthru
          _
        // Predicated region
        $region21: #{tpu_custom_call.1} parent=11 // pred_check
          %p271 = pneg %p111
        $region22: #{tpu_custom_call.1} parent=11 // pred_check_branch
          %273 = sbr.rel (%p271) target = $region24
        $region23: #{tpu_custom_call.1} parent=11 // pred_region
          %s275 = ssub.s32 16384, 16384
          %276 = vsyncadd [#allocation6], %s275
          %s277 = sshll.u32 [#allocation7], 4
          %s278 = int_to_ptr.vmem [resolvable:$true] %s277
          %283 = dma.hbm_to_vmem [thread:$0]  %s3, 16384, %s278, [#allocation6], 256, 256, 16
        $region24: #{tpu_custom_call.1} parent=11 // pred_fallthru
          _
        // Predicated region
        $region25: #{tpu_custom_call.1} parent=11 // pred_check
          %p284 = pneg %p132
        $region26: #{tpu_custom_call.1} parent=11 // pred_check_branch
          %286 = sbr.rel (%p284) target = $region28
        $region27: #{tpu_custom_call.1} parent=11 // pred_region
          _
        $region28: #{tpu_custom_call.1} parent=11 // pred_fallthru
          _
        // Predicated region
        $region29: #{tpu_custom_call.1} parent=11 // pred_check
          %p287 = pneg %p153
        $region30: #{tpu_custom_call.1} parent=11 // pred_check_branch
          %289 = sbr.rel (%p287) target = $region32
        $region31: #{tpu_custom_call.1} parent=11 // pred_region
          %s291 = ssub.s32 16384, 16384
          %292 = vsyncadd [#allocation9], %s291
          %s293 = sshll.u32 [#allocation8], 4
          %s294 = int_to_ptr.vmem [resolvable:$true] %s293
          %299 = dma.hbm_to_vmem [thread:$0]  %s5, 16384, %s294, [#allocation9], 256, 256, 16
        $region32: #{tpu_custom_call.1} parent=11 // pred_fallthru
          _
        // Predicated region
        $region33: #{tpu_custom_call.1} parent=11 // pred_check
          %p300 = pneg %p174
        $region34: #{tpu_custom_call.1} parent=11 // pred_check_branch
          %302 = sbr.rel (%p300) target = $region36
        $region35: #{tpu_custom_call.1} parent=11 // pred_region
          _
        $region36: #{tpu_custom_call.1} parent=11 // pred_fallthru
          _
        // Predicated region
        $region37: #{tpu_custom_call.1} parent=11 // pred_check
          %p303 = pneg %p195
        $region38: #{tpu_custom_call.1} parent=11 // pred_check_branch
          %305 = sbr.rel (%p303) target = $region40
        $region39: #{tpu_custom_call.1} parent=11 // pred_region
          %s307 = ssub.s32 64, 64
          %308 = vsyncadd [#allocation9], %s307
          %s310 = sshll.u32 [#allocation10], 4
          %s311 = int_to_ptr.vmem [resolvable:$true] %s310
          %313 = dma.hbm_to_vmem [thread:$0]  %s7, 64, %s311, [#allocation9]
        $region40: #{tpu_custom_call.1} parent=11 // pred_fallthru
          _
        // Predicated region
        $region41: #{tpu_custom_call.1} parent=11 // pred_check
          %p314 = pneg %p216
        $region42: #{tpu_custom_call.1} parent=11 // pred_check_branch
          %316 = sbr.rel (%p314) target = $region44
        $region43: #{tpu_custom_call.1} parent=11 // pred_region
          _
        $region44: #{tpu_custom_call.1} parent=11 // pred_fallthru
          _
      $region12: #{tpu_custom_call.1} parent=5 // pred_fallthru
        _
      %p317 = scmp.lt.s32.totalorder %s22, 2
      // Predicated region
      $region45: #{tpu_custom_call.1} parent=5 // pred_check
        %p318 = pneg %p317
      $region46: #{tpu_custom_call.1} parent=5 // pred_check_branch
        %320 = sbr.rel (%p318) target = $region48
      $region47: #{tpu_custom_call.1} parent=5 // pred_region
        // Predicated region
        $region49: #{tpu_custom_call.1} parent=47 // pred_check
          %p321 = pneg %p42
        $region50: #{tpu_custom_call.1} parent=47 // pred_check_branch
          %323 = sbr.rel (%p321) target = $region52
        $region51: #{tpu_custom_call.1} parent=47 // pred_region
          %s324 = sand.u32 %s32, 1
          %s325 = scalar_lea.sflag [#allocation4], %s324
          %s326 = sand.u32 %s32, 1
          %s327 = smul.addr %s326, 512
          %s328 = scalar_lea.vmem [#allocation3], %s327
          %s329 = smul.u32 16, %s22
          %s331 = ssub.s32 8192, 8192
          %332 = vsyncadd %s325, %s331
          %s333 = smul.addr %s329, 4
          %s334 = smul.addr %s333, 128
          %s335 = scalar_lea.hbm %s0, %s334
          %s336 = sshll.u32 %s328, 4
          %s337 = int_to_ptr.vmem [resolvable:$true] %s336
          %342 = dma.hbm_to_vmem [thread:$0]  %s335, 8192, %s337, %s325, 512, 512, 32
        $region52: #{tpu_custom_call.1} parent=47 // pred_fallthru
          _
      $region48: #{tpu_custom_call.1} parent=5 // pred_fallthru
        _
      %p343 = scmp.le.s32.totalorder 1, %s22
      %p344 = scmp.lt.s32.totalorder %s22, 3
      %p345 = pnand %p343, %p344
      %p346 = pneg %p345
      // Predicated region
      $region53: #{tpu_custom_call.1} parent=5 // pred_check
        _
      $region54: #{tpu_custom_call.1} parent=5 // pred_check_branch
        %348 = sbr.rel (%p345) target = $region56
      $region55: #{tpu_custom_call.1} parent=5 // pred_region
        %s349 = ssub.s32 %s22, 1
        %s350 = sand.u32 %s35, 1
        %s351 = scalar_lea.sflag [#allocation4], %s350
        %s352 = sand.u32 %s35, 1
        %s353 = smul.addr %s352, 512
        %s354 = scalar_lea.vmem [#allocation3], %s353
        // Predicated region
        $region57: #{tpu_custom_call.1} parent=55 // pred_check
          %p355 = pneg %p48
        $region58: #{tpu_custom_call.1} parent=55 // pred_check_branch
          %357 = sbr.rel (%p355) target = $region60
        $region59: #{tpu_custom_call.1} parent=55 // pred_region
          %358 = dma.done %s351, 8192
        $region60: #{tpu_custom_call.1} parent=55 // pred_fallthru
          _
        // Predicated region
        $region61: #{tpu_custom_call.1} parent=55 // pred_check
          %p359 = pneg %p69
        $region62: #{tpu_custom_call.1} parent=55 // pred_check_branch
          %361 = sbr.rel (%p359) target = $region64
        $region63: #{tpu_custom_call.1} parent=55 // pred_region
          %362 = dma.done [#allocation6], 64
        $region64: #{tpu_custom_call.1} parent=55 // pred_fallthru
          _
        // Predicated region
        $region65: #{tpu_custom_call.1} parent=55 // pred_check
          %p363 = pneg %p111
        $region66: #{tpu_custom_call.1} parent=55 // pred_check_branch
          %365 = sbr.rel (%p363) target = $region68
        $region67: #{tpu_custom_call.1} parent=55 // pred_region
          %366 = dma.done [#allocation6], 16384
        $region68: #{tpu_custom_call.1} parent=55 // pred_fallthru
          _
        // Predicated region
        $region69: #{tpu_custom_call.1} parent=55 // pred_check
          %p367 = pneg %p153
        $region70: #{tpu_custom_call.1} parent=55 // pred_check_branch
          %369 = sbr.rel (%p367) target = $region72
        $region71: #{tpu_custom_call.1} parent=55 // pred_region
          %370 = dma.done [#allocation9], 16384
        $region72: #{tpu_custom_call.1} parent=55 // pred_fallthru
          _
        // Predicated region
        $region73: #{tpu_custom_call.1} parent=55 // pred_check
          %p371 = pneg %p195
        $region74: #{tpu_custom_call.1} parent=55 // pred_check_branch
          %373 = sbr.rel (%p371) target = $region76
        $region75: #{tpu_custom_call.1} parent=55 // pred_region
          %374 = dma.done [#allocation9], 64
        $region76: #{tpu_custom_call.1} parent=55 // pred_fallthru
          _
        %s375 = sand.u32 %s35, 1
        %s376 = scalar_lea.sflag [#allocation4], %s375
        %s377 = sand.u32 %s35, 1
        %s378 = smul.addr %s377, 512
        %s379 = scalar_lea.vmem [#allocation3], %s378
        %p380 = pneg %p48
        %p381 = pneg %p45
        %p382 = pneg %p69
        %p383 = pneg %p66
        %p384 = pneg %p90
        %p385 = pneg %p87
        %p386 = pneg %p111
        %p387 = pneg %p108
        %p388 = pneg %p132
        %p389 = pneg %p129
        %p390 = pneg %p153
        %p391 = pneg %p150
        %p392 = pneg %p174
        %p393 = pneg %p171
        %p394 = pneg %p195
        %p395 = pneg %p192
        %p396 = pneg %p216
        %p397 = pneg %p213
        %p398 = pneg %p242
        %p399 = pneg %p239
        %s400 = smul.u32 16, %s27
        %p401 = scmp.lt.s32.totalorder %s400, 31
        %s402 = scalar_select %p401, %s400, 31
        %s403 = smul.addr %s402, 8
        %s404 = scalar_lea.vmem %s9, %s403
        %s405 = smul.u32 16, %s27
        %s406 = smul.u32 16, %s27
        %p407 = scmp.lt.s32.totalorder %s406, 31
        %s408 = scalar_select %p407, %s406, 31
        %s409 = smul.addr %s408, 8
        %s410 = scalar_lea.vmem %s9, %s409
        %s411 = smul.u32 16, %s27
        %v412 = vld [vmem:[%s354] sm:$0xff]
        %v413 = vld [vmem:[%s354 + $0x8] sm:$0xff]
        %v414 = vld [vmem:[%s354 + $0x10] sm:$0xff]
        %v415 = vld [vmem:[%s354 + $0x18] sm:$0xff]
        %v416 = vld [vmem:[%s354 + $0x20] sm:$0xff]
        %v417 = vld [vmem:[%s354 + $0x28] sm:$0xff]
        %v418 = vld [vmem:[%s354 + $0x30] sm:$0xff]
        %v419 = vld [vmem:[%s354 + $0x38] sm:$0xff]
        %v420 = vld [vmem:[%s354 + $0x40] sm:$0xff]
        %v421 = vld [vmem:[%s354 + $0x48] sm:$0xff]
        %v422 = vld [vmem:[%s354 + $0x50] sm:$0xff]
        %v423 = vld [vmem:[%s354 + $0x58] sm:$0xff]
        %v424 = vld [vmem:[%s354 + $0x60] sm:$0xff]
        %v425 = vld [vmem:[%s354 + $0x68] sm:$0xff]
        %v426 = vld [vmem:[%s354 + $0x70] sm:$0xff]
        %v427 = vld [vmem:[%s354 + $0x78] sm:$0xff]
        %v428 = vld [vmem:[%s354 + $0x80] sm:$0xff]
        %v429 = vld [vmem:[%s354 + $0x88] sm:$0xff]
        %v430 = vld [vmem:[%s354 + $0x90] sm:$0xff]
        %v431 = vld [vmem:[%s354 + $0x98] sm:$0xff]
        %v432 = vld [vmem:[%s354 + $0xa0] sm:$0xff]
        %v433 = vld [vmem:[%s354 + $0xa8] sm:$0xff]
        %v434 = vld [vmem:[%s354 + $0xb0] sm:$0xff]
        %v435 = vld [vmem:[%s354 + $0xb8] sm:$0xff]
        %v436 = vld [vmem:[%s354 + $0xc0] sm:$0xff]
        %v437 = vld [vmem:[%s354 + $0xc8] sm:$0xff]
        %v438 = vld [vmem:[%s354 + $0xd0] sm:$0xff]
        %v439 = vld [vmem:[%s354 + $0xd8] sm:$0xff]
        %v440 = vld [vmem:[%s354 + $0xe0] sm:$0xff]
        %v441 = vld [vmem:[%s354 + $0xe8] sm:$0xff]
        %v442 = vld [vmem:[%s354 + $0xf0] sm:$0xff]
        %v443 = vld [vmem:[%s354 + $0xf8] sm:$0xff]
        %v444 = vld [vmem:[%s354 + $0x100] sm:$0xff]
        %v445 = vld [vmem:[%s354 + $0x108] sm:$0xff]
        %v446 = vld [vmem:[%s354 + $0x110] sm:$0xff]
        %v447 = vld [vmem:[%s354 + $0x118] sm:$0xff]
        %v448 = vld [vmem:[%s354 + $0x120] sm:$0xff]
        %v449 = vld [vmem:[%s354 + $0x128] sm:$0xff]
        %v450 = vld [vmem:[%s354 + $0x130] sm:$0xff]
        %v451 = vld [vmem:[%s354 + $0x138] sm:$0xff]
        %v452 = vld [vmem:[%s354 + $0x140] sm:$0xff]
        %v453 = vld [vmem:[%s354 + $0x148] sm:$0xff]
        %v454 = vld [vmem:[%s354 + $0x150] sm:$0xff]
        %v455 = vld [vmem:[%s354 + $0x158] sm:$0xff]
        %v456 = vld [vmem:[%s354 + $0x160] sm:$0xff]
        %v457 = vld [vmem:[%s354 + $0x168] sm:$0xff]
        %v458 = vld [vmem:[%s354 + $0x170] sm:$0xff]
        %v459 = vld [vmem:[%s354 + $0x178] sm:$0xff]
        %v460 = vld [vmem:[%s354 + $0x180] sm:$0xff]
        %v461 = vld [vmem:[%s354 + $0x188] sm:$0xff]
        %v462 = vld [vmem:[%s354 + $0x190] sm:$0xff]
        %v463 = vld [vmem:[%s354 + $0x198] sm:$0xff]
        %v464 = vld [vmem:[%s354 + $0x1a0] sm:$0xff]
        %v465 = vld [vmem:[%s354 + $0x1a8] sm:$0xff]
        %v466 = vld [vmem:[%s354 + $0x1b0] sm:$0xff]
        %v467 = vld [vmem:[%s354 + $0x1b8] sm:$0xff]
        %v468 = vld [vmem:[%s354 + $0x1c0] sm:$0xff]
        %v469 = vld [vmem:[%s354 + $0x1c8] sm:$0xff]
        %v470 = vld [vmem:[%s354 + $0x1d0] sm:$0xff]
        %v471 = vld [vmem:[%s354 + $0x1d8] sm:$0xff]
        %v472 = vld [vmem:[%s354 + $0x1e0] sm:$0xff]
        %v473 = vld [vmem:[%s354 + $0x1e8] sm:$0xff]
        %v474 = vld [vmem:[%s354 + $0x1f0] sm:$0xff]
        %v475 = vld [vmem:[%s354 + $0x1f8] sm:$0xff]
        %v476 = vld [vmem:[#allocation5] sm:$0xf]
        %v478 = vlaneseq
        %v479 = vshrl.u32 %v478, 7
        %v480 = vsub.s32 0, %v479
        %v481 = vrot.slane %v476, %v480
        %v482 = vlaneseq
        %v483 = vshrl.u32 %v482, 7
        %v484 = vsub.s32 1, %v483
        %v485 = vrot.slane %v476, %v484
        %v486 = vlaneseq
        %v487 = vshrl.u32 %v486, 7
        %v488 = vsub.s32 2, %v487
        %v489 = vrot.slane %v476, %v488
        %v490 = vlaneseq
        %v491 = vshrl.u32 %v490, 7
        %v492 = vsub.s32 3, %v491
        %v493 = vrot.slane %v476, %v492
        %v498 = vmul.f32 %v412, %v481
        %v499 = vmul.f32 %v413, %v485
        %v500 = vmul.f32 %v414, %v489
        %v501 = vmul.f32 %v415, %v493
        %v502 = vmul.f32 %v416, %v481
        %v503 = vmul.f32 %v417, %v485
        %v504 = vmul.f32 %v418, %v489
        %v505 = vmul.f32 %v419, %v493
        %v506 = vmul.f32 %v420, %v481
        %v507 = vmul.f32 %v421, %v485
        %v508 = vmul.f32 %v422, %v489
        %v509 = vmul.f32 %v423, %v493
        %v510 = vmul.f32 %v424, %v481
        %v511 = vmul.f32 %v425, %v485
        %v512 = vmul.f32 %v426, %v489
        %v513 = vmul.f32 %v427, %v493
        %v514 = vmul.f32 %v428, %v481
        %v515 = vmul.f32 %v429, %v485
        %v516 = vmul.f32 %v430, %v489
        %v517 = vmul.f32 %v431, %v493
        %v518 = vmul.f32 %v432, %v481
        %v519 = vmul.f32 %v433, %v485
        %v520 = vmul.f32 %v434, %v489
        %v521 = vmul.f32 %v435, %v493
        %v522 = vmul.f32 %v436, %v481
        %v523 = vmul.f32 %v437, %v485
        %v524 = vmul.f32 %v438, %v489
        %v525 = vmul.f32 %v439, %v493
        %v526 = vmul.f32 %v440, %v481
        %v527 = vmul.f32 %v441, %v485
        %v528 = vmul.f32 %v442, %v489
        %v529 = vmul.f32 %v443, %v493
        %v530 = vmul.f32 %v444, %v481
        %v531 = vmul.f32 %v445, %v485
        %v532 = vmul.f32 %v446, %v489
        %v533 = vmul.f32 %v447, %v493
        %v534 = vmul.f32 %v448, %v481
        %v535 = vmul.f32 %v449, %v485
        %v536 = vmul.f32 %v450, %v489
        %v537 = vmul.f32 %v451, %v493
        %v538 = vmul.f32 %v452, %v481
        %v539 = vmul.f32 %v453, %v485
        %v540 = vmul.f32 %v454, %v489
        %v541 = vmul.f32 %v455, %v493
        %v542 = vmul.f32 %v456, %v481
        %v543 = vmul.f32 %v457, %v485
        %v544 = vmul.f32 %v458, %v489
        %v545 = vmul.f32 %v459, %v493
        %v546 = vmul.f32 %v460, %v481
        %v547 = vmul.f32 %v461, %v485
        %v548 = vmul.f32 %v462, %v489
        %v549 = vmul.f32 %v463, %v493
        %v550 = vmul.f32 %v464, %v481
        %v551 = vmul.f32 %v465, %v485
        %v552 = vmul.f32 %v466, %v489
        %v553 = vmul.f32 %v467, %v493
        %v554 = vmul.f32 %v468, %v481
        %v555 = vmul.f32 %v469, %v485
        %v556 = vmul.f32 %v470, %v489
        %v557 = vmul.f32 %v471, %v493
        %v558 = vmul.f32 %v472, %v481
        %v559 = vmul.f32 %v473, %v485
        %v560 = vmul.f32 %v474, %v489
        %v561 = vmul.f32 %v475, %v493
        %v562 = vld [vmem:[%s2] sm:$0xf]
        %v564 = vlaneseq
        %v565 = vshrl.u32 %v564, 7
        %v566 = vsub.s32 0, %v565
        %v567 = vrot.slane %v562, %v566
        %v568 = vlaneseq
        %v569 = vshrl.u32 %v568, 7
        %v570 = vsub.s32 1, %v569
        %v571 = vrot.slane %v562, %v570
        %v572 = vlaneseq
        %v573 = vshrl.u32 %v572, 7
        %v574 = vsub.s32 2, %v573
        %v575 = vrot.slane %v562, %v574
        %v576 = vlaneseq
        %v577 = vshrl.u32 %v576, 7
        %v578 = vsub.s32 3, %v577
        %v579 = vrot.slane %v562, %v578
        %v584 = vadd.f32 %v498, %v567
        %v585 = vadd.f32 %v499, %v571
        %v586 = vadd.f32 %v500, %v575
        %v587 = vadd.f32 %v501, %v579
        %v588 = vadd.f32 %v502, %v567
        %v589 = vadd.f32 %v503, %v571
        %v590 = vadd.f32 %v504, %v575
        %v591 = vadd.f32 %v505, %v579
        %v592 = vadd.f32 %v506, %v567
        %v593 = vadd.f32 %v507, %v571
        %v594 = vadd.f32 %v508, %v575
        %v595 = vadd.f32 %v509, %v579
        %v596 = vadd.f32 %v510, %v567
        %v597 = vadd.f32 %v511, %v571
        %v598 = vadd.f32 %v512, %v575
        %v599 = vadd.f32 %v513, %v579
        %v600 = vadd.f32 %v514, %v567
        %v601 = vadd.f32 %v515, %v571
        %v602 = vadd.f32 %v516, %v575
        %v603 = vadd.f32 %v517, %v579
        %v604 = vadd.f32 %v518, %v567
        %v605 = vadd.f32 %v519, %v571
        %v606 = vadd.f32 %v520, %v575
        %v607 = vadd.f32 %v521, %v579
        %v608 = vadd.f32 %v522, %v567
        %v609 = vadd.f32 %v523, %v571
        %v610 = vadd.f32 %v524, %v575
        %v611 = vadd.f32 %v525, %v579
        %v612 = vadd.f32 %v526, %v567
        %v613 = vadd.f32 %v527, %v571
        %v614 = vadd.f32 %v528, %v575
        %v615 = vadd.f32 %v529, %v579
        %v616 = vadd.f32 %v530, %v567
        %v617 = vadd.f32 %v531, %v571
        %v618 = vadd.f32 %v532, %v575
        %v619 = vadd.f32 %v533, %v579
        %v620 = vadd.f32 %v534, %v567
        %v621 = vadd.f32 %v535, %v571
        %v622 = vadd.f32 %v536, %v575
        %v623 = vadd.f32 %v537, %v579
        %v624 = vadd.f32 %v538, %v567
        %v625 = vadd.f32 %v539, %v571
        %v626 = vadd.f32 %v540, %v575
        %v627 = vadd.f32 %v541, %v579
        %v628 = vadd.f32 %v542, %v567
        %v629 = vadd.f32 %v543, %v571
        %v630 = vadd.f32 %v544, %v575
        %v631 = vadd.f32 %v545, %v579
        %v632 = vadd.f32 %v546, %v567
        %v633 = vadd.f32 %v547, %v571
        %v634 = vadd.f32 %v548, %v575
        %v635 = vadd.f32 %v549, %v579
        %v636 = vadd.f32 %v550, %v567
        %v637 = vadd.f32 %v551, %v571
        %v638 = vadd.f32 %v552, %v575
        %v639 = vadd.f32 %v553, %v579
        %v640 = vadd.f32 %v554, %v567
        %v641 = vadd.f32 %v555, %v571
        %v642 = vadd.f32 %v556, %v575
        %v643 = vadd.f32 %v557, %v579
        %v644 = vadd.f32 %v558, %v567
        %v645 = vadd.f32 %v559, %v571
        %v646 = vadd.f32 %v560, %v575
        %v647 = vadd.f32 %v561, %v579
        %v648 = vmax.f32 %v584, 0.0
        %v649 = vmax.f32 %v585, 0.0
        %v650 = vmax.f32 %v586, 0.0
        %v651 = vmax.f32 %v587, 0.0
        %v652 = vmax.f32 %v588, 0.0
        %v653 = vmax.f32 %v589, 0.0
        %v654 = vmax.f32 %v590, 0.0
        %v655 = vmax.f32 %v591, 0.0
        %v656 = vmax.f32 %v592, 0.0
        %v657 = vmax.f32 %v593, 0.0
        %v658 = vmax.f32 %v594, 0.0
        %v659 = vmax.f32 %v595, 0.0
        %v660 = vmax.f32 %v596, 0.0
        %v661 = vmax.f32 %v597, 0.0
        %v662 = vmax.f32 %v598, 0.0
        %v663 = vmax.f32 %v599, 0.0
        %v664 = vmax.f32 %v600, 0.0
        %v665 = vmax.f32 %v601, 0.0
        %v666 = vmax.f32 %v602, 0.0
        %v667 = vmax.f32 %v603, 0.0
        %v668 = vmax.f32 %v604, 0.0
        %v669 = vmax.f32 %v605, 0.0
        %v670 = vmax.f32 %v606, 0.0
        %v671 = vmax.f32 %v607, 0.0
        %v672 = vmax.f32 %v608, 0.0
        %v673 = vmax.f32 %v609, 0.0
        %v674 = vmax.f32 %v610, 0.0
        %v675 = vmax.f32 %v611, 0.0
        %v676 = vmax.f32 %v612, 0.0
        %v677 = vmax.f32 %v613, 0.0
        %v678 = vmax.f32 %v614, 0.0
        %v679 = vmax.f32 %v615, 0.0
        %v680 = vmax.f32 %v616, 0.0
        %v681 = vmax.f32 %v617, 0.0
        %v682 = vmax.f32 %v618, 0.0
        %v683 = vmax.f32 %v619, 0.0
        %v684 = vmax.f32 %v620, 0.0
        %v685 = vmax.f32 %v621, 0.0
        %v686 = vmax.f32 %v622, 0.0
        %v687 = vmax.f32 %v623, 0.0
        %v688 = vmax.f32 %v624, 0.0
        %v689 = vmax.f32 %v625, 0.0
        %v690 = vmax.f32 %v626, 0.0
        %v691 = vmax.f32 %v627, 0.0
        %v692 = vmax.f32 %v628, 0.0
        %v693 = vmax.f32 %v629, 0.0
        %v694 = vmax.f32 %v630, 0.0
        %v695 = vmax.f32 %v631, 0.0
        %v696 = vmax.f32 %v632, 0.0
        %v697 = vmax.f32 %v633, 0.0
        %v698 = vmax.f32 %v634, 0.0
        %v699 = vmax.f32 %v635, 0.0
        %v700 = vmax.f32 %v636, 0.0
        %v701 = vmax.f32 %v637, 0.0
        %v702 = vmax.f32 %v638, 0.0
        %v703 = vmax.f32 %v639, 0.0
        %v704 = vmax.f32 %v640, 0.0
        %v705 = vmax.f32 %v641, 0.0
        %v706 = vmax.f32 %v642, 0.0
        %v707 = vmax.f32 %v643, 0.0
        %v708 = vmax.f32 %v644, 0.0
        %v709 = vmax.f32 %v645, 0.0
        %v710 = vmax.f32 %v646, 0.0
        %v711 = vmax.f32 %v647, 0.0
        %v712 = vpack.c.bf16 %v652, %v648
        %v713 = vpack.c.bf16 %v653, %v649
        %v714 = vpack.c.bf16 %v654, %v650
        %v715 = vpack.c.bf16 %v655, %v651
        %v716 = vpack.c.bf16 %v660, %v656
        %v717 = vpack.c.bf16 %v661, %v657
        %v718 = vpack.c.bf16 %v662, %v658
        %v719 = vpack.c.bf16 %v663, %v659
        %v720 = vpack.c.bf16 %v668, %v664
        %v721 = vpack.c.bf16 %v669, %v665
        %v722 = vpack.c.bf16 %v670, %v666
        %v723 = vpack.c.bf16 %v671, %v667
        %v724 = vpack.c.bf16 %v676, %v672
        %v725 = vpack.c.bf16 %v677, %v673
        %v726 = vpack.c.bf16 %v678, %v674
        %v727 = vpack.c.bf16 %v679, %v675
        %v728 = vpack.c.bf16 %v684, %v680
        %v729 = vpack.c.bf16 %v685, %v681
        %v730 = vpack.c.bf16 %v686, %v682
        %v731 = vpack.c.bf16 %v687, %v683
        %v732 = vpack.c.bf16 %v692, %v688
        %v733 = vpack.c.bf16 %v693, %v689
        %v734 = vpack.c.bf16 %v694, %v690
        %v735 = vpack.c.bf16 %v695, %v691
        %v736 = vpack.c.bf16 %v700, %v696
        %v737 = vpack.c.bf16 %v701, %v697
        %v738 = vpack.c.bf16 %v702, %v698
        %v739 = vpack.c.bf16 %v703, %v699
        %v740 = vpack.c.bf16 %v708, %v704
        %v741 = vpack.c.bf16 %v709, %v705
        %v742 = vpack.c.bf16 %v710, %v706
        %v743 = vpack.c.bf16 %v711, %v707
        %v744 = vld [vmem:[#allocation7] sm:$0xff]
        %v745 = vld [vmem:[#allocation7 + $0x8] sm:$0xff]
        %v746 = vld [vmem:[#allocation7 + $0x10] sm:$0xff]
        %v747 = vld [vmem:[#allocation7 + $0x18] sm:$0xff]
        %v748 = vld [vmem:[#allocation7 + $0x20] sm:$0xff]
        %v749 = vld [vmem:[#allocation7 + $0x28] sm:$0xff]
        %v750 = vld [vmem:[#allocation7 + $0x30] sm:$0xff]
        %v751 = vld [vmem:[#allocation7 + $0x38] sm:$0xff]
        %v752 = vld [vmem:[#allocation7 + $0x40] sm:$0xff]
        %v753 = vld [vmem:[#allocation7 + $0x48] sm:$0xff]
        %v754 = vld [vmem:[#allocation7 + $0x50] sm:$0xff]
        %v755 = vld [vmem:[#allocation7 + $0x58] sm:$0xff]
        %v756 = vld [vmem:[#allocation7 + $0x60] sm:$0xff]
        %v757 = vld [vmem:[#allocation7 + $0x68] sm:$0xff]
        %v758 = vld [vmem:[#allocation7 + $0x70] sm:$0xff]
        %v759 = vld [vmem:[#allocation7 + $0x78] sm:$0xff]
        %v760 = vld [vmem:[#allocation7 + $0x80] sm:$0xff]
        %v761 = vld [vmem:[#allocation7 + $0x88] sm:$0xff]
        %v762 = vld [vmem:[#allocation7 + $0x90] sm:$0xff]
        %v763 = vld [vmem:[#allocation7 + $0x98] sm:$0xff]
        %v764 = vld [vmem:[#allocation7 + $0xa0] sm:$0xff]
        %v765 = vld [vmem:[#allocation7 + $0xa8] sm:$0xff]
        %v766 = vld [vmem:[#allocation7 + $0xb0] sm:$0xff]
        %v767 = vld [vmem:[#allocation7 + $0xb8] sm:$0xff]
        %v768 = vld [vmem:[#allocation7 + $0xc0] sm:$0xff]
        %v769 = vld [vmem:[#allocation7 + $0xc8] sm:$0xff]
        %v770 = vld [vmem:[#allocation7 + $0xd0] sm:$0xff]
        %v771 = vld [vmem:[#allocation7 + $0xd8] sm:$0xff]
        %v772 = vld [vmem:[#allocation7 + $0xe0] sm:$0xff]
        %v773 = vld [vmem:[#allocation7 + $0xe8] sm:$0xff]
        %v774 = vld [vmem:[#allocation7 + $0xf0] sm:$0xff]
        %v775 = vld [vmem:[#allocation7 + $0xf8] sm:$0xff]
        %v776 = vld [vmem:[#allocation7 + $0x100] sm:$0xff]
        %v777 = vld [vmem:[#allocation7 + $0x108] sm:$0xff]
        %v778 = vld [vmem:[#allocation7 + $0x110] sm:$0xff]
        %v779 = vld [vmem:[#allocation7 + $0x118] sm:$0xff]
        %v780 = vld [vmem:[#allocation7 + $0x120] sm:$0xff]
        %v781 = vld [vmem:[#allocation7 + $0x128] sm:$0xff]
        %v782 = vld [vmem:[#allocation7 + $0x130] sm:$0xff]
        %v783 = vld [vmem:[#allocation7 + $0x138] sm:$0xff]
        %v784 = vld [vmem:[#allocation7 + $0x140] sm:$0xff]
        %v785 = vld [vmem:[#allocation7 + $0x148] sm:$0xff]
        %v786 = vld [vmem:[#allocation7 + $0x150] sm:$0xff]
        %v787 = vld [vmem:[#allocation7 + $0x158] sm:$0xff]
        %v788 = vld [vmem:[#allocation7 + $0x160] sm:$0xff]
        %v789 = vld [vmem:[#allocation7 + $0x168] sm:$0xff]
        %v790 = vld [vmem:[#allocation7 + $0x170] sm:$0xff]
        %v791 = vld [vmem:[#allocation7 + $0x178] sm:$0xff]
        %v792 = vld [vmem:[#allocation7 + $0x180] sm:$0xff]
        %v793 = vld [vmem:[#allocation7 + $0x188] sm:$0xff]
        %v794 = vld [vmem:[#allocation7 + $0x190] sm:$0xff]
        %v795 = vld [vmem:[#allocation7 + $0x198] sm:$0xff]
        %v796 = vld [vmem:[#allocation7 + $0x1a0] sm:$0xff]
        %v797 = vld [vmem:[#allocation7 + $0x1a8] sm:$0xff]
        %v798 = vld [vmem:[#allocation7 + $0x1b0] sm:$0xff]
        %v799 = vld [vmem:[#allocation7 + $0x1b8] sm:$0xff]
        %v800 = vld [vmem:[#allocation7 + $0x1c0] sm:$0xff]
        %v801 = vld [vmem:[#allocation7 + $0x1c8] sm:$0xff]
        %v802 = vld [vmem:[#allocation7 + $0x1d0] sm:$0xff]
        %v803 = vld [vmem:[#allocation7 + $0x1d8] sm:$0xff]
        %v804 = vld [vmem:[#allocation7 + $0x1e0] sm:$0xff]
        %v805 = vld [vmem:[#allocation7 + $0x1e8] sm:$0xff]
        %v806 = vld [vmem:[#allocation7 + $0x1f0] sm:$0xff]
        %v807 = vld [vmem:[#allocation7 + $0x1f8] sm:$0xff]
        %v808 = vld [vmem:[#allocation7 + $0x200] sm:$0xff]
        %v809 = vld [vmem:[#allocation7 + $0x208] sm:$0xff]
        %v810 = vld [vmem:[#allocation7 + $0x210] sm:$0xff]
        %v811 = vld [vmem:[#allocation7 + $0x218] sm:$0xff]
        %v812 = vld [vmem:[#allocation7 + $0x220] sm:$0xff]
        %v813 = vld [vmem:[#allocation7 + $0x228] sm:$0xff]
        %v814 = vld [vmem:[#allocation7 + $0x230] sm:$0xff]
        %v815 = vld [vmem:[#allocation7 + $0x238] sm:$0xff]
        %v816 = vld [vmem:[#allocation7 + $0x240] sm:$0xff]
        %v817 = vld [vmem:[#allocation7 + $0x248] sm:$0xff]
        %v818 = vld [vmem:[#allocation7 + $0x250] sm:$0xff]
        %v819 = vld [vmem:[#allocation7 + $0x258] sm:$0xff]
        %v820 = vld [vmem:[#allocation7 + $0x260] sm:$0xff]
        %v821 = vld [vmem:[#allocation7 + $0x268] sm:$0xff]
        %v822 = vld [vmem:[#allocation7 + $0x270] sm:$0xff]
        %v823 = vld [vmem:[#allocation7 + $0x278] sm:$0xff]
        %v824 = vld [vmem:[#allocation7 + $0x280] sm:$0xff]
        %v825 = vld [vmem:[#allocation7 + $0x288] sm:$0xff]
        %v826 = vld [vmem:[#allocation7 + $0x290] sm:$0xff]
        %v827 = vld [vmem:[#allocation7 + $0x298] sm:$0xff]
        %v828 = vld [vmem:[#allocation7 + $0x2a0] sm:$0xff]
        %v829 = vld [vmem:[#allocation7 + $0x2a8] sm:$0xff]
        %v830 = vld [vmem:[#allocation7 + $0x2b0] sm:$0xff]
        %v831 = vld [vmem:[#allocation7 + $0x2b8] sm:$0xff]
        %v832 = vld [vmem:[#allocation7 + $0x2c0] sm:$0xff]
        %v833 = vld [vmem:[#allocation7 + $0x2c8] sm:$0xff]
        %v834 = vld [vmem:[#allocation7 + $0x2d0] sm:$0xff]
        %v835 = vld [vmem:[#allocation7 + $0x2d8] sm:$0xff]
        %v836 = vld [vmem:[#allocation7 + $0x2e0] sm:$0xff]
        %v837 = vld [vmem:[#allocation7 + $0x2e8] sm:$0xff]
        %v838 = vld [vmem:[#allocation7 + $0x2f0] sm:$0xff]
        %v839 = vld [vmem:[#allocation7 + $0x2f8] sm:$0xff]
        %v840 = vld [vmem:[#allocation7 + $0x300] sm:$0xff]
        %v841 = vld [vmem:[#allocation7 + $0x308] sm:$0xff]
        %v842 = vld [vmem:[#allocation7 + $0x310] sm:$0xff]
        %v843 = vld [vmem:[#allocation7 + $0x318] sm:$0xff]
        %v844 = vld [vmem:[#allocation7 + $0x320] sm:$0xff]
        %v845 = vld [vmem:[#allocation7 + $0x328] sm:$0xff]
        %v846 = vld [vmem:[#allocation7 + $0x330] sm:$0xff]
        %v847 = vld [vmem:[#allocation7 + $0x338] sm:$0xff]
        %v848 = vld [vmem:[#allocation7 + $0x340] sm:$0xff]
        %v849 = vld [vmem:[#allocation7 + $0x348] sm:$0xff]
        %v850 = vld [vmem:[#allocation7 + $0x350] sm:$0xff]
        %v851 = vld [vmem:[#allocation7 + $0x358] sm:$0xff]
        %v852 = vld [vmem:[#allocation7 + $0x360] sm:$0xff]
        %v853 = vld [vmem:[#allocation7 + $0x368] sm:$0xff]
        %v854 = vld [vmem:[#allocation7 + $0x370] sm:$0xff]
        %v855 = vld [vmem:[#allocation7 + $0x378] sm:$0xff]
        %v856 = vld [vmem:[#allocation7 + $0x380] sm:$0xff]
        %v857 = vld [vmem:[#allocation7 + $0x388] sm:$0xff]
        %v858 = vld [vmem:[#allocation7 + $0x390] sm:$0xff]
        %v859 = vld [vmem:[#allocation7 + $0x398] sm:$0xff]
        %v860 = vld [vmem:[#allocation7 + $0x3a0] sm:$0xff]
        %v861 = vld [vmem:[#allocation7 + $0x3a8] sm:$0xff]
        %v862 = vld [vmem:[#allocation7 + $0x3b0] sm:$0xff]
        %v863 = vld [vmem:[#allocation7 + $0x3b8] sm:$0xff]
        %v864 = vld [vmem:[#allocation7 + $0x3c0] sm:$0xff]
        %v865 = vld [vmem:[#allocation7 + $0x3c8] sm:$0xff]
        %v866 = vld [vmem:[#allocation7 + $0x3d0] sm:$0xff]
        %v867 = vld [vmem:[#allocation7 + $0x3d8] sm:$0xff]
        %v868 = vld [vmem:[#allocation7 + $0x3e0] sm:$0xff]
        %v869 = vld [vmem:[#allocation7 + $0x3e8] sm:$0xff]
        %v870 = vld [vmem:[#allocation7 + $0x3f0] sm:$0xff]
        %v871 = vld [vmem:[#allocation7 + $0x3f8] sm:$0xff]
        %v872 = vld [vmem:[%s4] sm:$0xf]
        %v874 = vlaneseq
        %v875 = vshrl.u32 %v874, 7
        %v876 = vsub.s32 0, %v875
        %v877 = vrot.slane %v872, %v876
        %v878 = vlaneseq
        %v879 = vshrl.u32 %v878, 7
        %v880 = vsub.s32 1, %v879
        %v881 = vrot.slane %v872, %v880
        %v882 = vlaneseq
        %v883 = vshrl.u32 %v882, 7
        %v884 = vsub.s32 2, %v883
        %v885 = vrot.slane %v872, %v884
        %v886 = vlaneseq
        %v887 = vshrl.u32 %v886, 7
        %v888 = vsub.s32 3, %v887
        %v889 = vrot.slane %v872, %v888
        %v1022 = vunpack.c.l.b16 %v744
        %v1023 = vunpack.c.h.b16 %v744
        %v1024 = vunpack.c.l.b16 %v745
        %v1025 = vunpack.c.h.b16 %v745
        %v1026 = vunpack.c.l.b16 %v746
        %v1027 = vunpack.c.h.b16 %v746
        %v1028 = vunpack.c.l.b16 %v747
        %v1029 = vunpack.c.h.b16 %v747
        %v1030 = vunpack.c.l.b16 %v748
        %v1031 = vunpack.c.h.b16 %v748
        %v1032 = vunpack.c.l.b16 %v749
        %v1033 = vunpack.c.h.b16 %v749
        %v1034 = vunpack.c.l.b16 %v750
        %v1035 = vunpack.c.h.b16 %v750
        %v1036 = vunpack.c.l.b16 %v751
        %v1037 = vunpack.c.h.b16 %v751
        %v1038 = vunpack.c.l.b16 %v752
        %v1039 = vunpack.c.h.b16 %v752
        %v1040 = vunpack.c.l.b16 %v753
        %v1041 = vunpack.c.h.b16 %v753
        %v1042 = vunpack.c.l.b16 %v754
        %v1043 = vunpack.c.h.b16 %v754
        %v1044 = vunpack.c.l.b16 %v755
        %v1045 = vunpack.c.h.b16 %v755
        %v1046 = vunpack.c.l.b16 %v756
        %v1047 = vunpack.c.h.b16 %v756
        %v1048 = vunpack.c.l.b16 %v757
        %v1049 = vunpack.c.h.b16 %v757
        %v1050 = vunpack.c.l.b16 %v758
        %v1051 = vunpack.c.h.b16 %v758
        %v1052 = vunpack.c.l.b16 %v759
        %v1053 = vunpack.c.h.b16 %v759
        %v1054 = vunpack.c.l.b16 %v760
        %v1055 = vunpack.c.h.b16 %v760
        %v1056 = vunpack.c.l.b16 %v761
        %v1057 = vunpack.c.h.b16 %v761
        %v1058 = vunpack.c.l.b16 %v762
        %v1059 = vunpack.c.h.b16 %v762
        %v1060 = vunpack.c.l.b16 %v763
        %v1061 = vunpack.c.h.b16 %v763
        %v1062 = vunpack.c.l.b16 %v764
        %v1063 = vunpack.c.h.b16 %v764
        %v1064 = vunpack.c.l.b16 %v765
        %v1065 = vunpack.c.h.b16 %v765
        %v1066 = vunpack.c.l.b16 %v766
        %v1067 = vunpack.c.h.b16 %v766
        %v1068 = vunpack.c.l.b16 %v767
        %v1069 = vunpack.c.h.b16 %v767
        %v1070 = vunpack.c.l.b16 %v768
        %v1071 = vunpack.c.h.b16 %v768
        %v1072 = vunpack.c.l.b16 %v769
        %v1073 = vunpack.c.h.b16 %v769
        %v1074 = vunpack.c.l.b16 %v770
        %v1075 = vunpack.c.h.b16 %v770
        %v1076 = vunpack.c.l.b16 %v771
        %v1077 = vunpack.c.h.b16 %v771
        %v1078 = vunpack.c.l.b16 %v772
        %v1079 = vunpack.c.h.b16 %v772
        %v1080 = vunpack.c.l.b16 %v773
        %v1081 = vunpack.c.h.b16 %v773
        %v1082 = vunpack.c.l.b16 %v774
        %v1083 = vunpack.c.h.b16 %v774
        %v1084 = vunpack.c.l.b16 %v775
        %v1085 = vunpack.c.h.b16 %v775
        %v1086 = vunpack.c.l.b16 %v776
        %v1087 = vunpack.c.h.b16 %v776
        %v1088 = vunpack.c.l.b16 %v777
        %v1089 = vunpack.c.h.b16 %v777
        %v1090 = vunpack.c.l.b16 %v778
        %v1091 = vunpack.c.h.b16 %v778
        %v1092 = vunpack.c.l.b16 %v779
        %v1093 = vunpack.c.h.b16 %v779
        %v1094 = vunpack.c.l.b16 %v780
        %v1095 = vunpack.c.h.b16 %v780
        %v1096 = vunpack.c.l.b16 %v781
        %v1097 = vunpack.c.h.b16 %v781
        %v1098 = vunpack.c.l.b16 %v782
        %v1099 = vunpack.c.h.b16 %v782
        %v1100 = vunpack.c.l.b16 %v783
        %v1101 = vunpack.c.h.b16 %v783
        %v1102 = vunpack.c.l.b16 %v784
        %v1103 = vunpack.c.h.b16 %v784
        %v1104 = vunpack.c.l.b16 %v785
        %v1105 = vunpack.c.h.b16 %v785
        %v1106 = vunpack.c.l.b16 %v786
        %v1107 = vunpack.c.h.b16 %v786
        %v1108 = vunpack.c.l.b16 %v787
        %v1109 = vunpack.c.h.b16 %v787
        %v1110 = vunpack.c.l.b16 %v788
        %v1111 = vunpack.c.h.b16 %v788
        %v1112 = vunpack.c.l.b16 %v789
        %v1113 = vunpack.c.h.b16 %v789
        %v1114 = vunpack.c.l.b16 %v790
        %v1115 = vunpack.c.h.b16 %v790
        %v1116 = vunpack.c.l.b16 %v791
        %v1117 = vunpack.c.h.b16 %v791
        %v1118 = vunpack.c.l.b16 %v792
        %v1119 = vunpack.c.h.b16 %v792
        %v1120 = vunpack.c.l.b16 %v793
        %v1121 = vunpack.c.h.b16 %v793
        %v1122 = vunpack.c.l.b16 %v794
        %v1123 = vunpack.c.h.b16 %v794
        %v1124 = vunpack.c.l.b16 %v795
        %v1125 = vunpack.c.h.b16 %v795
        %v1126 = vunpack.c.l.b16 %v796
        %v1127 = vunpack.c.h.b16 %v796
        %v1128 = vunpack.c.l.b16 %v797
        %v1129 = vunpack.c.h.b16 %v797
        %v1130 = vunpack.c.l.b16 %v798
        %v1131 = vunpack.c.h.b16 %v798
        %v1132 = vunpack.c.l.b16 %v799
        %v1133 = vunpack.c.h.b16 %v799
        %v1134 = vunpack.c.l.b16 %v800
        %v1135 = vunpack.c.h.b16 %v800
        %v1136 = vunpack.c.l.b16 %v801
        %v1137 = vunpack.c.h.b16 %v801
        %v1138 = vunpack.c.l.b16 %v802
        %v1139 = vunpack.c.h.b16 %v802
        %v1140 = vunpack.c.l.b16 %v803
        %v1141 = vunpack.c.h.b16 %v803
        %v1142 = vunpack.c.l.b16 %v804
        %v1143 = vunpack.c.h.b16 %v804
        %v1144 = vunpack.c.l.b16 %v805
        %v1145 = vunpack.c.h.b16 %v805
        %v1146 = vunpack.c.l.b16 %v806
        %v1147 = vunpack.c.h.b16 %v806
        %v1148 = vunpack.c.l.b16 %v807
        %v1149 = vunpack.c.h.b16 %v807
        %v1150 = vunpack.c.l.b16 %v808
        %v1151 = vunpack.c.h.b16 %v808
        %v1152 = vunpack.c.l.b16 %v809
        %v1153 = vunpack.c.h.b16 %v809
        %v1154 = vunpack.c.l.b16 %v810
        %v1155 = vunpack.c.h.b16 %v810
        %v1156 = vunpack.c.l.b16 %v811
        %v1157 = vunpack.c.h.b16 %v811
        %v1158 = vunpack.c.l.b16 %v812
        %v1159 = vunpack.c.h.b16 %v812
        %v1160 = vunpack.c.l.b16 %v813
        %v1161 = vunpack.c.h.b16 %v813
        %v1162 = vunpack.c.l.b16 %v814
        %v1163 = vunpack.c.h.b16 %v814
        %v1164 = vunpack.c.l.b16 %v815
        %v1165 = vunpack.c.h.b16 %v815
        %v1166 = vunpack.c.l.b16 %v816
        %v1167 = vunpack.c.h.b16 %v816
        %v1168 = vunpack.c.l.b16 %v817
        %v1169 = vunpack.c.h.b16 %v817
        %v1170 = vunpack.c.l.b16 %v818
        %v1171 = vunpack.c.h.b16 %v818
        %v1172 = vunpack.c.l.b16 %v819
        %v1173 = vunpack.c.h.b16 %v819
        %v1174 = vunpack.c.l.b16 %v820
        %v1175 = vunpack.c.h.b16 %v820
        %v1176 = vunpack.c.l.b16 %v821
        %v1177 = vunpack.c.h.b16 %v821
        %v1178 = vunpack.c.l.b16 %v822
        %v1179 = vunpack.c.h.b16 %v822
        %v1180 = vunpack.c.l.b16 %v823
        %v1181 = vunpack.c.h.b16 %v823
        %v1182 = vunpack.c.l.b16 %v824
        %v1183 = vunpack.c.h.b16 %v824
        %v1184 = vunpack.c.l.b16 %v825
        %v1185 = vunpack.c.h.b16 %v825
        %v1186 = vunpack.c.l.b16 %v826
        %v1187 = vunpack.c.h.b16 %v826
        %v1188 = vunpack.c.l.b16 %v827
        %v1189 = vunpack.c.h.b16 %v827
        %v1190 = vunpack.c.l.b16 %v828
        %v1191 = vunpack.c.h.b16 %v828
        %v1192 = vunpack.c.l.b16 %v829
        %v1193 = vunpack.c.h.b16 %v829
        %v1194 = vunpack.c.l.b16 %v830
        %v1195 = vunpack.c.h.b16 %v830
        %v1196 = vunpack.c.l.b16 %v831
        %v1197 = vunpack.c.h.b16 %v831
        %v1198 = vunpack.c.l.b16 %v832
        %v1199 = vunpack.c.h.b16 %v832
        %v1200 = vunpack.c.l.b16 %v833
        %v1201 = vunpack.c.h.b16 %v833
        %v1202 = vunpack.c.l.b16 %v834
        %v1203 = vunpack.c.h.b16 %v834
        %v1204 = vunpack.c.l.b16 %v835
        %v1205 = vunpack.c.h.b16 %v835
        %v1206 = vunpack.c.l.b16 %v836
        %v1207 = vunpack.c.h.b16 %v836
        %v1208 = vunpack.c.l.b16 %v837
        %v1209 = vunpack.c.h.b16 %v837
        %v1210 = vunpack.c.l.b16 %v838
        %v1211 = vunpack.c.h.b16 %v838
        %v1212 = vunpack.c.l.b16 %v839
        %v1213 = vunpack.c.h.b16 %v839
        %v1214 = vunpack.c.l.b16 %v840
        %v1215 = vunpack.c.h.b16 %v840
        %v1216 = vunpack.c.l.b16 %v841
        %v1217 = vunpack.c.h.b16 %v841
        %v1218 = vunpack.c.l.b16 %v842
        %v1219 = vunpack.c.h.b16 %v842
        %v1220 = vunpack.c.l.b16 %v843
        %v1221 = vunpack.c.h.b16 %v843
        %v1222 = vunpack.c.l.b16 %v844
        %v1223 = vunpack.c.h.b16 %v844
        %v1224 = vunpack.c.l.b16 %v845
        %v1225 = vunpack.c.h.b16 %v845
        %v1226 = vunpack.c.l.b16 %v846
        %v1227 = vunpack.c.h.b16 %v846
        %v1228 = vunpack.c.l.b16 %v847
        %v1229 = vunpack.c.h.b16 %v847
        %v1230 = vunpack.c.l.b16 %v848
        %v1231 = vunpack.c.h.b16 %v848
        %v1232 = vunpack.c.l.b16 %v849
        %v1233 = vunpack.c.h.b16 %v849
        %v1234 = vunpack.c.l.b16 %v850
        %v1235 = vunpack.c.h.b16 %v850
        %v1236 = vunpack.c.l.b16 %v851
        %v1237 = vunpack.c.h.b16 %v851
        %v1238 = vunpack.c.l.b16 %v852
        %v1239 = vunpack.c.h.b16 %v852
        %v1240 = vunpack.c.l.b16 %v853
        %v1241 = vunpack.c.h.b16 %v853
        %v1242 = vunpack.c.l.b16 %v854
        %v1243 = vunpack.c.h.b16 %v854
        %v1244 = vunpack.c.l.b16 %v855
        %v1245 = vunpack.c.h.b16 %v855
        %v1246 = vunpack.c.l.b16 %v856
        %v1247 = vunpack.c.h.b16 %v856
        %v1248 = vunpack.c.l.b16 %v857
        %v1249 = vunpack.c.h.b16 %v857
        %v1250 = vunpack.c.l.b16 %v858
        %v1251 = vunpack.c.h.b16 %v858
        %v1252 = vunpack.c.l.b16 %v859
        %v1253 = vunpack.c.h.b16 %v859
        %v1254 = vunpack.c.l.b16 %v860
        %v1255 = vunpack.c.h.b16 %v860
        %v1256 = vunpack.c.l.b16 %v861
        %v1257 = vunpack.c.h.b16 %v861
        %v1258 = vunpack.c.l.b16 %v862
        %v1259 = vunpack.c.h.b16 %v862
        %v1260 = vunpack.c.l.b16 %v863
        %v1261 = vunpack.c.h.b16 %v863
        %v1262 = vunpack.c.l.b16 %v864
        %v1263 = vunpack.c.h.b16 %v864
        %v1264 = vunpack.c.l.b16 %v865
        %v1265 = vunpack.c.h.b16 %v865
        %v1266 = vunpack.c.l.b16 %v866
        %v1267 = vunpack.c.h.b16 %v866
        %v1268 = vunpack.c.l.b16 %v867
        %v1269 = vunpack.c.h.b16 %v867
        %v1270 = vunpack.c.l.b16 %v868
        %v1271 = vunpack.c.h.b16 %v868
        %v1272 = vunpack.c.l.b16 %v869
        %v1273 = vunpack.c.h.b16 %v869
        %v1274 = vunpack.c.l.b16 %v870
        %v1275 = vunpack.c.h.b16 %v870
        %v1276 = vunpack.c.l.b16 %v871
        %v1277 = vunpack.c.h.b16 %v871
        %v1278 = vpack.c.b16 %v1026, %v1022
        %v1279 = vpack.c.b16 %v1027, %v1023
        %v1280 = vpack.c.b16 %v1028, %v1024
        %v1281 = vpack.c.b16 %v1029, %v1025
        %v1282 = vpack.c.b16 %v1034, %v1030
        %v1283 = vpack.c.b16 %v1035, %v1031
        %v1284 = vpack.c.b16 %v1036, %v1032
        %v1285 = vpack.c.b16 %v1037, %v1033
        %v1286 = vpack.c.b16 %v1042, %v1038
        %v1287 = vpack.c.b16 %v1043, %v1039
        %v1288 = vpack.c.b16 %v1044, %v1040
        %v1289 = vpack.c.b16 %v1045, %v1041
        %v1290 = vpack.c.b16 %v1050, %v1046
        %v1291 = vpack.c.b16 %v1051, %v1047
        %v1292 = vpack.c.b16 %v1052, %v1048
        %v1293 = vpack.c.b16 %v1053, %v1049
        %v1294 = vpack.c.b16 %v1058, %v1054
        %v1295 = vpack.c.b16 %v1059, %v1055
        %v1296 = vpack.c.b16 %v1060, %v1056
        %v1297 = vpack.c.b16 %v1061, %v1057
        %v1298 = vpack.c.b16 %v1066, %v1062
        %v1299 = vpack.c.b16 %v1067, %v1063
        %v1300 = vpack.c.b16 %v1068, %v1064
        %v1301 = vpack.c.b16 %v1069, %v1065
        %v1302 = vpack.c.b16 %v1074, %v1070
        %v1303 = vpack.c.b16 %v1075, %v1071
        %v1304 = vpack.c.b16 %v1076, %v1072
        %v1305 = vpack.c.b16 %v1077, %v1073
        %v1306 = vpack.c.b16 %v1082, %v1078
        %v1307 = vpack.c.b16 %v1083, %v1079
        %v1308 = vpack.c.b16 %v1084, %v1080
        %v1309 = vpack.c.b16 %v1085, %v1081
        %v1310 = vpack.c.b16 %v1090, %v1086
        %v1311 = vpack.c.b16 %v1091, %v1087
        %v1312 = vpack.c.b16 %v1092, %v1088
        %v1313 = vpack.c.b16 %v1093, %v1089
        %v1314 = vpack.c.b16 %v1098, %v1094
        %v1315 = vpack.c.b16 %v1099, %v1095
        %v1316 = vpack.c.b16 %v1100, %v1096
        %v1317 = vpack.c.b16 %v1101, %v1097
        %v1318 = vpack.c.b16 %v1106, %v1102
        %v1319 = vpack.c.b16 %v1107, %v1103
        %v1320 = vpack.c.b16 %v1108, %v1104
        %v1321 = vpack.c.b16 %v1109, %v1105
        %v1322 = vpack.c.b16 %v1114, %v1110
        %v1323 = vpack.c.b16 %v1115, %v1111
        %v1324 = vpack.c.b16 %v1116, %v1112
        %v1325 = vpack.c.b16 %v1117, %v1113
        %v1326 = vpack.c.b16 %v1122, %v1118
        %v1327 = vpack.c.b16 %v1123, %v1119
        %v1328 = vpack.c.b16 %v1124, %v1120
        %v1329 = vpack.c.b16 %v1125, %v1121
        %v1330 = vpack.c.b16 %v1130, %v1126
        %v1331 = vpack.c.b16 %v1131, %v1127
        %v1332 = vpack.c.b16 %v1132, %v1128
        %v1333 = vpack.c.b16 %v1133, %v1129
        %v1334 = vpack.c.b16 %v1138, %v1134
        %v1335 = vpack.c.b16 %v1139, %v1135
        %v1336 = vpack.c.b16 %v1140, %v1136
        %v1337 = vpack.c.b16 %v1141, %v1137
        %v1338 = vpack.c.b16 %v1146, %v1142
        %v1339 = vpack.c.b16 %v1147, %v1143
        %v1340 = vpack.c.b16 %v1148, %v1144
        %v1341 = vpack.c.b16 %v1149, %v1145
        %v1342 = vpack.c.b16 %v1154, %v1150
        %v1343 = vpack.c.b16 %v1155, %v1151
        %v1344 = vpack.c.b16 %v1156, %v1152
        %v1345 = vpack.c.b16 %v1157, %v1153
        %v1346 = vpack.c.b16 %v1162, %v1158
        %v1347 = vpack.c.b16 %v1163, %v1159
        %v1348 = vpack.c.b16 %v1164, %v1160
        %v1349 = vpack.c.b16 %v1165, %v1161
        %v1350 = vpack.c.b16 %v1170, %v1166
        %v1351 = vpack.c.b16 %v1171, %v1167
        %v1352 = vpack.c.b16 %v1172, %v1168
        %v1353 = vpack.c.b16 %v1173, %v1169
        %v1354 = vpack.c.b16 %v1178, %v1174
        %v1355 = vpack.c.b16 %v1179, %v1175
        %v1356 = vpack.c.b16 %v1180, %v1176
        %v1357 = vpack.c.b16 %v1181, %v1177
        %v1358 = vpack.c.b16 %v1186, %v1182
        %v1359 = vpack.c.b16 %v1187, %v1183
        %v1360 = vpack.c.b16 %v1188, %v1184
        %v1361 = vpack.c.b16 %v1189, %v1185
        %v1362 = vpack.c.b16 %v1194, %v1190
        %v1363 = vpack.c.b16 %v1195, %v1191
        %v1364 = vpack.c.b16 %v1196, %v1192
        %v1365 = vpack.c.b16 %v1197, %v1193
        %v1366 = vpack.c.b16 %v1202, %v1198
        %v1367 = vpack.c.b16 %v1203, %v1199
        %v1368 = vpack.c.b16 %v1204, %v1200
        %v1369 = vpack.c.b16 %v1205, %v1201
        %v1370 = vpack.c.b16 %v1210, %v1206
        %v1371 = vpack.c.b16 %v1211, %v1207
        %v1372 = vpack.c.b16 %v1212, %v1208
        %v1373 = vpack.c.b16 %v1213, %v1209
        %v1374 = vpack.c.b16 %v1218, %v1214
        %v1375 = vpack.c.b16 %v1219, %v1215
        %v1376 = vpack.c.b16 %v1220, %v1216
        %v1377 = vpack.c.b16 %v1221, %v1217
        %v1378 = vpack.c.b16 %v1226, %v1222
        %v1379 = vpack.c.b16 %v1227, %v1223
        %v1380 = vpack.c.b16 %v1228, %v1224
        %v1381 = vpack.c.b16 %v1229, %v1225
        %v1382 = vpack.c.b16 %v1234, %v1230
        %v1383 = vpack.c.b16 %v1235, %v1231
        %v1384 = vpack.c.b16 %v1236, %v1232
        %v1385 = vpack.c.b16 %v1237, %v1233
        %v1386 = vpack.c.b16 %v1242, %v1238
        %v1387 = vpack.c.b16 %v1243, %v1239
        %v1388 = vpack.c.b16 %v1244, %v1240
        %v1389 = vpack.c.b16 %v1245, %v1241
        %v1390 = vpack.c.b16 %v1250, %v1246
        %v1391 = vpack.c.b16 %v1251, %v1247
        %v1392 = vpack.c.b16 %v1252, %v1248
        %v1393 = vpack.c.b16 %v1253, %v1249
        %v1394 = vpack.c.b16 %v1258, %v1254
        %v1395 = vpack.c.b16 %v1259, %v1255
        %v1396 = vpack.c.b16 %v1260, %v1256
        %v1397 = vpack.c.b16 %v1261, %v1257
        %v1398 = vpack.c.b16 %v1266, %v1262
        %v1399 = vpack.c.b16 %v1267, %v1263
        %v1400 = vpack.c.b16 %v1268, %v1264
        %v1401 = vpack.c.b16 %v1269, %v1265
        %v1402 = vpack.c.b16 %v1274, %v1270
        %v1403 = vpack.c.b16 %v1275, %v1271
        %v1404 = vpack.c.b16 %v1276, %v1272
        %v1405 = vpack.c.b16 %v1277, %v1273
        %1534 = vmatprep.subr.bf16.mxu0 %v1307
        %1535 = vmatpush1.bf16.msra.mxu0 %v1306
        %1536 = vmatprep.subr.bf16.mxu0 %v1303
        %1537 = vmatpush1.bf16.msra.mxu0 %v1302
        %1538 = vmatprep.subr.bf16.mxu0 %v1299
        %1539 = vmatpush1.bf16.msra.mxu0 %v1298
        %1540 = vmatprep.subr.bf16.mxu0 %v1295
        %1541 = vmatpush1.bf16.msra.mxu0 %v1294
        %1542 = vmatprep.subr.bf16.mxu0 %v1291
        %1543 = vmatpush1.bf16.msra.mxu0 %v1290
        %1544 = vmatprep.subr.bf16.mxu0 %v1287
        %1545 = vmatpush1.bf16.msra.mxu0 %v1286
        %1546 = vmatprep.subr.bf16.mxu0 %v1283
        %1547 = vmatpush1.bf16.msra.mxu0 %v1282
        %1548 = vmatprep.subr.bf16.mxu0 %v1279
        %1549 = vmatpush1.bf16.msra.mxu0 %v1278
        %1550 = vmatprep.subr.bf16.mxu0 %v1339
        %1551 = vmatpush2.bf16.msra.mxu0 %v1338
        %1552 = vmatprep.subr.bf16.mxu0 %v1335
        %1553 = vmatpush2.bf16.msra.mxu0 %v1334
        %1554 = vmatprep.subr.bf16.mxu0 %v1331
        %1555 = vmatpush2.bf16.msra.mxu0 %v1330
        %1556 = vmatprep.subr.bf16.mxu0 %v1327
        %1557 = vmatpush2.bf16.msra.mxu0 %v1326
        %1558 = vmatprep.subr.bf16.mxu0 %v1323
        %1559 = vmatpush2.bf16.msra.mxu0 %v1322
        %1560 = vmatprep.subr.bf16.mxu0 %v1319
        %1561 = vmatpush2.bf16.msra.mxu0 %v1318
        %1562 = vmatprep.subr.bf16.mxu0 %v1315
        %1563 = vmatpush2.bf16.msra.mxu0 %v1314
        %1564 = vmatprep.subr.bf16.mxu0 %v1311
        %1565 = vmatpush2.bf16.msra.mxu0 %v1310
        %1566 = vmatprep.mubr.bf16.mxu0 %v713
        %1567 = vmatmul.mubr.bf16.gmra.mxu0 %v712
        %v1568 = vpop.f32.mrf.mxu0
        %v1569 = vadd.f32 %v877, %v1568
        %v1570 = vpop.f32.mrf.mxu0
        %v1571 = vadd.f32 %v881, %v1570
        %v1572 = vpop.f32.mrf.mxu0
        %v1573 = vadd.f32 %v877, %v1572
        %v1574 = vpop.f32.mrf.mxu0
        %v1575 = vadd.f32 %v881, %v1574
        %1576 = vmatprep.mubr.bf16.mxu0 %v717
        %1577 = vmatmul.mubr.bf16.gmra.mxu0 %v716
        %v1578 = vpop.f32.mrf.mxu0
        %v1579 = vadd.f32 %v877, %v1578
        %v1580 = vpop.f32.mrf.mxu0
        %v1581 = vadd.f32 %v881, %v1580
        %v1582 = vpop.f32.mrf.mxu0
        %v1583 = vadd.f32 %v877, %v1582
        %v1584 = vpop.f32.mrf.mxu0
        %v1585 = vadd.f32 %v881, %v1584
        %1586 = vmatprep.mubr.bf16.mxu0 %v721
        %1587 = vmatmul.mubr.bf16.gmra.mxu0 %v720
        %v1588 = vpop.f32.mrf.mxu0
        %v1589 = vadd.f32 %v877, %v1588
        %v1590 = vpop.f32.mrf.mxu0
        %v1591 = vadd.f32 %v881, %v1590
        %v1592 = vpop.f32.mrf.mxu0
        %v1593 = vadd.f32 %v877, %v1592
        %v1594 = vpop.f32.mrf.mxu0
        %v1595 = vadd.f32 %v881, %v1594
        %1596 = vmatprep.mubr.bf16.mxu0 %v725
        %1597 = vmatmul.mubr.bf16.gmra.mxu0 %v724
        %v1598 = vpop.f32.mrf.mxu0
        %v1599 = vadd.f32 %v877, %v1598
        %v1600 = vpop.f32.mrf.mxu0
        %v1601 = vadd.f32 %v881, %v1600
        %v1602 = vpop.f32.mrf.mxu0
        %v1603 = vadd.f32 %v877, %v1602
        %v1604 = vpop.f32.mrf.mxu0
        %v1605 = vadd.f32 %v881, %v1604
        %1606 = vmatprep.mubr.bf16.mxu0 %v729
        %1607 = vmatmul.mubr.bf16.gmra.mxu0 %v728
        %v1608 = vpop.f32.mrf.mxu0
        %v1609 = vadd.f32 %v877, %v1608
        %v1610 = vpop.f32.mrf.mxu0
        %v1611 = vadd.f32 %v881, %v1610
        %v1612 = vpop.f32.mrf.mxu0
        %v1613 = vadd.f32 %v877, %v1612
        %v1614 = vpop.f32.mrf.mxu0
        %v1615 = vadd.f32 %v881, %v1614
        %1616 = vmatprep.mubr.bf16.mxu0 %v733
        %1617 = vmatmul.mubr.bf16.gmra.mxu0 %v732
        %v1618 = vpop.f32.mrf.mxu0
        %v1619 = vadd.f32 %v877, %v1618
        %v1620 = vpop.f32.mrf.mxu0
        %v1621 = vadd.f32 %v881, %v1620
        %v1622 = vpop.f32.mrf.mxu0
        %v1623 = vadd.f32 %v877, %v1622
        %v1624 = vpop.f32.mrf.mxu0
        %v1625 = vadd.f32 %v881, %v1624
        %1626 = vmatprep.mubr.bf16.mxu0 %v737
        %1627 = vmatmul.mubr.bf16.gmra.mxu0 %v736
        %v1628 = vpop.f32.mrf.mxu0
        %v1629 = vadd.f32 %v877, %v1628
        %v1630 = vpop.f32.mrf.mxu0
        %v1631 = vadd.f32 %v881, %v1630
        %v1632 = vpop.f32.mrf.mxu0
        %v1633 = vadd.f32 %v877, %v1632
        %v1634 = vpop.f32.mrf.mxu0
        %v1635 = vadd.f32 %v881, %v1634
        %1636 = vmatprep.mubr.bf16.mxu0 %v741
        %1637 = vmatmul.mubr.bf16.gmra.mxu0 %v740
        %v1638 = vpop.f32.mrf.mxu0
        %v1639 = vadd.f32 %v877, %v1638
        %v1640 = vpop.f32.mrf.mxu0
        %v1641 = vadd.f32 %v881, %v1640
        %v1642 = vpop.f32.mrf.mxu0
        %v1643 = vadd.f32 %v877, %v1642
        %v1644 = vpop.f32.mrf.mxu0
        %v1645 = vadd.f32 %v881, %v1644
        %1646 = vdwg.mxu0
        %1647 = vmatprep.subr.bf16.mxu0 %v1371
        %1648 = vmatpush1.bf16.msra.mxu0 %v1370
        %1649 = vmatprep.subr.bf16.mxu0 %v1367
        %1650 = vmatpush1.bf16.msra.mxu0 %v1366
        %1651 = vmatprep.subr.bf16.mxu0 %v1363
        %1652 = vmatpush1.bf16.msra.mxu0 %v1362
        %1653 = vmatprep.subr.bf16.mxu0 %v1359
        %1654 = vmatpush1.bf16.msra.mxu0 %v1358
        %1655 = vmatprep.subr.bf16.mxu0 %v1355
        %1656 = vmatpush1.bf16.msra.mxu0 %v1354
        %1657 = vmatprep.subr.bf16.mxu0 %v1351
        %1658 = vmatpush1.bf16.msra.mxu0 %v1350
        %1659 = vmatprep.subr.bf16.mxu0 %v1347
        %1660 = vmatpush1.bf16.msra.mxu0 %v1346
        %1661 = vmatprep.subr.bf16.mxu0 %v1343
        %1662 = vmatpush1.bf16.msra.mxu0 %v1342
        %1663 = vmatprep.subr.bf16.mxu0 %v1403
        %1664 = vmatpush2.bf16.msra.mxu0 %v1402
        %1665 = vmatprep.subr.bf16.mxu0 %v1399
        %1666 = vmatpush2.bf16.msra.mxu0 %v1398
        %1667 = vmatprep.subr.bf16.mxu0 %v1395
        %1668 = vmatpush2.bf16.msra.mxu0 %v1394
        %1669 = vmatprep.subr.bf16.mxu0 %v1391
        %1670 = vmatpush2.bf16.msra.mxu0 %v1390
        %1671 = vmatprep.subr.bf16.mxu0 %v1387
        %1672 = vmatpush2.bf16.msra.mxu0 %v1386
        %1673 = vmatprep.subr.bf16.mxu0 %v1383
        %1674 = vmatpush2.bf16.msra.mxu0 %v1382
        %1675 = vmatprep.subr.bf16.mxu0 %v1379
        %1676 = vmatpush2.bf16.msra.mxu0 %v1378
        %1677 = vmatprep.subr.bf16.mxu0 %v1375
        %1678 = vmatpush2.bf16.msra.mxu0 %v1374
        %1679 = vmatprep.mubr.bf16.mxu0 %v715
        %1680 = vmatmul.mubr.bf16.gmra.mxu0 %v714
        %v1681 = vpop.f32.mrf.mxu0
        %v1682 = vadd.f32 %v1569, %v1681
        %v1683 = vpop.f32.mrf.mxu0
        %v1684 = vadd.f32 %v1571, %v1683
        %v1685 = vpop.f32.mrf.mxu0
        %v1686 = vadd.f32 %v1573, %v1685
        %v1687 = vpop.f32.mrf.mxu0
        %v1688 = vadd.f32 %v1575, %v1687
        %1689 = vmatprep.mubr.bf16.mxu0 %v719
        %1690 = vmatmul.mubr.bf16.gmra.mxu0 %v718
        %v1691 = vpop.f32.mrf.mxu0
        %v1692 = vadd.f32 %v1579, %v1691
        %v1693 = vpop.f32.mrf.mxu0
        %v1694 = vadd.f32 %v1581, %v1693
        %v1695 = vpop.f32.mrf.mxu0
        %v1696 = vadd.f32 %v1583, %v1695
        %v1697 = vpop.f32.mrf.mxu0
        %v1698 = vadd.f32 %v1585, %v1697
        %1699 = vmatprep.mubr.bf16.mxu0 %v723
        %1700 = vmatmul.mubr.bf16.gmra.mxu0 %v722
        %v1701 = vpop.f32.mrf.mxu0
        %v1702 = vadd.f32 %v1589, %v1701
        %v1703 = vpop.f32.mrf.mxu0
        %v1704 = vadd.f32 %v1591, %v1703
        %v1705 = vpop.f32.mrf.mxu0
        %v1706 = vadd.f32 %v1593, %v1705
        %v1707 = vpop.f32.mrf.mxu0
        %v1708 = vadd.f32 %v1595, %v1707
        %1709 = vmatprep.mubr.bf16.mxu0 %v727
        %1710 = vmatmul.mubr.bf16.gmra.mxu0 %v726
        %v1711 = vpop.f32.mrf.mxu0
        %v1712 = vadd.f32 %v1599, %v1711
        %v1713 = vpop.f32.mrf.mxu0
        %v1714 = vadd.f32 %v1601, %v1713
        %v1715 = vpop.f32.mrf.mxu0
        %v1716 = vadd.f32 %v1603, %v1715
        %v1717 = vpop.f32.mrf.mxu0
        %v1718 = vadd.f32 %v1605, %v1717
        %1719 = vmatprep.mubr.bf16.mxu0 %v731
        %1720 = vmatmul.mubr.bf16.gmra.mxu0 %v730
        %v1721 = vpop.f32.mrf.mxu0
        %v1722 = vadd.f32 %v1609, %v1721
        %v1723 = vpop.f32.mrf.mxu0
        %v1724 = vadd.f32 %v1611, %v1723
        %v1725 = vpop.f32.mrf.mxu0
        %v1726 = vadd.f32 %v1613, %v1725
        %v1727 = vpop.f32.mrf.mxu0
        %v1728 = vadd.f32 %v1615, %v1727
        %1729 = vmatprep.mubr.bf16.mxu0 %v735
        %1730 = vmatmul.mubr.bf16.gmra.mxu0 %v734
        %v1731 = vpop.f32.mrf.mxu0
        %v1732 = vadd.f32 %v1619, %v1731
        %v1733 = vpop.f32.mrf.mxu0
        %v1734 = vadd.f32 %v1621, %v1733
        %v1735 = vpop.f32.mrf.mxu0
        %v1736 = vadd.f32 %v1623, %v1735
        %v1737 = vpop.f32.mrf.mxu0
        %v1738 = vadd.f32 %v1625, %v1737
        %1739 = vmatprep.mubr.bf16.mxu0 %v739
        %1740 = vmatmul.mubr.bf16.gmra.mxu0 %v738
        %v1741 = vpop.f32.mrf.mxu0
        %v1742 = vadd.f32 %v1629, %v1741
        %v1743 = vpop.f32.mrf.mxu0
        %v1744 = vadd.f32 %v1631, %v1743
        %v1745 = vpop.f32.mrf.mxu0
        %v1746 = vadd.f32 %v1633, %v1745
        %v1747 = vpop.f32.mrf.mxu0
        %v1748 = vadd.f32 %v1635, %v1747
        %1749 = vmatprep.mubr.bf16.mxu0 %v743
        %1750 = vmatmul.mubr.bf16.gmra.mxu0 %v742
        %v1751 = vpop.f32.mrf.mxu0
        %v1752 = vadd.f32 %v1639, %v1751
        %v1753 = vpop.f32.mrf.mxu0
        %v1754 = vadd.f32 %v1641, %v1753
        %v1755 = vpop.f32.mrf.mxu0
        %v1756 = vadd.f32 %v1643, %v1755
        %v1757 = vpop.f32.mrf.mxu0
        %v1758 = vadd.f32 %v1645, %v1757
        %1759 = vdwg.mxu0
        %1760 = vmatprep.subr.bf16.mxu0 %v1309
        %1761 = vmatpush1.bf16.msra.mxu0 %v1308
        %1762 = vmatprep.subr.bf16.mxu0 %v1305
        %1763 = vmatpush1.bf16.msra.mxu0 %v1304
        %1764 = vmatprep.subr.bf16.mxu0 %v1301
        %1765 = vmatpush1.bf16.msra.mxu0 %v1300
        %1766 = vmatprep.subr.bf16.mxu0 %v1297
        %1767 = vmatpush1.bf16.msra.mxu0 %v1296
        %1768 = vmatprep.subr.bf16.mxu0 %v1293
        %1769 = vmatpush1.bf16.msra.mxu0 %v1292
        %1770 = vmatprep.subr.bf16.mxu0 %v1289
        %1771 = vmatpush1.bf16.msra.mxu0 %v1288
        %1772 = vmatprep.subr.bf16.mxu0 %v1285
        %1773 = vmatpush1.bf16.msra.mxu0 %v1284
        %1774 = vmatprep.subr.bf16.mxu0 %v1281
        %1775 = vmatpush1.bf16.msra.mxu0 %v1280
        %1776 = vmatprep.subr.bf16.mxu0 %v1341
        %1777 = vmatpush2.bf16.msra.mxu0 %v1340
        %1778 = vmatprep.subr.bf16.mxu0 %v1337
        %1779 = vmatpush2.bf16.msra.mxu0 %v1336
        %1780 = vmatprep.subr.bf16.mxu0 %v1333
        %1781 = vmatpush2.bf16.msra.mxu0 %v1332
        %1782 = vmatprep.subr.bf16.mxu0 %v1329
        %1783 = vmatpush2.bf16.msra.mxu0 %v1328
        %1784 = vmatprep.subr.bf16.mxu0 %v1325
        %1785 = vmatpush2.bf16.msra.mxu0 %v1324
        %1786 = vmatprep.subr.bf16.mxu0 %v1321
        %1787 = vmatpush2.bf16.msra.mxu0 %v1320
        %1788 = vmatprep.subr.bf16.mxu0 %v1317
        %1789 = vmatpush2.bf16.msra.mxu0 %v1316
        %1790 = vmatprep.subr.bf16.mxu0 %v1313
        %1791 = vmatpush2.bf16.msra.mxu0 %v1312
        %1792 = vmatprep.mubr.bf16.mxu0 %v713
        %1793 = vmatmul.mubr.bf16.gmra.mxu0 %v712
        %v1794 = vpop.f32.mrf.mxu0
        %v1795 = vadd.f32 %v885, %v1794
        %v1796 = vpop.f32.mrf.mxu0
        %v1797 = vadd.f32 %v889, %v1796
        %v1798 = vpop.f32.mrf.mxu0
        %v1799 = vadd.f32 %v885, %v1798
        %v1800 = vpop.f32.mrf.mxu0
        %v1801 = vadd.f32 %v889, %v1800
        %1802 = vmatprep.mubr.bf16.mxu0 %v717
        %1803 = vmatmul.mubr.bf16.gmra.mxu0 %v716
        %v1804 = vpop.f32.mrf.mxu0
        %v1805 = vadd.f32 %v885, %v1804
        %v1806 = vpop.f32.mrf.mxu0
        %v1807 = vadd.f32 %v889, %v1806
        %v1808 = vpop.f32.mrf.mxu0
        %v1809 = vadd.f32 %v885, %v1808
        %v1810 = vpop.f32.mrf.mxu0
        %v1811 = vadd.f32 %v889, %v1810
        %1812 = vmatprep.mubr.bf16.mxu0 %v721
        %1813 = vmatmul.mubr.bf16.gmra.mxu0 %v720
        %v1814 = vpop.f32.mrf.mxu0
        %v1815 = vadd.f32 %v885, %v1814
        %v1816 = vpop.f32.mrf.mxu0
        %v1817 = vadd.f32 %v889, %v1816
        %v1818 = vpop.f32.mrf.mxu0
        %v1819 = vadd.f32 %v885, %v1818
        %v1820 = vpop.f32.mrf.mxu0
        %v1821 = vadd.f32 %v889, %v1820
        %1822 = vmatprep.mubr.bf16.mxu0 %v725
        %1823 = vmatmul.mubr.bf16.gmra.mxu0 %v724
        %v1824 = vpop.f32.mrf.mxu0
        %v1825 = vadd.f32 %v885, %v1824
        %v1826 = vpop.f32.mrf.mxu0
        %v1827 = vadd.f32 %v889, %v1826
        %v1828 = vpop.f32.mrf.mxu0
        %v1829 = vadd.f32 %v885, %v1828
        %v1830 = vpop.f32.mrf.mxu0
        %v1831 = vadd.f32 %v889, %v1830
        %1832 = vmatprep.mubr.bf16.mxu0 %v729
        %1833 = vmatmul.mubr.bf16.gmra.mxu0 %v728
        %v1834 = vpop.f32.mrf.mxu0
        %v1835 = vadd.f32 %v885, %v1834
        %v1836 = vpop.f32.mrf.mxu0
        %v1837 = vadd.f32 %v889, %v1836
        %v1838 = vpop.f32.mrf.mxu0
        %v1839 = vadd.f32 %v885, %v1838
        %v1840 = vpop.f32.mrf.mxu0
        %v1841 = vadd.f32 %v889, %v1840
        %1842 = vmatprep.mubr.bf16.mxu0 %v733
        %1843 = vmatmul.mubr.bf16.gmra.mxu0 %v732
        %v1844 = vpop.f32.mrf.mxu0
        %v1845 = vadd.f32 %v885, %v1844
        %v1846 = vpop.f32.mrf.mxu0
        %v1847 = vadd.f32 %v889, %v1846
        %v1848 = vpop.f32.mrf.mxu0
        %v1849 = vadd.f32 %v885, %v1848
        %v1850 = vpop.f32.mrf.mxu0
        %v1851 = vadd.f32 %v889, %v1850
        %1852 = vmatprep.mubr.bf16.mxu0 %v737
        %1853 = vmatmul.mubr.bf16.gmra.mxu0 %v736
        %v1854 = vpop.f32.mrf.mxu0
        %v1855 = vadd.f32 %v885, %v1854
        %v1856 = vpop.f32.mrf.mxu0
        %v1857 = vadd.f32 %v889, %v1856
        %v1858 = vpop.f32.mrf.mxu0
        %v1859 = vadd.f32 %v885, %v1858
        %v1860 = vpop.f32.mrf.mxu0
        %v1861 = vadd.f32 %v889, %v1860
        %1862 = vmatprep.mubr.bf16.mxu0 %v741
        %1863 = vmatmul.mubr.bf16.gmra.mxu0 %v740
        %v1864 = vpop.f32.mrf.mxu0
        %v1865 = vadd.f32 %v885, %v1864
        %v1866 = vpop.f32.mrf.mxu0
        %v1867 = vadd.f32 %v889, %v1866
        %v1868 = vpop.f32.mrf.mxu0
        %v1869 = vadd.f32 %v885, %v1868
        %v1870 = vpop.f32.mrf.mxu0
        %v1871 = vadd.f32 %v889, %v1870
        %1872 = vdwg.mxu0
        %1873 = vmatprep.subr.bf16.mxu0 %v1373
        %1874 = vmatpush1.bf16.msra.mxu0 %v1372
        %1875 = vmatprep.subr.bf16.mxu0 %v1369
        %1876 = vmatpush1.bf16.msra.mxu0 %v1368
        %1877 = vmatprep.subr.bf16.mxu0 %v1365
        %1878 = vmatpush1.bf16.msra.mxu0 %v1364
        %1879 = vmatprep.subr.bf16.mxu0 %v1361
        %1880 = vmatpush1.bf16.msra.mxu0 %v1360
        %1881 = vmatprep.subr.bf16.mxu0 %v1357
        %1882 = vmatpush1.bf16.msra.mxu0 %v1356
        %1883 = vmatprep.subr.bf16.mxu0 %v1353
        %1884 = vmatpush1.bf16.msra.mxu0 %v1352
        %1885 = vmatprep.subr.bf16.mxu0 %v1349
        %1886 = vmatpush1.bf16.msra.mxu0 %v1348
        %1887 = vmatprep.subr.bf16.mxu0 %v1345
        %1888 = vmatpush1.bf16.msra.mxu0 %v1344
        %1889 = vmatprep.subr.bf16.mxu0 %v1405
        %1890 = vmatpush2.bf16.msra.mxu0 %v1404
        %1891 = vmatprep.subr.bf16.mxu0 %v1401
        %1892 = vmatpush2.bf16.msra.mxu0 %v1400
        %1893 = vmatprep.subr.bf16.mxu0 %v1397
        %1894 = vmatpush2.bf16.msra.mxu0 %v1396
        %1895 = vmatprep.subr.bf16.mxu0 %v1393
        %1896 = vmatpush2.bf16.msra.mxu0 %v1392
        %1897 = vmatprep.subr.bf16.mxu0 %v1389
        %1898 = vmatpush2.bf16.msra.mxu0 %v1388
        %1899 = vmatprep.subr.bf16.mxu0 %v1385
        %1900 = vmatpush2.bf16.msra.mxu0 %v1384
        %1901 = vmatprep.subr.bf16.mxu0 %v1381
        %1902 = vmatpush2.bf16.msra.mxu0 %v1380
        %1903 = vmatprep.subr.bf16.mxu0 %v1377
        %1904 = vmatpush2.bf16.msra.mxu0 %v1376
        %1905 = vmatprep.mubr.bf16.mxu0 %v715
        %1906 = vmatmul.mubr.bf16.gmra.mxu0 %v714
        %v1907 = vpop.f32.mrf.mxu0
        %v1908 = vadd.f32 %v1795, %v1907
        %v1909 = vpop.f32.mrf.mxu0
        %v1910 = vadd.f32 %v1797, %v1909
        %v1911 = vpop.f32.mrf.mxu0
        %v1912 = vadd.f32 %v1799, %v1911
        %v1913 = vpop.f32.mrf.mxu0
        %v1914 = vadd.f32 %v1801, %v1913
        %1915 = vmatprep.mubr.bf16.mxu0 %v719
        %1916 = vmatmul.mubr.bf16.gmra.mxu0 %v718
        %v1917 = vpop.f32.mrf.mxu0
        %v1918 = vadd.f32 %v1805, %v1917
        %v1919 = vpop.f32.mrf.mxu0
        %v1920 = vadd.f32 %v1807, %v1919
        %v1921 = vpop.f32.mrf.mxu0
        %v1922 = vadd.f32 %v1809, %v1921
        %v1923 = vpop.f32.mrf.mxu0
        %v1924 = vadd.f32 %v1811, %v1923
        %1925 = vmatprep.mubr.bf16.mxu0 %v723
        %1926 = vmatmul.mubr.bf16.gmra.mxu0 %v722
        %v1927 = vpop.f32.mrf.mxu0
        %v1928 = vadd.f32 %v1815, %v1927
        %v1929 = vpop.f32.mrf.mxu0
        %v1930 = vadd.f32 %v1817, %v1929
        %v1931 = vpop.f32.mrf.mxu0
        %v1932 = vadd.f32 %v1819, %v1931
        %v1933 = vpop.f32.mrf.mxu0
        %v1934 = vadd.f32 %v1821, %v1933
        %1935 = vmatprep.mubr.bf16.mxu0 %v727
        %1936 = vmatmul.mubr.bf16.gmra.mxu0 %v726
        %v1937 = vpop.f32.mrf.mxu0
        %v1938 = vadd.f32 %v1825, %v1937
        %v1939 = vpop.f32.mrf.mxu0
        %v1940 = vadd.f32 %v1827, %v1939
        %v1941 = vpop.f32.mrf.mxu0
        %v1942 = vadd.f32 %v1829, %v1941
        %v1943 = vpop.f32.mrf.mxu0
        %v1944 = vadd.f32 %v1831, %v1943
        %1945 = vmatprep.mubr.bf16.mxu0 %v731
        %1946 = vmatmul.mubr.bf16.gmra.mxu0 %v730
        %v1947 = vpop.f32.mrf.mxu0
        %v1948 = vadd.f32 %v1835, %v1947
        %v1949 = vpop.f32.mrf.mxu0
        %v1950 = vadd.f32 %v1837, %v1949
        %v1951 = vpop.f32.mrf.mxu0
        %v1952 = vadd.f32 %v1839, %v1951
        %v1953 = vpop.f32.mrf.mxu0
        %v1954 = vadd.f32 %v1841, %v1953
        %1955 = vmatprep.mubr.bf16.mxu0 %v735
        %1956 = vmatmul.mubr.bf16.gmra.mxu0 %v734
        %v1957 = vpop.f32.mrf.mxu0
        %v1958 = vadd.f32 %v1845, %v1957
        %v1959 = vpop.f32.mrf.mxu0
        %v1960 = vadd.f32 %v1847, %v1959
        %v1961 = vpop.f32.mrf.mxu0
        %v1962 = vadd.f32 %v1849, %v1961
        %v1963 = vpop.f32.mrf.mxu0
        %v1964 = vadd.f32 %v1851, %v1963
        %1965 = vmatprep.mubr.bf16.mxu0 %v739
        %1966 = vmatmul.mubr.bf16.gmra.mxu0 %v738
        %v1967 = vpop.f32.mrf.mxu0
        %v1968 = vadd.f32 %v1855, %v1967
        %v1969 = vpop.f32.mrf.mxu0
        %v1970 = vadd.f32 %v1857, %v1969
        %v1971 = vpop.f32.mrf.mxu0
        %v1972 = vadd.f32 %v1859, %v1971
        %v1973 = vpop.f32.mrf.mxu0
        %v1974 = vadd.f32 %v1861, %v1973
        %1975 = vmatprep.mubr.bf16.mxu0 %v743
        %1976 = vmatmul.mubr.bf16.gmra.mxu0 %v742
        %v1977 = vpop.f32.mrf.mxu0
        %v1978 = vadd.f32 %v1865, %v1977
        %v1979 = vpop.f32.mrf.mxu0
        %v1980 = vadd.f32 %v1867, %v1979
        %v1981 = vpop.f32.mrf.mxu0
        %v1982 = vadd.f32 %v1869, %v1981
        %v1983 = vpop.f32.mrf.mxu0
        %v1984 = vadd.f32 %v1871, %v1983
        %1985 = vdwg.mxu0
        %v1986 = vmax.f32 %v1682, 0.0
        %v1987 = vmax.f32 %v1684, 0.0
        %v1988 = vmax.f32 %v1908, 0.0
        %v1989 = vmax.f32 %v1910, 0.0
        %v1990 = vmax.f32 %v1686, 0.0
        %v1991 = vmax.f32 %v1688, 0.0
        %v1992 = vmax.f32 %v1912, 0.0
        %v1993 = vmax.f32 %v1914, 0.0
        %v1994 = vmax.f32 %v1692, 0.0
        %v1995 = vmax.f32 %v1694, 0.0
        %v1996 = vmax.f32 %v1918, 0.0
        %v1997 = vmax.f32 %v1920, 0.0
        %v1998 = vmax.f32 %v1696, 0.0
        %v1999 = vmax.f32 %v1698, 0.0
        %v2000 = vmax.f32 %v1922, 0.0
        %v2001 = vmax.f32 %v1924, 0.0
        %v2002 = vmax.f32 %v1702, 0.0
        %v2003 = vmax.f32 %v1704, 0.0
        %v2004 = vmax.f32 %v1928, 0.0
        %v2005 = vmax.f32 %v1930, 0.0
        %v2006 = vmax.f32 %v1706, 0.0
        %v2007 = vmax.f32 %v1708, 0.0
        %v2008 = vmax.f32 %v1932, 0.0
        %v2009 = vmax.f32 %v1934, 0.0
        %v2010 = vmax.f32 %v1712, 0.0
        %v2011 = vmax.f32 %v1714, 0.0
        %v2012 = vmax.f32 %v1938, 0.0
        %v2013 = vmax.f32 %v1940, 0.0
        %v2014 = vmax.f32 %v1716, 0.0
        %v2015 = vmax.f32 %v1718, 0.0
        %v2016 = vmax.f32 %v1942, 0.0
        %v2017 = vmax.f32 %v1944, 0.0
        %v2018 = vmax.f32 %v1722, 0.0
        %v2019 = vmax.f32 %v1724, 0.0
        %v2020 = vmax.f32 %v1948, 0.0
        %v2021 = vmax.f32 %v1950, 0.0
        %v2022 = vmax.f32 %v1726, 0.0
        %v2023 = vmax.f32 %v1728, 0.0
        %v2024 = vmax.f32 %v1952, 0.0
        %v2025 = vmax.f32 %v1954, 0.0
        %v2026 = vmax.f32 %v1732, 0.0
        %v2027 = vmax.f32 %v1734, 0.0
        %v2028 = vmax.f32 %v1958, 0.0
        %v2029 = vmax.f32 %v1960, 0.0
        %v2030 = vmax.f32 %v1736, 0.0
        %v2031 = vmax.f32 %v1738, 0.0
        %v2032 = vmax.f32 %v1962, 0.0
        %v2033 = vmax.f32 %v1964, 0.0
        %v2034 = vmax.f32 %v1742, 0.0
        %v2035 = vmax.f32 %v1744, 0.0
        %v2036 = vmax.f32 %v1968, 0.0
        %v2037 = vmax.f32 %v1970, 0.0
        %v2038 = vmax.f32 %v1746, 0.0
        %v2039 = vmax.f32 %v1748, 0.0
        %v2040 = vmax.f32 %v1972, 0.0
        %v2041 = vmax.f32 %v1974, 0.0
        %v2042 = vmax.f32 %v1752, 0.0
        %v2043 = vmax.f32 %v1754, 0.0
        %v2044 = vmax.f32 %v1978, 0.0
        %v2045 = vmax.f32 %v1980, 0.0
        %v2046 = vmax.f32 %v1756, 0.0
        %v2047 = vmax.f32 %v1758, 0.0
        %v2048 = vmax.f32 %v1982, 0.0
        %v2049 = vmax.f32 %v1984, 0.0
        %v2050 = vpack.c.bf16 %v1990, %v1986
        %v2051 = vpack.c.bf16 %v1991, %v1987
        %v2052 = vpack.c.bf16 %v1992, %v1988
        %v2053 = vpack.c.bf16 %v1993, %v1989
        %v2054 = vpack.c.bf16 %v1998, %v1994
        %v2055 = vpack.c.bf16 %v1999, %v1995
        %v2056 = vpack.c.bf16 %v2000, %v1996
        %v2057 = vpack.c.bf16 %v2001, %v1997
        %v2058 = vpack.c.bf16 %v2006, %v2002
        %v2059 = vpack.c.bf16 %v2007, %v2003
        %v2060 = vpack.c.bf16 %v2008, %v2004
        %v2061 = vpack.c.bf16 %v2009, %v2005
        %v2062 = vpack.c.bf16 %v2014, %v2010
        %v2063 = vpack.c.bf16 %v2015, %v2011
        %v2064 = vpack.c.bf16 %v2016, %v2012
        %v2065 = vpack.c.bf16 %v2017, %v2013
        %v2066 = vpack.c.bf16 %v2022, %v2018
        %v2067 = vpack.c.bf16 %v2023, %v2019
        %v2068 = vpack.c.bf16 %v2024, %v2020
        %v2069 = vpack.c.bf16 %v2025, %v2021
        %v2070 = vpack.c.bf16 %v2030, %v2026
        %v2071 = vpack.c.bf16 %v2031, %v2027
        %v2072 = vpack.c.bf16 %v2032, %v2028
        %v2073 = vpack.c.bf16 %v2033, %v2029
        %v2074 = vpack.c.bf16 %v2038, %v2034
        %v2075 = vpack.c.bf16 %v2039, %v2035
        %v2076 = vpack.c.bf16 %v2040, %v2036
        %v2077 = vpack.c.bf16 %v2041, %v2037
        %v2078 = vpack.c.bf16 %v2046, %v2042
        %v2079 = vpack.c.bf16 %v2047, %v2043
        %v2080 = vpack.c.bf16 %v2048, %v2044
        %v2081 = vpack.c.bf16 %v2049, %v2045
        %v2082 = vld [vmem:[#allocation8] sm:$0xff]
        %v2083 = vld [vmem:[#allocation8 + $0x8] sm:$0xff]
        %v2084 = vld [vmem:[#allocation8 + $0x10] sm:$0xff]
        %v2085 = vld [vmem:[#allocation8 + $0x18] sm:$0xff]
        %v2086 = vld [vmem:[#allocation8 + $0x20] sm:$0xff]
        %v2087 = vld [vmem:[#allocation8 + $0x28] sm:$0xff]
        %v2088 = vld [vmem:[#allocation8 + $0x30] sm:$0xff]
        %v2089 = vld [vmem:[#allocation8 + $0x38] sm:$0xff]
        %v2090 = vld [vmem:[#allocation8 + $0x40] sm:$0xff]
        %v2091 = vld [vmem:[#allocation8 + $0x48] sm:$0xff]
        %v2092 = vld [vmem:[#allocation8 + $0x50] sm:$0xff]
        %v2093 = vld [vmem:[#allocation8 + $0x58] sm:$0xff]
        %v2094 = vld [vmem:[#allocation8 + $0x60] sm:$0xff]
        %v2095 = vld [vmem:[#allocation8 + $0x68] sm:$0xff]
        %v2096 = vld [vmem:[#allocation8 + $0x70] sm:$0xff]
        %v2097 = vld [vmem:[#allocation8 + $0x78] sm:$0xff]
        %v2098 = vld [vmem:[#allocation8 + $0x80] sm:$0xff]
        %v2099 = vld [vmem:[#allocation8 + $0x88] sm:$0xff]
        %v2100 = vld [vmem:[#allocation8 + $0x90] sm:$0xff]
        %v2101 = vld [vmem:[#allocation8 + $0x98] sm:$0xff]
        %v2102 = vld [vmem:[#allocation8 + $0xa0] sm:$0xff]
        %v2103 = vld [vmem:[#allocation8 + $0xa8] sm:$0xff]
        %v2104 = vld [vmem:[#allocation8 + $0xb0] sm:$0xff]
        %v2105 = vld [vmem:[#allocation8 + $0xb8] sm:$0xff]
        %v2106 = vld [vmem:[#allocation8 + $0xc0] sm:$0xff]
        %v2107 = vld [vmem:[#allocation8 + $0xc8] sm:$0xff]
        %v2108 = vld [vmem:[#allocation8 + $0xd0] sm:$0xff]
        %v2109 = vld [vmem:[#allocation8 + $0xd8] sm:$0xff]
        %v2110 = vld [vmem:[#allocation8 + $0xe0] sm:$0xff]
        %v2111 = vld [vmem:[#allocation8 + $0xe8] sm:$0xff]
        %v2112 = vld [vmem:[#allocation8 + $0xf0] sm:$0xff]
        %v2113 = vld [vmem:[#allocation8 + $0xf8] sm:$0xff]
        %v2114 = vld [vmem:[#allocation8 + $0x100] sm:$0xff]
        %v2115 = vld [vmem:[#allocation8 + $0x108] sm:$0xff]
        %v2116 = vld [vmem:[#allocation8 + $0x110] sm:$0xff]
        %v2117 = vld [vmem:[#allocation8 + $0x118] sm:$0xff]
        %v2118 = vld [vmem:[#allocation8 + $0x120] sm:$0xff]
        %v2119 = vld [vmem:[#allocation8 + $0x128] sm:$0xff]
        %v2120 = vld [vmem:[#allocation8 + $0x130] sm:$0xff]
        %v2121 = vld [vmem:[#allocation8 + $0x138] sm:$0xff]
        %v2122 = vld [vmem:[#allocation8 + $0x140] sm:$0xff]
        %v2123 = vld [vmem:[#allocation8 + $0x148] sm:$0xff]
        %v2124 = vld [vmem:[#allocation8 + $0x150] sm:$0xff]
        %v2125 = vld [vmem:[#allocation8 + $0x158] sm:$0xff]
        %v2126 = vld [vmem:[#allocation8 + $0x160] sm:$0xff]
        %v2127 = vld [vmem:[#allocation8 + $0x168] sm:$0xff]
        %v2128 = vld [vmem:[#allocation8 + $0x170] sm:$0xff]
        %v2129 = vld [vmem:[#allocation8 + $0x178] sm:$0xff]
        %v2130 = vld [vmem:[#allocation8 + $0x180] sm:$0xff]
        %v2131 = vld [vmem:[#allocation8 + $0x188] sm:$0xff]
        %v2132 = vld [vmem:[#allocation8 + $0x190] sm:$0xff]
        %v2133 = vld [vmem:[#allocation8 + $0x198] sm:$0xff]
        %v2134 = vld [vmem:[#allocation8 + $0x1a0] sm:$0xff]
        %v2135 = vld [vmem:[#allocation8 + $0x1a8] sm:$0xff]
        %v2136 = vld [vmem:[#allocation8 + $0x1b0] sm:$0xff]
        %v2137 = vld [vmem:[#allocation8 + $0x1b8] sm:$0xff]
        %v2138 = vld [vmem:[#allocation8 + $0x1c0] sm:$0xff]
        %v2139 = vld [vmem:[#allocation8 + $0x1c8] sm:$0xff]
        %v2140 = vld [vmem:[#allocation8 + $0x1d0] sm:$0xff]
        %v2141 = vld [vmem:[#allocation8 + $0x1d8] sm:$0xff]
        %v2142 = vld [vmem:[#allocation8 + $0x1e0] sm:$0xff]
        %v2143 = vld [vmem:[#allocation8 + $0x1e8] sm:$0xff]
        %v2144 = vld [vmem:[#allocation8 + $0x1f0] sm:$0xff]
        %v2145 = vld [vmem:[#allocation8 + $0x1f8] sm:$0xff]
        %v2146 = vld [vmem:[#allocation8 + $0x200] sm:$0xff]
        %v2147 = vld [vmem:[#allocation8 + $0x208] sm:$0xff]
        %v2148 = vld [vmem:[#allocation8 + $0x210] sm:$0xff]
        %v2149 = vld [vmem:[#allocation8 + $0x218] sm:$0xff]
        %v2150 = vld [vmem:[#allocation8 + $0x220] sm:$0xff]
        %v2151 = vld [vmem:[#allocation8 + $0x228] sm:$0xff]
        %v2152 = vld [vmem:[#allocation8 + $0x230] sm:$0xff]
        %v2153 = vld [vmem:[#allocation8 + $0x238] sm:$0xff]
        %v2154 = vld [vmem:[#allocation8 + $0x240] sm:$0xff]
        %v2155 = vld [vmem:[#allocation8 + $0x248] sm:$0xff]
        %v2156 = vld [vmem:[#allocation8 + $0x250] sm:$0xff]
        %v2157 = vld [vmem:[#allocation8 + $0x258] sm:$0xff]
        %v2158 = vld [vmem:[#allocation8 + $0x260] sm:$0xff]
        %v2159 = vld [vmem:[#allocation8 + $0x268] sm:$0xff]
        %v2160 = vld [vmem:[#allocation8 + $0x270] sm:$0xff]
        %v2161 = vld [vmem:[#allocation8 + $0x278] sm:$0xff]
        %v2162 = vld [vmem:[#allocation8 + $0x280] sm:$0xff]
        %v2163 = vld [vmem:[#allocation8 + $0x288] sm:$0xff]
        %v2164 = vld [vmem:[#allocation8 + $0x290] sm:$0xff]
        %v2165 = vld [vmem:[#allocation8 + $0x298] sm:$0xff]
        %v2166 = vld [vmem:[#allocation8 + $0x2a0] sm:$0xff]
        %v2167 = vld [vmem:[#allocation8 + $0x2a8] sm:$0xff]
        %v2168 = vld [vmem:[#allocation8 + $0x2b0] sm:$0xff]
        %v2169 = vld [vmem:[#allocation8 + $0x2b8] sm:$0xff]
        %v2170 = vld [vmem:[#allocation8 + $0x2c0] sm:$0xff]
        %v2171 = vld [vmem:[#allocation8 + $0x2c8] sm:$0xff]
        %v2172 = vld [vmem:[#allocation8 + $0x2d0] sm:$0xff]
        %v2173 = vld [vmem:[#allocation8 + $0x2d8] sm:$0xff]
        %v2174 = vld [vmem:[#allocation8 + $0x2e0] sm:$0xff]
        %v2175 = vld [vmem:[#allocation8 + $0x2e8] sm:$0xff]
        %v2176 = vld [vmem:[#allocation8 + $0x2f0] sm:$0xff]
        %v2177 = vld [vmem:[#allocation8 + $0x2f8] sm:$0xff]
        %v2178 = vld [vmem:[#allocation8 + $0x300] sm:$0xff]
        %v2179 = vld [vmem:[#allocation8 + $0x308] sm:$0xff]
        %v2180 = vld [vmem:[#allocation8 + $0x310] sm:$0xff]
        %v2181 = vld [vmem:[#allocation8 + $0x318] sm:$0xff]
        %v2182 = vld [vmem:[#allocation8 + $0x320] sm:$0xff]
        %v2183 = vld [vmem:[#allocation8 + $0x328] sm:$0xff]
        %v2184 = vld [vmem:[#allocation8 + $0x330] sm:$0xff]
        %v2185 = vld [vmem:[#allocation8 + $0x338] sm:$0xff]
        %v2186 = vld [vmem:[#allocation8 + $0x340] sm:$0xff]
        %v2187 = vld [vmem:[#allocation8 + $0x348] sm:$0xff]
        %v2188 = vld [vmem:[#allocation8 + $0x350] sm:$0xff]
        %v2189 = vld [vmem:[#allocation8 + $0x358] sm:$0xff]
        %v2190 = vld [vmem:[#allocation8 + $0x360] sm:$0xff]
        %v2191 = vld [vmem:[#allocation8 + $0x368] sm:$0xff]
        %v2192 = vld [vmem:[#allocation8 + $0x370] sm:$0xff]
        %v2193 = vld [vmem:[#allocation8 + $0x378] sm:$0xff]
        %v2194 = vld [vmem:[#allocation8 + $0x380] sm:$0xff]
        %v2195 = vld [vmem:[#allocation8 + $0x388] sm:$0xff]
        %v2196 = vld [vmem:[#allocation8 + $0x390] sm:$0xff]
        %v2197 = vld [vmem:[#allocation8 + $0x398] sm:$0xff]
        %v2198 = vld [vmem:[#allocation8 + $0x3a0] sm:$0xff]
        %v2199 = vld [vmem:[#allocation8 + $0x3a8] sm:$0xff]
        %v2200 = vld [vmem:[#allocation8 + $0x3b0] sm:$0xff]
        %v2201 = vld [vmem:[#allocation8 + $0x3b8] sm:$0xff]
        %v2202 = vld [vmem:[#allocation8 + $0x3c0] sm:$0xff]
        %v2203 = vld [vmem:[#allocation8 + $0x3c8] sm:$0xff]
        %v2204 = vld [vmem:[#allocation8 + $0x3d0] sm:$0xff]
        %v2205 = vld [vmem:[#allocation8 + $0x3d8] sm:$0xff]
        %v2206 = vld [vmem:[#allocation8 + $0x3e0] sm:$0xff]
        %v2207 = vld [vmem:[#allocation8 + $0x3e8] sm:$0xff]
        %v2208 = vld [vmem:[#allocation8 + $0x3f0] sm:$0xff]
        %v2209 = vld [vmem:[#allocation8 + $0x3f8] sm:$0xff]
        %v2210 = vld [vmem:[%s6] sm:$0xf]
        %v2212 = vlaneseq
        %v2213 = vshrl.u32 %v2212, 7
        %v2214 = vsub.s32 0, %v2213
        %v2215 = vrot.slane %v2210, %v2214
        %v2216 = vlaneseq
        %v2217 = vshrl.u32 %v2216, 7
        %v2218 = vsub.s32 1, %v2217
        %v2219 = vrot.slane %v2210, %v2218
        %v2220 = vlaneseq
        %v2221 = vshrl.u32 %v2220, 7
        %v2222 = vsub.s32 2, %v2221
        %v2223 = vrot.slane %v2210, %v2222
        %v2224 = vlaneseq
        %v2225 = vshrl.u32 %v2224, 7
        %v2226 = vsub.s32 3, %v2225
        %v2227 = vrot.slane %v2210, %v2226
        %v2360 = vunpack.c.l.b16 %v2082
        %v2361 = vunpack.c.h.b16 %v2082
        %v2362 = vunpack.c.l.b16 %v2083
        %v2363 = vunpack.c.h.b16 %v2083
        %v2364 = vunpack.c.l.b16 %v2084
        %v2365 = vunpack.c.h.b16 %v2084
        %v2366 = vunpack.c.l.b16 %v2085
        %v2367 = vunpack.c.h.b16 %v2085
        %v2368 = vunpack.c.l.b16 %v2086
        %v2369 = vunpack.c.h.b16 %v2086
        %v2370 = vunpack.c.l.b16 %v2087
        %v2371 = vunpack.c.h.b16 %v2087
        %v2372 = vunpack.c.l.b16 %v2088
        %v2373 = vunpack.c.h.b16 %v2088
        %v2374 = vunpack.c.l.b16 %v2089
        %v2375 = vunpack.c.h.b16 %v2089
        %v2376 = vunpack.c.l.b16 %v2090
        %v2377 = vunpack.c.h.b16 %v2090
        %v2378 = vunpack.c.l.b16 %v2091
        %v2379 = vunpack.c.h.b16 %v2091
        %v2380 = vunpack.c.l.b16 %v2092
        %v2381 = vunpack.c.h.b16 %v2092
        %v2382 = vunpack.c.l.b16 %v2093
        %v2383 = vunpack.c.h.b16 %v2093
        %v2384 = vunpack.c.l.b16 %v2094
        %v2385 = vunpack.c.h.b16 %v2094
        %v2386 = vunpack.c.l.b16 %v2095
        %v2387 = vunpack.c.h.b16 %v2095
        %v2388 = vunpack.c.l.b16 %v2096
        %v2389 = vunpack.c.h.b16 %v2096
        %v2390 = vunpack.c.l.b16 %v2097
        %v2391 = vunpack.c.h.b16 %v2097
        %v2392 = vunpack.c.l.b16 %v2098
        %v2393 = vunpack.c.h.b16 %v2098
        %v2394 = vunpack.c.l.b16 %v2099
        %v2395 = vunpack.c.h.b16 %v2099
        %v2396 = vunpack.c.l.b16 %v2100
        %v2397 = vunpack.c.h.b16 %v2100
        %v2398 = vunpack.c.l.b16 %v2101
        %v2399 = vunpack.c.h.b16 %v2101
        %v2400 = vunpack.c.l.b16 %v2102
        %v2401 = vunpack.c.h.b16 %v2102
        %v2402 = vunpack.c.l.b16 %v2103
        %v2403 = vunpack.c.h.b16 %v2103
        %v2404 = vunpack.c.l.b16 %v2104
        %v2405 = vunpack.c.h.b16 %v2104
        %v2406 = vunpack.c.l.b16 %v2105
        %v2407 = vunpack.c.h.b16 %v2105
        %v2408 = vunpack.c.l.b16 %v2106
        %v2409 = vunpack.c.h.b16 %v2106
        %v2410 = vunpack.c.l.b16 %v2107
        %v2411 = vunpack.c.h.b16 %v2107
        %v2412 = vunpack.c.l.b16 %v2108
        %v2413 = vunpack.c.h.b16 %v2108
        %v2414 = vunpack.c.l.b16 %v2109
        %v2415 = vunpack.c.h.b16 %v2109
        %v2416 = vunpack.c.l.b16 %v2110
        %v2417 = vunpack.c.h.b16 %v2110
        %v2418 = vunpack.c.l.b16 %v2111
        %v2419 = vunpack.c.h.b16 %v2111
        %v2420 = vunpack.c.l.b16 %v2112
        %v2421 = vunpack.c.h.b16 %v2112
        %v2422 = vunpack.c.l.b16 %v2113
        %v2423 = vunpack.c.h.b16 %v2113
        %v2424 = vunpack.c.l.b16 %v2114
        %v2425 = vunpack.c.h.b16 %v2114
        %v2426 = vunpack.c.l.b16 %v2115
        %v2427 = vunpack.c.h.b16 %v2115
        %v2428 = vunpack.c.l.b16 %v2116
        %v2429 = vunpack.c.h.b16 %v2116
        %v2430 = vunpack.c.l.b16 %v2117
        %v2431 = vunpack.c.h.b16 %v2117
        %v2432 = vunpack.c.l.b16 %v2118
        %v2433 = vunpack.c.h.b16 %v2118
        %v2434 = vunpack.c.l.b16 %v2119
        %v2435 = vunpack.c.h.b16 %v2119
        %v2436 = vunpack.c.l.b16 %v2120
        %v2437 = vunpack.c.h.b16 %v2120
        %v2438 = vunpack.c.l.b16 %v2121
        %v2439 = vunpack.c.h.b16 %v2121
        %v2440 = vunpack.c.l.b16 %v2122
        %v2441 = vunpack.c.h.b16 %v2122
        %v2442 = vunpack.c.l.b16 %v2123
        %v2443 = vunpack.c.h.b16 %v2123
        %v2444 = vunpack.c.l.b16 %v2124
        %v2445 = vunpack.c.h.b16 %v2124
        %v2446 = vunpack.c.l.b16 %v2125
        %v2447 = vunpack.c.h.b16 %v2125
        %v2448 = vunpack.c.l.b16 %v2126
        %v2449 = vunpack.c.h.b16 %v2126
        %v2450 = vunpack.c.l.b16 %v2127
        %v2451 = vunpack.c.h.b16 %v2127
        %v2452 = vunpack.c.l.b16 %v2128
        %v2453 = vunpack.c.h.b16 %v2128
        %v2454 = vunpack.c.l.b16 %v2129
        %v2455 = vunpack.c.h.b16 %v2129
        %v2456 = vunpack.c.l.b16 %v2130
        %v2457 = vunpack.c.h.b16 %v2130
        %v2458 = vunpack.c.l.b16 %v2131
        %v2459 = vunpack.c.h.b16 %v2131
        %v2460 = vunpack.c.l.b16 %v2132
        %v2461 = vunpack.c.h.b16 %v2132
        %v2462 = vunpack.c.l.b16 %v2133
        %v2463 = vunpack.c.h.b16 %v2133
        %v2464 = vunpack.c.l.b16 %v2134
        %v2465 = vunpack.c.h.b16 %v2134
        %v2466 = vunpack.c.l.b16 %v2135
        %v2467 = vunpack.c.h.b16 %v2135
        %v2468 = vunpack.c.l.b16 %v2136
        %v2469 = vunpack.c.h.b16 %v2136
        %v2470 = vunpack.c.l.b16 %v2137
        %v2471 = vunpack.c.h.b16 %v2137
        %v2472 = vunpack.c.l.b16 %v2138
        %v2473 = vunpack.c.h.b16 %v2138
        %v2474 = vunpack.c.l.b16 %v2139
        %v2475 = vunpack.c.h.b16 %v2139
        %v2476 = vunpack.c.l.b16 %v2140
        %v2477 = vunpack.c.h.b16 %v2140
        %v2478 = vunpack.c.l.b16 %v2141
        %v2479 = vunpack.c.h.b16 %v2141
        %v2480 = vunpack.c.l.b16 %v2142
        %v2481 = vunpack.c.h.b16 %v2142
        %v2482 = vunpack.c.l.b16 %v2143
        %v2483 = vunpack.c.h.b16 %v2143
        %v2484 = vunpack.c.l.b16 %v2144
        %v2485 = vunpack.c.h.b16 %v2144
        %v2486 = vunpack.c.l.b16 %v2145
        %v2487 = vunpack.c.h.b16 %v2145
        %v2488 = vunpack.c.l.b16 %v2146
        %v2489 = vunpack.c.h.b16 %v2146
        %v2490 = vunpack.c.l.b16 %v2147
        %v2491 = vunpack.c.h.b16 %v2147
        %v2492 = vunpack.c.l.b16 %v2148
        %v2493 = vunpack.c.h.b16 %v2148
        %v2494 = vunpack.c.l.b16 %v2149
        %v2495 = vunpack.c.h.b16 %v2149
        %v2496 = vunpack.c.l.b16 %v2150
        %v2497 = vunpack.c.h.b16 %v2150
        %v2498 = vunpack.c.l.b16 %v2151
        %v2499 = vunpack.c.h.b16 %v2151
        %v2500 = vunpack.c.l.b16 %v2152
        %v2501 = vunpack.c.h.b16 %v2152
        %v2502 = vunpack.c.l.b16 %v2153
        %v2503 = vunpack.c.h.b16 %v2153
        %v2504 = vunpack.c.l.b16 %v2154
        %v2505 = vunpack.c.h.b16 %v2154
        %v2506 = vunpack.c.l.b16 %v2155
        %v2507 = vunpack.c.h.b16 %v2155
        %v2508 = vunpack.c.l.b16 %v2156
        %v2509 = vunpack.c.h.b16 %v2156
        %v2510 = vunpack.c.l.b16 %v2157
        %v2511 = vunpack.c.h.b16 %v2157
        %v2512 = vunpack.c.l.b16 %v2158
        %v2513 = vunpack.c.h.b16 %v2158
        %v2514 = vunpack.c.l.b16 %v2159
        %v2515 = vunpack.c.h.b16 %v2159
        %v2516 = vunpack.c.l.b16 %v2160
        %v2517 = vunpack.c.h.b16 %v2160
        %v2518 = vunpack.c.l.b16 %v2161
        %v2519 = vunpack.c.h.b16 %v2161
        %v2520 = vunpack.c.l.b16 %v2162
        %v2521 = vunpack.c.h.b16 %v2162
        %v2522 = vunpack.c.l.b16 %v2163
        %v2523 = vunpack.c.h.b16 %v2163
        %v2524 = vunpack.c.l.b16 %v2164
        %v2525 = vunpack.c.h.b16 %v2164
        %v2526 = vunpack.c.l.b16 %v2165
        %v2527 = vunpack.c.h.b16 %v2165
        %v2528 = vunpack.c.l.b16 %v2166
        %v2529 = vunpack.c.h.b16 %v2166
        %v2530 = vunpack.c.l.b16 %v2167
        %v2531 = vunpack.c.h.b16 %v2167
        %v2532 = vunpack.c.l.b16 %v2168
        %v2533 = vunpack.c.h.b16 %v2168
        %v2534 = vunpack.c.l.b16 %v2169
        %v2535 = vunpack.c.h.b16 %v2169
        %v2536 = vunpack.c.l.b16 %v2170
        %v2537 = vunpack.c.h.b16 %v2170
        %v2538 = vunpack.c.l.b16 %v2171
        %v2539 = vunpack.c.h.b16 %v2171
        %v2540 = vunpack.c.l.b16 %v2172
        %v2541 = vunpack.c.h.b16 %v2172
        %v2542 = vunpack.c.l.b16 %v2173
        %v2543 = vunpack.c.h.b16 %v2173
        %v2544 = vunpack.c.l.b16 %v2174
        %v2545 = vunpack.c.h.b16 %v2174
        %v2546 = vunpack.c.l.b16 %v2175
        %v2547 = vunpack.c.h.b16 %v2175
        %v2548 = vunpack.c.l.b16 %v2176
        %v2549 = vunpack.c.h.b16 %v2176
        %v2550 = vunpack.c.l.b16 %v2177
        %v2551 = vunpack.c.h.b16 %v2177
        %v2552 = vunpack.c.l.b16 %v2178
        %v2553 = vunpack.c.h.b16 %v2178
        %v2554 = vunpack.c.l.b16 %v2179
        %v2555 = vunpack.c.h.b16 %v2179
        %v2556 = vunpack.c.l.b16 %v2180
        %v2557 = vunpack.c.h.b16 %v2180
        %v2558 = vunpack.c.l.b16 %v2181
        %v2559 = vunpack.c.h.b16 %v2181
        %v2560 = vunpack.c.l.b16 %v2182
        %v2561 = vunpack.c.h.b16 %v2182
        %v2562 = vunpack.c.l.b16 %v2183
        %v2563 = vunpack.c.h.b16 %v2183
        %v2564 = vunpack.c.l.b16 %v2184
        %v2565 = vunpack.c.h.b16 %v2184
        %v2566 = vunpack.c.l.b16 %v2185
        %v2567 = vunpack.c.h.b16 %v2185
        %v2568 = vunpack.c.l.b16 %v2186
        %v2569 = vunpack.c.h.b16 %v2186
        %v2570 = vunpack.c.l.b16 %v2187
        %v2571 = vunpack.c.h.b16 %v2187
        %v2572 = vunpack.c.l.b16 %v2188
        %v2573 = vunpack.c.h.b16 %v2188
        %v2574 = vunpack.c.l.b16 %v2189
        %v2575 = vunpack.c.h.b16 %v2189
        %v2576 = vunpack.c.l.b16 %v2190
        %v2577 = vunpack.c.h.b16 %v2190
        %v2578 = vunpack.c.l.b16 %v2191
        %v2579 = vunpack.c.h.b16 %v2191
        %v2580 = vunpack.c.l.b16 %v2192
        %v2581 = vunpack.c.h.b16 %v2192
        %v2582 = vunpack.c.l.b16 %v2193
        %v2583 = vunpack.c.h.b16 %v2193
        %v2584 = vunpack.c.l.b16 %v2194
        %v2585 = vunpack.c.h.b16 %v2194
        %v2586 = vunpack.c.l.b16 %v2195
        %v2587 = vunpack.c.h.b16 %v2195
        %v2588 = vunpack.c.l.b16 %v2196
        %v2589 = vunpack.c.h.b16 %v2196
        %v2590 = vunpack.c.l.b16 %v2197
        %v2591 = vunpack.c.h.b16 %v2197
        %v2592 = vunpack.c.l.b16 %v2198
        %v2593 = vunpack.c.h.b16 %v2198
        %v2594 = vunpack.c.l.b16 %v2199
        %v2595 = vunpack.c.h.b16 %v2199
        %v2596 = vunpack.c.l.b16 %v2200
        %v2597 = vunpack.c.h.b16 %v2200
        %v2598 = vunpack.c.l.b16 %v2201
        %v2599 = vunpack.c.h.b16 %v2201
        %v2600 = vunpack.c.l.b16 %v2202
        %v2601 = vunpack.c.h.b16 %v2202
        %v2602 = vunpack.c.l.b16 %v2203
        %v2603 = vunpack.c.h.b16 %v2203
        %v2604 = vunpack.c.l.b16 %v2204
        %v2605 = vunpack.c.h.b16 %v2204
        %v2606 = vunpack.c.l.b16 %v2205
        %v2607 = vunpack.c.h.b16 %v2205
        %v2608 = vunpack.c.l.b16 %v2206
        %v2609 = vunpack.c.h.b16 %v2206
        %v2610 = vunpack.c.l.b16 %v2207
        %v2611 = vunpack.c.h.b16 %v2207
        %v2612 = vunpack.c.l.b16 %v2208
        %v2613 = vunpack.c.h.b16 %v2208
        %v2614 = vunpack.c.l.b16 %v2209
        %v2615 = vunpack.c.h.b16 %v2209
        %v2616 = vpack.c.b16 %v2364, %v2360
        %v2617 = vpack.c.b16 %v2365, %v2361
        %v2618 = vpack.c.b16 %v2366, %v2362
        %v2619 = vpack.c.b16 %v2367, %v2363
        %v2620 = vpack.c.b16 %v2372, %v2368
        %v2621 = vpack.c.b16 %v2373, %v2369
        %v2622 = vpack.c.b16 %v2374, %v2370
        %v2623 = vpack.c.b16 %v2375, %v2371
        %v2624 = vpack.c.b16 %v2380, %v2376
        %v2625 = vpack.c.b16 %v2381, %v2377
        %v2626 = vpack.c.b16 %v2382, %v2378
        %v2627 = vpack.c.b16 %v2383, %v2379
        %v2628 = vpack.c.b16 %v2388, %v2384
        %v2629 = vpack.c.b16 %v2389, %v2385
        %v2630 = vpack.c.b16 %v2390, %v2386
        %v2631 = vpack.c.b16 %v2391, %v2387
        %v2632 = vpack.c.b16 %v2396, %v2392
        %v2633 = vpack.c.b16 %v2397, %v2393
        %v2634 = vpack.c.b16 %v2398, %v2394
        %v2635 = vpack.c.b16 %v2399, %v2395
        %v2636 = vpack.c.b16 %v2404, %v2400
        %v2637 = vpack.c.b16 %v2405, %v2401
        %v2638 = vpack.c.b16 %v2406, %v2402
        %v2639 = vpack.c.b16 %v2407, %v2403
        %v2640 = vpack.c.b16 %v2412, %v2408
        %v2641 = vpack.c.b16 %v2413, %v2409
        %v2642 = vpack.c.b16 %v2414, %v2410
        %v2643 = vpack.c.b16 %v2415, %v2411
        %v2644 = vpack.c.b16 %v2420, %v2416
        %v2645 = vpack.c.b16 %v2421, %v2417
        %v2646 = vpack.c.b16 %v2422, %v2418
        %v2647 = vpack.c.b16 %v2423, %v2419
        %v2648 = vpack.c.b16 %v2428, %v2424
        %v2649 = vpack.c.b16 %v2429, %v2425
        %v2650 = vpack.c.b16 %v2430, %v2426
        %v2651 = vpack.c.b16 %v2431, %v2427
        %v2652 = vpack.c.b16 %v2436, %v2432
        %v2653 = vpack.c.b16 %v2437, %v2433
        %v2654 = vpack.c.b16 %v2438, %v2434
        %v2655 = vpack.c.b16 %v2439, %v2435
        %v2656 = vpack.c.b16 %v2444, %v2440
        %v2657 = vpack.c.b16 %v2445, %v2441
        %v2658 = vpack.c.b16 %v2446, %v2442
        %v2659 = vpack.c.b16 %v2447, %v2443
        %v2660 = vpack.c.b16 %v2452, %v2448
        %v2661 = vpack.c.b16 %v2453, %v2449
        %v2662 = vpack.c.b16 %v2454, %v2450
        %v2663 = vpack.c.b16 %v2455, %v2451
        %v2664 = vpack.c.b16 %v2460, %v2456
        %v2665 = vpack.c.b16 %v2461, %v2457
        %v2666 = vpack.c.b16 %v2462, %v2458
        %v2667 = vpack.c.b16 %v2463, %v2459
        %v2668 = vpack.c.b16 %v2468, %v2464
        %v2669 = vpack.c.b16 %v2469, %v2465
        %v2670 = vpack.c.b16 %v2470, %v2466
        %v2671 = vpack.c.b16 %v2471, %v2467
        %v2672 = vpack.c.b16 %v2476, %v2472
        %v2673 = vpack.c.b16 %v2477, %v2473
        %v2674 = vpack.c.b16 %v2478, %v2474
        %v2675 = vpack.c.b16 %v2479, %v2475
        %v2676 = vpack.c.b16 %v2484, %v2480
        %v2677 = vpack.c.b16 %v2485, %v2481
        %v2678 = vpack.c.b16 %v2486, %v2482
        %v2679 = vpack.c.b16 %v2487, %v2483
        %v2680 = vpack.c.b16 %v2492, %v2488
        %v2681 = vpack.c.b16 %v2493, %v2489
        %v2682 = vpack.c.b16 %v2494, %v2490
        %v2683 = vpack.c.b16 %v2495, %v2491
        %v2684 = vpack.c.b16 %v2500, %v2496
        %v2685 = vpack.c.b16 %v2501, %v2497
        %v2686 = vpack.c.b16 %v2502, %v2498
        %v2687 = vpack.c.b16 %v2503, %v2499
        %v2688 = vpack.c.b16 %v2508, %v2504
        %v2689 = vpack.c.b16 %v2509, %v2505
        %v2690 = vpack.c.b16 %v2510, %v2506
        %v2691 = vpack.c.b16 %v2511, %v2507
        %v2692 = vpack.c.b16 %v2516, %v2512
        %v2693 = vpack.c.b16 %v2517, %v2513
        %v2694 = vpack.c.b16 %v2518, %v2514
        %v2695 = vpack.c.b16 %v2519, %v2515
        %v2696 = vpack.c.b16 %v2524, %v2520
        %v2697 = vpack.c.b16 %v2525, %v2521
        %v2698 = vpack.c.b16 %v2526, %v2522
        %v2699 = vpack.c.b16 %v2527, %v2523
        %v2700 = vpack.c.b16 %v2532, %v2528
        %v2701 = vpack.c.b16 %v2533, %v2529
        %v2702 = vpack.c.b16 %v2534, %v2530
        %v2703 = vpack.c.b16 %v2535, %v2531
        %v2704 = vpack.c.b16 %v2540, %v2536
        %v2705 = vpack.c.b16 %v2541, %v2537
        %v2706 = vpack.c.b16 %v2542, %v2538
        %v2707 = vpack.c.b16 %v2543, %v2539
        %v2708 = vpack.c.b16 %v2548, %v2544
        %v2709 = vpack.c.b16 %v2549, %v2545
        %v2710 = vpack.c.b16 %v2550, %v2546
        %v2711 = vpack.c.b16 %v2551, %v2547
        %v2712 = vpack.c.b16 %v2556, %v2552
        %v2713 = vpack.c.b16 %v2557, %v2553
        %v2714 = vpack.c.b16 %v2558, %v2554
        %v2715 = vpack.c.b16 %v2559, %v2555
        %v2716 = vpack.c.b16 %v2564, %v2560
        %v2717 = vpack.c.b16 %v2565, %v2561
        %v2718 = vpack.c.b16 %v2566, %v2562
        %v2719 = vpack.c.b16 %v2567, %v2563
        %v2720 = vpack.c.b16 %v2572, %v2568
        %v2721 = vpack.c.b16 %v2573, %v2569
        %v2722 = vpack.c.b16 %v2574, %v2570
        %v2723 = vpack.c.b16 %v2575, %v2571
        %v2724 = vpack.c.b16 %v2580, %v2576
        %v2725 = vpack.c.b16 %v2581, %v2577
        %v2726 = vpack.c.b16 %v2582, %v2578
        %v2727 = vpack.c.b16 %v2583, %v2579
        %v2728 = vpack.c.b16 %v2588, %v2584
        %v2729 = vpack.c.b16 %v2589, %v2585
        %v2730 = vpack.c.b16 %v2590, %v2586
        %v2731 = vpack.c.b16 %v2591, %v2587
        %v2732 = vpack.c.b16 %v2596, %v2592
        %v2733 = vpack.c.b16 %v2597, %v2593
        %v2734 = vpack.c.b16 %v2598, %v2594
        %v2735 = vpack.c.b16 %v2599, %v2595
        %v2736 = vpack.c.b16 %v2604, %v2600
        %v2737 = vpack.c.b16 %v2605, %v2601
        %v2738 = vpack.c.b16 %v2606, %v2602
        %v2739 = vpack.c.b16 %v2607, %v2603
        %v2740 = vpack.c.b16 %v2612, %v2608
        %v2741 = vpack.c.b16 %v2613, %v2609
        %v2742 = vpack.c.b16 %v2614, %v2610
        %v2743 = vpack.c.b16 %v2615, %v2611
        %2872 = vmatprep.subr.bf16.mxu0 %v2645
        %2873 = vmatpush1.bf16.msra.mxu0 %v2644
        %2874 = vmatprep.subr.bf16.mxu0 %v2641
        %2875 = vmatpush1.bf16.msra.mxu0 %v2640
        %2876 = vmatprep.subr.bf16.mxu0 %v2637
        %2877 = vmatpush1.bf16.msra.mxu0 %v2636
        %2878 = vmatprep.subr.bf16.mxu0 %v2633
        %2879 = vmatpush1.bf16.msra.mxu0 %v2632
        %2880 = vmatprep.subr.bf16.mxu0 %v2629
        %2881 = vmatpush1.bf16.msra.mxu0 %v2628
        %2882 = vmatprep.subr.bf16.mxu0 %v2625
        %2883 = vmatpush1.bf16.msra.mxu0 %v2624
        %2884 = vmatprep.subr.bf16.mxu0 %v2621
        %2885 = vmatpush1.bf16.msra.mxu0 %v2620
        %2886 = vmatprep.subr.bf16.mxu0 %v2617
        %2887 = vmatpush1.bf16.msra.mxu0 %v2616
        %2888 = vmatprep.subr.bf16.mxu0 %v2677
        %2889 = vmatpush2.bf16.msra.mxu0 %v2676
        %2890 = vmatprep.subr.bf16.mxu0 %v2673
        %2891 = vmatpush2.bf16.msra.mxu0 %v2672
        %2892 = vmatprep.subr.bf16.mxu0 %v2669
        %2893 = vmatpush2.bf16.msra.mxu0 %v2668
        %2894 = vmatprep.subr.bf16.mxu0 %v2665
        %2895 = vmatpush2.bf16.msra.mxu0 %v2664
        %2896 = vmatprep.subr.bf16.mxu0 %v2661
        %2897 = vmatpush2.bf16.msra.mxu0 %v2660
        %2898 = vmatprep.subr.bf16.mxu0 %v2657
        %2899 = vmatpush2.bf16.msra.mxu0 %v2656
        %2900 = vmatprep.subr.bf16.mxu0 %v2653
        %2901 = vmatpush2.bf16.msra.mxu0 %v2652
        %2902 = vmatprep.subr.bf16.mxu0 %v2649
        %2903 = vmatpush2.bf16.msra.mxu0 %v2648
        %2904 = vmatprep.mubr.bf16.mxu0 %v2051
        %2905 = vmatmul.mubr.bf16.gmra.mxu0 %v2050
        %v2906 = vpop.f32.mrf.mxu0
        %v2907 = vadd.f32 %v2215, %v2906
        %v2908 = vpop.f32.mrf.mxu0
        %v2909 = vadd.f32 %v2219, %v2908
        %v2910 = vpop.f32.mrf.mxu0
        %v2911 = vadd.f32 %v2215, %v2910
        %v2912 = vpop.f32.mrf.mxu0
        %v2913 = vadd.f32 %v2219, %v2912
        %2914 = vmatprep.mubr.bf16.mxu0 %v2055
        %2915 = vmatmul.mubr.bf16.gmra.mxu0 %v2054
        %v2916 = vpop.f32.mrf.mxu0
        %v2917 = vadd.f32 %v2215, %v2916
        %v2918 = vpop.f32.mrf.mxu0
        %v2919 = vadd.f32 %v2219, %v2918
        %v2920 = vpop.f32.mrf.mxu0
        %v2921 = vadd.f32 %v2215, %v2920
        %v2922 = vpop.f32.mrf.mxu0
        %v2923 = vadd.f32 %v2219, %v2922
        %2924 = vmatprep.mubr.bf16.mxu0 %v2059
        %2925 = vmatmul.mubr.bf16.gmra.mxu0 %v2058
        %v2926 = vpop.f32.mrf.mxu0
        %v2927 = vadd.f32 %v2215, %v2926
        %v2928 = vpop.f32.mrf.mxu0
        %v2929 = vadd.f32 %v2219, %v2928
        %v2930 = vpop.f32.mrf.mxu0
        %v2931 = vadd.f32 %v2215, %v2930
        %v2932 = vpop.f32.mrf.mxu0
        %v2933 = vadd.f32 %v2219, %v2932
        %2934 = vmatprep.mubr.bf16.mxu0 %v2063
        %2935 = vmatmul.mubr.bf16.gmra.mxu0 %v2062
        %v2936 = vpop.f32.mrf.mxu0
        %v2937 = vadd.f32 %v2215, %v2936
        %v2938 = vpop.f32.mrf.mxu0
        %v2939 = vadd.f32 %v2219, %v2938
        %v2940 = vpop.f32.mrf.mxu0
        %v2941 = vadd.f32 %v2215, %v2940
        %v2942 = vpop.f32.mrf.mxu0
        %v2943 = vadd.f32 %v2219, %v2942
        %2944 = vmatprep.mubr.bf16.mxu0 %v2067
        %2945 = vmatmul.mubr.bf16.gmra.mxu0 %v2066
        %v2946 = vpop.f32.mrf.mxu0
        %v2947 = vadd.f32 %v2215, %v2946
        %v2948 = vpop.f32.mrf.mxu0
        %v2949 = vadd.f32 %v2219, %v2948
        %v2950 = vpop.f32.mrf.mxu0
        %v2951 = vadd.f32 %v2215, %v2950
        %v2952 = vpop.f32.mrf.mxu0
        %v2953 = vadd.f32 %v2219, %v2952
        %2954 = vmatprep.mubr.bf16.mxu0 %v2071
        %2955 = vmatmul.mubr.bf16.gmra.mxu0 %v2070
        %v2956 = vpop.f32.mrf.mxu0
        %v2957 = vadd.f32 %v2215, %v2956
        %v2958 = vpop.f32.mrf.mxu0
        %v2959 = vadd.f32 %v2219, %v2958
        %v2960 = vpop.f32.mrf.mxu0
        %v2961 = vadd.f32 %v2215, %v2960
        %v2962 = vpop.f32.mrf.mxu0
        %v2963 = vadd.f32 %v2219, %v2962
        %2964 = vmatprep.mubr.bf16.mxu0 %v2075
        %2965 = vmatmul.mubr.bf16.gmra.mxu0 %v2074
        %v2966 = vpop.f32.mrf.mxu0
        %v2967 = vadd.f32 %v2215, %v2966
        %v2968 = vpop.f32.mrf.mxu0
        %v2969 = vadd.f32 %v2219, %v2968
        %v2970 = vpop.f32.mrf.mxu0
        %v2971 = vadd.f32 %v2215, %v2970
        %v2972 = vpop.f32.mrf.mxu0
        %v2973 = vadd.f32 %v2219, %v2972
        %2974 = vmatprep.mubr.bf16.mxu0 %v2079
        %2975 = vmatmul.mubr.bf16.gmra.mxu0 %v2078
        %v2976 = vpop.f32.mrf.mxu0
        %v2977 = vadd.f32 %v2215, %v2976
        %v2978 = vpop.f32.mrf.mxu0
        %v2979 = vadd.f32 %v2219, %v2978
        %v2980 = vpop.f32.mrf.mxu0
        %v2981 = vadd.f32 %v2215, %v2980
        %v2982 = vpop.f32.mrf.mxu0
        %v2983 = vadd.f32 %v2219, %v2982
        %2984 = vdwg.mxu0
        %2985 = vmatprep.subr.bf16.mxu0 %v2709
        %2986 = vmatpush1.bf16.msra.mxu0 %v2708
        %2987 = vmatprep.subr.bf16.mxu0 %v2705
        %2988 = vmatpush1.bf16.msra.mxu0 %v2704
        %2989 = vmatprep.subr.bf16.mxu0 %v2701
        %2990 = vmatpush1.bf16.msra.mxu0 %v2700
        %2991 = vmatprep.subr.bf16.mxu0 %v2697
        %2992 = vmatpush1.bf16.msra.mxu0 %v2696
        %2993 = vmatprep.subr.bf16.mxu0 %v2693
        %2994 = vmatpush1.bf16.msra.mxu0 %v2692
        %2995 = vmatprep.subr.bf16.mxu0 %v2689
        %2996 = vmatpush1.bf16.msra.mxu0 %v2688
        %2997 = vmatprep.subr.bf16.mxu0 %v2685
        %2998 = vmatpush1.bf16.msra.mxu0 %v2684
        %2999 = vmatprep.subr.bf16.mxu0 %v2681
        %3000 = vmatpush1.bf16.msra.mxu0 %v2680
        %3001 = vmatprep.subr.bf16.mxu0 %v2741
        %3002 = vmatpush2.bf16.msra.mxu0 %v2740
        %3003 = vmatprep.subr.bf16.mxu0 %v2737
        %3004 = vmatpush2.bf16.msra.mxu0 %v2736
        %3005 = vmatprep.subr.bf16.mxu0 %v2733
        %3006 = vmatpush2.bf16.msra.mxu0 %v2732
        %3007 = vmatprep.subr.bf16.mxu0 %v2729
        %3008 = vmatpush2.bf16.msra.mxu0 %v2728
        %3009 = vmatprep.subr.bf16.mxu0 %v2725
        %3010 = vmatpush2.bf16.msra.mxu0 %v2724
        %3011 = vmatprep.subr.bf16.mxu0 %v2721
        %3012 = vmatpush2.bf16.msra.mxu0 %v2720
        %3013 = vmatprep.subr.bf16.mxu0 %v2717
        %3014 = vmatpush2.bf16.msra.mxu0 %v2716
        %3015 = vmatprep.subr.bf16.mxu0 %v2713
        %3016 = vmatpush2.bf16.msra.mxu0 %v2712
        %3017 = vmatprep.mubr.bf16.mxu0 %v2053
        %3018 = vmatmul.mubr.bf16.gmra.mxu0 %v2052
        %v3019 = vpop.f32.mrf.mxu0
        %v3020 = vadd.f32 %v2907, %v3019
        %v3021 = vpop.f32.mrf.mxu0
        %v3022 = vadd.f32 %v2909, %v3021
        %v3023 = vpop.f32.mrf.mxu0
        %v3024 = vadd.f32 %v2911, %v3023
        %v3025 = vpop.f32.mrf.mxu0
        %v3026 = vadd.f32 %v2913, %v3025
        %3027 = vmatprep.mubr.bf16.mxu0 %v2057
        %3028 = vmatmul.mubr.bf16.gmra.mxu0 %v2056
        %v3029 = vpop.f32.mrf.mxu0
        %v3030 = vadd.f32 %v2917, %v3029
        %v3031 = vpop.f32.mrf.mxu0
        %v3032 = vadd.f32 %v2919, %v3031
        %v3033 = vpop.f32.mrf.mxu0
        %v3034 = vadd.f32 %v2921, %v3033
        %v3035 = vpop.f32.mrf.mxu0
        %v3036 = vadd.f32 %v2923, %v3035
        %3037 = vmatprep.mubr.bf16.mxu0 %v2061
        %3038 = vmatmul.mubr.bf16.gmra.mxu0 %v2060
        %v3039 = vpop.f32.mrf.mxu0
        %v3040 = vadd.f32 %v2927, %v3039
        %v3041 = vpop.f32.mrf.mxu0
        %v3042 = vadd.f32 %v2929, %v3041
        %v3043 = vpop.f32.mrf.mxu0
        %v3044 = vadd.f32 %v2931, %v3043
        %v3045 = vpop.f32.mrf.mxu0
        %v3046 = vadd.f32 %v2933, %v3045
        %3047 = vmatprep.mubr.bf16.mxu0 %v2065
        %3048 = vmatmul.mubr.bf16.gmra.mxu0 %v2064
        %v3049 = vpop.f32.mrf.mxu0
        %v3050 = vadd.f32 %v2937, %v3049
        %v3051 = vpop.f32.mrf.mxu0
        %v3052 = vadd.f32 %v2939, %v3051
        %v3053 = vpop.f32.mrf.mxu0
        %v3054 = vadd.f32 %v2941, %v3053
        %v3055 = vpop.f32.mrf.mxu0
        %v3056 = vadd.f32 %v2943, %v3055
        %3057 = vmatprep.mubr.bf16.mxu0 %v2069
        %3058 = vmatmul.mubr.bf16.gmra.mxu0 %v2068
        %v3059 = vpop.f32.mrf.mxu0
        %v3060 = vadd.f32 %v2947, %v3059
        %v3061 = vpop.f32.mrf.mxu0
        %v3062 = vadd.f32 %v2949, %v3061
        %v3063 = vpop.f32.mrf.mxu0
        %v3064 = vadd.f32 %v2951, %v3063
        %v3065 = vpop.f32.mrf.mxu0
        %v3066 = vadd.f32 %v2953, %v3065
        %3067 = vmatprep.mubr.bf16.mxu0 %v2073
        %3068 = vmatmul.mubr.bf16.gmra.mxu0 %v2072
        %v3069 = vpop.f32.mrf.mxu0
        %v3070 = vadd.f32 %v2957, %v3069
        %v3071 = vpop.f32.mrf.mxu0
        %v3072 = vadd.f32 %v2959, %v3071
        %v3073 = vpop.f32.mrf.mxu0
        %v3074 = vadd.f32 %v2961, %v3073
        %v3075 = vpop.f32.mrf.mxu0
        %v3076 = vadd.f32 %v2963, %v3075
        %3077 = vmatprep.mubr.bf16.mxu0 %v2077
        %3078 = vmatmul.mubr.bf16.gmra.mxu0 %v2076
        %v3079 = vpop.f32.mrf.mxu0
        %v3080 = vadd.f32 %v2967, %v3079
        %v3081 = vpop.f32.mrf.mxu0
        %v3082 = vadd.f32 %v2969, %v3081
        %v3083 = vpop.f32.mrf.mxu0
        %v3084 = vadd.f32 %v2971, %v3083
        %v3085 = vpop.f32.mrf.mxu0
        %v3086 = vadd.f32 %v2973, %v3085
        %3087 = vmatprep.mubr.bf16.mxu0 %v2081
        %3088 = vmatmul.mubr.bf16.gmra.mxu0 %v2080
        %v3089 = vpop.f32.mrf.mxu0
        %v3090 = vadd.f32 %v2977, %v3089
        %v3091 = vpop.f32.mrf.mxu0
        %v3092 = vadd.f32 %v2979, %v3091
        %v3093 = vpop.f32.mrf.mxu0
        %v3094 = vadd.f32 %v2981, %v3093
        %v3095 = vpop.f32.mrf.mxu0
        %v3096 = vadd.f32 %v2983, %v3095
        %3097 = vdwg.mxu0
        %3098 = vmatprep.subr.bf16.mxu0 %v2647
        %3099 = vmatpush1.bf16.msra.mxu0 %v2646
        %3100 = vmatprep.subr.bf16.mxu0 %v2643
        %3101 = vmatpush1.bf16.msra.mxu0 %v2642
        %3102 = vmatprep.subr.bf16.mxu0 %v2639
        %3103 = vmatpush1.bf16.msra.mxu0 %v2638
        %3104 = vmatprep.subr.bf16.mxu0 %v2635
        %3105 = vmatpush1.bf16.msra.mxu0 %v2634
        %3106 = vmatprep.subr.bf16.mxu0 %v2631
        %3107 = vmatpush1.bf16.msra.mxu0 %v2630
        %3108 = vmatprep.subr.bf16.mxu0 %v2627
        %3109 = vmatpush1.bf16.msra.mxu0 %v2626
        %3110 = vmatprep.subr.bf16.mxu0 %v2623
        %3111 = vmatpush1.bf16.msra.mxu0 %v2622
        %3112 = vmatprep.subr.bf16.mxu0 %v2619
        %3113 = vmatpush1.bf16.msra.mxu0 %v2618
        %3114 = vmatprep.subr.bf16.mxu0 %v2679
        %3115 = vmatpush2.bf16.msra.mxu0 %v2678
        %3116 = vmatprep.subr.bf16.mxu0 %v2675
        %3117 = vmatpush2.bf16.msra.mxu0 %v2674
        %3118 = vmatprep.subr.bf16.mxu0 %v2671
        %3119 = vmatpush2.bf16.msra.mxu0 %v2670
        %3120 = vmatprep.subr.bf16.mxu0 %v2667
        %3121 = vmatpush2.bf16.msra.mxu0 %v2666
        %3122 = vmatprep.subr.bf16.mxu0 %v2663
        %3123 = vmatpush2.bf16.msra.mxu0 %v2662
        %3124 = vmatprep.subr.bf16.mxu0 %v2659
        %3125 = vmatpush2.bf16.msra.mxu0 %v2658
        %3126 = vmatprep.subr.bf16.mxu0 %v2655
        %3127 = vmatpush2.bf16.msra.mxu0 %v2654
        %3128 = vmatprep.subr.bf16.mxu0 %v2651
        %3129 = vmatpush2.bf16.msra.mxu0 %v2650
        %3130 = vmatprep.mubr.bf16.mxu0 %v2051
        %3131 = vmatmul.mubr.bf16.gmra.mxu0 %v2050
        %v3132 = vpop.f32.mrf.mxu0
        %v3133 = vadd.f32 %v2223, %v3132
        %v3134 = vpop.f32.mrf.mxu0
        %v3135 = vadd.f32 %v2227, %v3134
        %v3136 = vpop.f32.mrf.mxu0
        %v3137 = vadd.f32 %v2223, %v3136
        %v3138 = vpop.f32.mrf.mxu0
        %v3139 = vadd.f32 %v2227, %v3138
        %3140 = vmatprep.mubr.bf16.mxu0 %v2055
        %3141 = vmatmul.mubr.bf16.gmra.mxu0 %v2054
        %v3142 = vpop.f32.mrf.mxu0
        %v3143 = vadd.f32 %v2223, %v3142
        %v3144 = vpop.f32.mrf.mxu0
        %v3145 = vadd.f32 %v2227, %v3144
        %v3146 = vpop.f32.mrf.mxu0
        %v3147 = vadd.f32 %v2223, %v3146
        %v3148 = vpop.f32.mrf.mxu0
        %v3149 = vadd.f32 %v2227, %v3148
        %3150 = vmatprep.mubr.bf16.mxu0 %v2059
        %3151 = vmatmul.mubr.bf16.gmra.mxu0 %v2058
        %v3152 = vpop.f32.mrf.mxu0
        %v3153 = vadd.f32 %v2223, %v3152
        %v3154 = vpop.f32.mrf.mxu0
        %v3155 = vadd.f32 %v2227, %v3154
        %v3156 = vpop.f32.mrf.mxu0
        %v3157 = vadd.f32 %v2223, %v3156
        %v3158 = vpop.f32.mrf.mxu0
        %v3159 = vadd.f32 %v2227, %v3158
        %3160 = vmatprep.mubr.bf16.mxu0 %v2063
        %3161 = vmatmul.mubr.bf16.gmra.mxu0 %v2062
        %v3162 = vpop.f32.mrf.mxu0
        %v3163 = vadd.f32 %v2223, %v3162
        %v3164 = vpop.f32.mrf.mxu0
        %v3165 = vadd.f32 %v2227, %v3164
        %v3166 = vpop.f32.mrf.mxu0
        %v3167 = vadd.f32 %v2223, %v3166
        %v3168 = vpop.f32.mrf.mxu0
        %v3169 = vadd.f32 %v2227, %v3168
        %3170 = vmatprep.mubr.bf16.mxu0 %v2067
        %3171 = vmatmul.mubr.bf16.gmra.mxu0 %v2066
        %v3172 = vpop.f32.mrf.mxu0
        %v3173 = vadd.f32 %v2223, %v3172
        %v3174 = vpop.f32.mrf.mxu0
        %v3175 = vadd.f32 %v2227, %v3174
        %v3176 = vpop.f32.mrf.mxu0
        %v3177 = vadd.f32 %v2223, %v3176
        %v3178 = vpop.f32.mrf.mxu0
        %v3179 = vadd.f32 %v2227, %v3178
        %3180 = vmatprep.mubr.bf16.mxu0 %v2071
        %3181 = vmatmul.mubr.bf16.gmra.mxu0 %v2070
        %v3182 = vpop.f32.mrf.mxu0
        %v3183 = vadd.f32 %v2223, %v3182
        %v3184 = vpop.f32.mrf.mxu0
        %v3185 = vadd.f32 %v2227, %v3184
        %v3186 = vpop.f32.mrf.mxu0
        %v3187 = vadd.f32 %v2223, %v3186
        %v3188 = vpop.f32.mrf.mxu0
        %v3189 = vadd.f32 %v2227, %v3188
        %3190 = vmatprep.mubr.bf16.mxu0 %v2075
        %3191 = vmatmul.mubr.bf16.gmra.mxu0 %v2074
        %v3192 = vpop.f32.mrf.mxu0
        %v3193 = vadd.f32 %v2223, %v3192
        %v3194 = vpop.f32.mrf.mxu0
        %v3195 = vadd.f32 %v2227, %v3194
        %v3196 = vpop.f32.mrf.mxu0
        %v3197 = vadd.f32 %v2223, %v3196
        %v3198 = vpop.f32.mrf.mxu0
        %v3199 = vadd.f32 %v2227, %v3198
        %3200 = vmatprep.mubr.bf16.mxu0 %v2079
        %3201 = vmatmul.mubr.bf16.gmra.mxu0 %v2078
        %v3202 = vpop.f32.mrf.mxu0
        %v3203 = vadd.f32 %v2223, %v3202
        %v3204 = vpop.f32.mrf.mxu0
        %v3205 = vadd.f32 %v2227, %v3204
        %v3206 = vpop.f32.mrf.mxu0
        %v3207 = vadd.f32 %v2223, %v3206
        %v3208 = vpop.f32.mrf.mxu0
        %v3209 = vadd.f32 %v2227, %v3208
        %3210 = vdwg.mxu0
        %3211 = vmatprep.subr.bf16.mxu0 %v2711
        %3212 = vmatpush1.bf16.msra.mxu0 %v2710
        %3213 = vmatprep.subr.bf16.mxu0 %v2707
        %3214 = vmatpush1.bf16.msra.mxu0 %v2706
        %3215 = vmatprep.subr.bf16.mxu0 %v2703
        %3216 = vmatpush1.bf16.msra.mxu0 %v2702
        %3217 = vmatprep.subr.bf16.mxu0 %v2699
        %3218 = vmatpush1.bf16.msra.mxu0 %v2698
        %3219 = vmatprep.subr.bf16.mxu0 %v2695
        %3220 = vmatpush1.bf16.msra.mxu0 %v2694
        %3221 = vmatprep.subr.bf16.mxu0 %v2691
        %3222 = vmatpush1.bf16.msra.mxu0 %v2690
        %3223 = vmatprep.subr.bf16.mxu0 %v2687
        %3224 = vmatpush1.bf16.msra.mxu0 %v2686
        %3225 = vmatprep.subr.bf16.mxu0 %v2683
        %3226 = vmatpush1.bf16.msra.mxu0 %v2682
        %3227 = vmatprep.subr.bf16.mxu0 %v2743
        %3228 = vmatpush2.bf16.msra.mxu0 %v2742
        %3229 = vmatprep.subr.bf16.mxu0 %v2739
        %3230 = vmatpush2.bf16.msra.mxu0 %v2738
        %3231 = vmatprep.subr.bf16.mxu0 %v2735
        %3232 = vmatpush2.bf16.msra.mxu0 %v2734
        %3233 = vmatprep.subr.bf16.mxu0 %v2731
        %3234 = vmatpush2.bf16.msra.mxu0 %v2730
        %3235 = vmatprep.subr.bf16.mxu0 %v2727
        %3236 = vmatpush2.bf16.msra.mxu0 %v2726
        %3237 = vmatprep.subr.bf16.mxu0 %v2723
        %3238 = vmatpush2.bf16.msra.mxu0 %v2722
        %3239 = vmatprep.subr.bf16.mxu0 %v2719
        %3240 = vmatpush2.bf16.msra.mxu0 %v2718
        %3241 = vmatprep.subr.bf16.mxu0 %v2715
        %3242 = vmatpush2.bf16.msra.mxu0 %v2714
        %3243 = vmatprep.mubr.bf16.mxu0 %v2053
        %3244 = vmatmul.mubr.bf16.gmra.mxu0 %v2052
        %v3245 = vpop.f32.mrf.mxu0
        %v3246 = vadd.f32 %v3133, %v3245
        %v3247 = vpop.f32.mrf.mxu0
        %v3248 = vadd.f32 %v3135, %v3247
        %v3249 = vpop.f32.mrf.mxu0
        %v3250 = vadd.f32 %v3137, %v3249
        %v3251 = vpop.f32.mrf.mxu0
        %v3252 = vadd.f32 %v3139, %v3251
        %3253 = vmatprep.mubr.bf16.mxu0 %v2057
        %3254 = vmatmul.mubr.bf16.gmra.mxu0 %v2056
        %v3255 = vpop.f32.mrf.mxu0
        %v3256 = vadd.f32 %v3143, %v3255
        %v3257 = vpop.f32.mrf.mxu0
        %v3258 = vadd.f32 %v3145, %v3257
        %v3259 = vpop.f32.mrf.mxu0
        %v3260 = vadd.f32 %v3147, %v3259
        %v3261 = vpop.f32.mrf.mxu0
        %v3262 = vadd.f32 %v3149, %v3261
        %3263 = vmatprep.mubr.bf16.mxu0 %v2061
        %3264 = vmatmul.mubr.bf16.gmra.mxu0 %v2060
        %v3265 = vpop.f32.mrf.mxu0
        %v3266 = vadd.f32 %v3153, %v3265
        %v3267 = vpop.f32.mrf.mxu0
        %v3268 = vadd.f32 %v3155, %v3267
        %v3269 = vpop.f32.mrf.mxu0
        %v3270 = vadd.f32 %v3157, %v3269
        %v3271 = vpop.f32.mrf.mxu0
        %v3272 = vadd.f32 %v3159, %v3271
        %3273 = vmatprep.mubr.bf16.mxu0 %v2065
        %3274 = vmatmul.mubr.bf16.gmra.mxu0 %v2064
        %v3275 = vpop.f32.mrf.mxu0
        %v3276 = vadd.f32 %v3163, %v3275
        %v3277 = vpop.f32.mrf.mxu0
        %v3278 = vadd.f32 %v3165, %v3277
        %v3279 = vpop.f32.mrf.mxu0
        %v3280 = vadd.f32 %v3167, %v3279
        %v3281 = vpop.f32.mrf.mxu0
        %v3282 = vadd.f32 %v3169, %v3281
        %3283 = vmatprep.mubr.bf16.mxu0 %v2069
        %3284 = vmatmul.mubr.bf16.gmra.mxu0 %v2068
        %v3285 = vpop.f32.mrf.mxu0
        %v3286 = vadd.f32 %v3173, %v3285
        %v3287 = vpop.f32.mrf.mxu0
        %v3288 = vadd.f32 %v3175, %v3287
        %v3289 = vpop.f32.mrf.mxu0
        %v3290 = vadd.f32 %v3177, %v3289
        %v3291 = vpop.f32.mrf.mxu0
        %v3292 = vadd.f32 %v3179, %v3291
        %3293 = vmatprep.mubr.bf16.mxu0 %v2073
        %3294 = vmatmul.mubr.bf16.gmra.mxu0 %v2072
        %v3295 = vpop.f32.mrf.mxu0
        %v3296 = vadd.f32 %v3183, %v3295
        %v3297 = vpop.f32.mrf.mxu0
        %v3298 = vadd.f32 %v3185, %v3297
        %v3299 = vpop.f32.mrf.mxu0
        %v3300 = vadd.f32 %v3187, %v3299
        %v3301 = vpop.f32.mrf.mxu0
        %v3302 = vadd.f32 %v3189, %v3301
        %3303 = vmatprep.mubr.bf16.mxu0 %v2077
        %3304 = vmatmul.mubr.bf16.gmra.mxu0 %v2076
        %v3305 = vpop.f32.mrf.mxu0
        %v3306 = vadd.f32 %v3193, %v3305
        %v3307 = vpop.f32.mrf.mxu0
        %v3308 = vadd.f32 %v3195, %v3307
        %v3309 = vpop.f32.mrf.mxu0
        %v3310 = vadd.f32 %v3197, %v3309
        %v3311 = vpop.f32.mrf.mxu0
        %v3312 = vadd.f32 %v3199, %v3311
        %3313 = vmatprep.mubr.bf16.mxu0 %v2081
        %3314 = vmatmul.mubr.bf16.gmra.mxu0 %v2080
        %v3315 = vpop.f32.mrf.mxu0
        %v3316 = vadd.f32 %v3203, %v3315
        %v3317 = vpop.f32.mrf.mxu0
        %v3318 = vadd.f32 %v3205, %v3317
        %v3319 = vpop.f32.mrf.mxu0
        %v3320 = vadd.f32 %v3207, %v3319
        %v3321 = vpop.f32.mrf.mxu0
        %v3322 = vadd.f32 %v3209, %v3321
        %3323 = vdwg.mxu0
        %v3324 = vmax.f32 %v3020, 0.0
        %v3325 = vmax.f32 %v3022, 0.0
        %v3326 = vmax.f32 %v3246, 0.0
        %v3327 = vmax.f32 %v3248, 0.0
        %v3328 = vmax.f32 %v3024, 0.0
        %v3329 = vmax.f32 %v3026, 0.0
        %v3330 = vmax.f32 %v3250, 0.0
        %v3331 = vmax.f32 %v3252, 0.0
        %v3332 = vmax.f32 %v3030, 0.0
        %v3333 = vmax.f32 %v3032, 0.0
        %v3334 = vmax.f32 %v3256, 0.0
        %v3335 = vmax.f32 %v3258, 0.0
        %v3336 = vmax.f32 %v3034, 0.0
        %v3337 = vmax.f32 %v3036, 0.0
        %v3338 = vmax.f32 %v3260, 0.0
        %v3339 = vmax.f32 %v3262, 0.0
        %v3340 = vmax.f32 %v3040, 0.0
        %v3341 = vmax.f32 %v3042, 0.0
        %v3342 = vmax.f32 %v3266, 0.0
        %v3343 = vmax.f32 %v3268, 0.0
        %v3344 = vmax.f32 %v3044, 0.0
        %v3345 = vmax.f32 %v3046, 0.0
        %v3346 = vmax.f32 %v3270, 0.0
        %v3347 = vmax.f32 %v3272, 0.0
        %v3348 = vmax.f32 %v3050, 0.0
        %v3349 = vmax.f32 %v3052, 0.0
        %v3350 = vmax.f32 %v3276, 0.0
        %v3351 = vmax.f32 %v3278, 0.0
        %v3352 = vmax.f32 %v3054, 0.0
        %v3353 = vmax.f32 %v3056, 0.0
        %v3354 = vmax.f32 %v3280, 0.0
        %v3355 = vmax.f32 %v3282, 0.0
        %v3356 = vmax.f32 %v3060, 0.0
        %v3357 = vmax.f32 %v3062, 0.0
        %v3358 = vmax.f32 %v3286, 0.0
        %v3359 = vmax.f32 %v3288, 0.0
        %v3360 = vmax.f32 %v3064, 0.0
        %v3361 = vmax.f32 %v3066, 0.0
        %v3362 = vmax.f32 %v3290, 0.0
        %v3363 = vmax.f32 %v3292, 0.0
        %v3364 = vmax.f32 %v3070, 0.0
        %v3365 = vmax.f32 %v3072, 0.0
        %v3366 = vmax.f32 %v3296, 0.0
        %v3367 = vmax.f32 %v3298, 0.0
        %v3368 = vmax.f32 %v3074, 0.0
        %v3369 = vmax.f32 %v3076, 0.0
        %v3370 = vmax.f32 %v3300, 0.0
        %v3371 = vmax.f32 %v3302, 0.0
        %v3372 = vmax.f32 %v3080, 0.0
        %v3373 = vmax.f32 %v3082, 0.0
        %v3374 = vmax.f32 %v3306, 0.0
        %v3375 = vmax.f32 %v3308, 0.0
        %v3376 = vmax.f32 %v3084, 0.0
        %v3377 = vmax.f32 %v3086, 0.0
        %v3378 = vmax.f32 %v3310, 0.0
        %v3379 = vmax.f32 %v3312, 0.0
        %v3380 = vmax.f32 %v3090, 0.0
        %v3381 = vmax.f32 %v3092, 0.0
        %v3382 = vmax.f32 %v3316, 0.0
        %v3383 = vmax.f32 %v3318, 0.0
        %v3384 = vmax.f32 %v3094, 0.0
        %v3385 = vmax.f32 %v3096, 0.0
        %v3386 = vmax.f32 %v3320, 0.0
        %v3387 = vmax.f32 %v3322, 0.0
        %v3388 = vld [vmem:[#allocation10] sm:$0xf]
        %v3390 = vlaneseq
        %v3391 = vshrl.u32 %v3390, 7
        %v3392 = vsub.s32 0, %v3391
        %v3393 = vrot.slane %v3388, %v3392
        %v3394 = vlaneseq
        %v3395 = vshrl.u32 %v3394, 7
        %v3396 = vsub.s32 1, %v3395
        %v3397 = vrot.slane %v3388, %v3396
        %v3398 = vlaneseq
        %v3399 = vshrl.u32 %v3398, 7
        %v3400 = vsub.s32 2, %v3399
        %v3401 = vrot.slane %v3388, %v3400
        %v3402 = vlaneseq
        %v3403 = vshrl.u32 %v3402, 7
        %v3404 = vsub.s32 3, %v3403
        %v3405 = vrot.slane %v3388, %v3404
        %v3410 = vmul.f32 %v3324, %v3393
        %v3411 = vmul.f32 %v3325, %v3397
        %v3412 = vmul.f32 %v3326, %v3401
        %v3413 = vmul.f32 %v3327, %v3405
        %v3414 = vmul.f32 %v3328, %v3393
        %v3415 = vmul.f32 %v3329, %v3397
        %v3416 = vmul.f32 %v3330, %v3401
        %v3417 = vmul.f32 %v3331, %v3405
        %v3418 = vmul.f32 %v3332, %v3393
        %v3419 = vmul.f32 %v3333, %v3397
        %v3420 = vmul.f32 %v3334, %v3401
        %v3421 = vmul.f32 %v3335, %v3405
        %v3422 = vmul.f32 %v3336, %v3393
        %v3423 = vmul.f32 %v3337, %v3397
        %v3424 = vmul.f32 %v3338, %v3401
        %v3425 = vmul.f32 %v3339, %v3405
        %v3426 = vmul.f32 %v3340, %v3393
        %v3427 = vmul.f32 %v3341, %v3397
        %v3428 = vmul.f32 %v3342, %v3401
        %v3429 = vmul.f32 %v3343, %v3405
        %v3430 = vmul.f32 %v3344, %v3393
        %v3431 = vmul.f32 %v3345, %v3397
        %v3432 = vmul.f32 %v3346, %v3401
        %v3433 = vmul.f32 %v3347, %v3405
        %v3434 = vmul.f32 %v3348, %v3393
        %v3435 = vmul.f32 %v3349, %v3397
        %v3436 = vmul.f32 %v3350, %v3401
        %v3437 = vmul.f32 %v3351, %v3405
        %v3438 = vmul.f32 %v3352, %v3393
        %v3439 = vmul.f32 %v3353, %v3397
        %v3440 = vmul.f32 %v3354, %v3401
        %v3441 = vmul.f32 %v3355, %v3405
        %v3442 = vmul.f32 %v3356, %v3393
        %v3443 = vmul.f32 %v3357, %v3397
        %v3444 = vmul.f32 %v3358, %v3401
        %v3445 = vmul.f32 %v3359, %v3405
        %v3446 = vmul.f32 %v3360, %v3393
        %v3447 = vmul.f32 %v3361, %v3397
        %v3448 = vmul.f32 %v3362, %v3401
        %v3449 = vmul.f32 %v3363, %v3405
        %v3450 = vmul.f32 %v3364, %v3393
        %v3451 = vmul.f32 %v3365, %v3397
        %v3452 = vmul.f32 %v3366, %v3401
        %v3453 = vmul.f32 %v3367, %v3405
        %v3454 = vmul.f32 %v3368, %v3393
        %v3455 = vmul.f32 %v3369, %v3397
        %v3456 = vmul.f32 %v3370, %v3401
        %v3457 = vmul.f32 %v3371, %v3405
        %v3458 = vmul.f32 %v3372, %v3393
        %v3459 = vmul.f32 %v3373, %v3397
        %v3460 = vmul.f32 %v3374, %v3401
        %v3461 = vmul.f32 %v3375, %v3405
        %v3462 = vmul.f32 %v3376, %v3393
        %v3463 = vmul.f32 %v3377, %v3397
        %v3464 = vmul.f32 %v3378, %v3401
        %v3465 = vmul.f32 %v3379, %v3405
        %v3466 = vmul.f32 %v3380, %v3393
        %v3467 = vmul.f32 %v3381, %v3397
        %v3468 = vmul.f32 %v3382, %v3401
        %v3469 = vmul.f32 %v3383, %v3405
        %v3470 = vmul.f32 %v3384, %v3393
        %v3471 = vmul.f32 %v3385, %v3397
        %v3472 = vmul.f32 %v3386, %v3401
        %v3473 = vmul.f32 %v3387, %v3405
        %v3474 = vadd.f32 %v3410, %v3411
        %v3475 = vadd.f32 %v3474, %v3412
        %v3476 = vadd.f32 %v3475, %v3413
        %3477 = vadd.xlane.f32.xlu0 %v3476
        %v3478 = vpop.xlane.xlu0 %3477
        %v3479 = vadd.f32 %v3414, %v3415
        %v3480 = vadd.f32 %v3479, %v3416
        %v3481 = vadd.f32 %v3480, %v3417
        %3482 = vadd.xlane.f32.xlu0 %v3481
        %v3483 = vpop.xlane.xlu0 %3482
        %v3484 = vadd.f32 %v3418, %v3419
        %v3485 = vadd.f32 %v3484, %v3420
        %v3486 = vadd.f32 %v3485, %v3421
        %3487 = vadd.xlane.f32.xlu0 %v3486
        %v3488 = vpop.xlane.xlu0 %3487
        %v3489 = vadd.f32 %v3422, %v3423
        %v3490 = vadd.f32 %v3489, %v3424
        %v3491 = vadd.f32 %v3490, %v3425
        %3492 = vadd.xlane.f32.xlu0 %v3491
        %v3493 = vpop.xlane.xlu0 %3492
        %v3494 = vadd.f32 %v3426, %v3427
        %v3495 = vadd.f32 %v3494, %v3428
        %v3496 = vadd.f32 %v3495, %v3429
        %3497 = vadd.xlane.f32.xlu0 %v3496
        %v3498 = vpop.xlane.xlu0 %3497
        %v3499 = vadd.f32 %v3430, %v3431
        %v3500 = vadd.f32 %v3499, %v3432
        %v3501 = vadd.f32 %v3500, %v3433
        %3502 = vadd.xlane.f32.xlu0 %v3501
        %v3503 = vpop.xlane.xlu0 %3502
        %v3504 = vadd.f32 %v3434, %v3435
        %v3505 = vadd.f32 %v3504, %v3436
        %v3506 = vadd.f32 %v3505, %v3437
        %3507 = vadd.xlane.f32.xlu0 %v3506
        %v3508 = vpop.xlane.xlu0 %3507
        %v3509 = vadd.f32 %v3438, %v3439
        %v3510 = vadd.f32 %v3509, %v3440
        %v3511 = vadd.f32 %v3510, %v3441
        %3512 = vadd.xlane.f32.xlu0 %v3511
        %v3513 = vpop.xlane.xlu0 %3512
        %v3514 = vadd.f32 %v3442, %v3443
        %v3515 = vadd.f32 %v3514, %v3444
        %v3516 = vadd.f32 %v3515, %v3445
        %3517 = vadd.xlane.f32.xlu0 %v3516
        %v3518 = vpop.xlane.xlu0 %3517
        %v3519 = vadd.f32 %v3446, %v3447
        %v3520 = vadd.f32 %v3519, %v3448
        %v3521 = vadd.f32 %v3520, %v3449
        %3522 = vadd.xlane.f32.xlu0 %v3521
        %v3523 = vpop.xlane.xlu0 %3522
        %v3524 = vadd.f32 %v3450, %v3451
        %v3525 = vadd.f32 %v3524, %v3452
        %v3526 = vadd.f32 %v3525, %v3453
        %3527 = vadd.xlane.f32.xlu0 %v3526
        %v3528 = vpop.xlane.xlu0 %3527
        %v3529 = vadd.f32 %v3454, %v3455
        %v3530 = vadd.f32 %v3529, %v3456
        %v3531 = vadd.f32 %v3530, %v3457
        %3532 = vadd.xlane.f32.xlu0 %v3531
        %v3533 = vpop.xlane.xlu0 %3532
        %v3534 = vadd.f32 %v3458, %v3459
        %v3535 = vadd.f32 %v3534, %v3460
        %v3536 = vadd.f32 %v3535, %v3461
        %3537 = vadd.xlane.f32.xlu0 %v3536
        %v3538 = vpop.xlane.xlu0 %3537
        %v3539 = vadd.f32 %v3462, %v3463
        %v3540 = vadd.f32 %v3539, %v3464
        %v3541 = vadd.f32 %v3540, %v3465
        %3542 = vadd.xlane.f32.xlu0 %v3541
        %v3543 = vpop.xlane.xlu0 %3542
        %v3544 = vadd.f32 %v3466, %v3467
        %v3545 = vadd.f32 %v3544, %v3468
        %v3546 = vadd.f32 %v3545, %v3469
        %3547 = vadd.xlane.f32.xlu0 %v3546
        %v3548 = vpop.xlane.xlu0 %3547
        %v3549 = vadd.f32 %v3470, %v3471
        %v3550 = vadd.f32 %v3549, %v3472
        %v3551 = vadd.f32 %v3550, %v3473
        %3552 = vadd.xlane.f32.xlu0 %v3551
        %v3553 = vpop.xlane.xlu0 %3552
        %v3554 = vld [vmem:[#allocation2] sm:$0x1]
        %v3556 = vlaneseq
        %v3557 = vshrl.u32 %v3556, 7
        %v3558 = vsub.s32 0, %v3557
        %v3559 = vrot.slane %v3554, %v3558
        %v3561 = vadd.f32 %v3478, %v3559
        %v3562 = vadd.f32 %v3483, %v3559
        %v3563 = vadd.f32 %v3488, %v3559
        %v3564 = vadd.f32 %v3493, %v3559
        %v3565 = vadd.f32 %v3498, %v3559
        %v3566 = vadd.f32 %v3503, %v3559
        %v3567 = vadd.f32 %v3508, %v3559
        %v3568 = vadd.f32 %v3513, %v3559
        %v3569 = vadd.f32 %v3518, %v3559
        %v3570 = vadd.f32 %v3523, %v3559
        %v3571 = vadd.f32 %v3528, %v3559
        %v3572 = vadd.f32 %v3533, %v3559
        %v3573 = vadd.f32 %v3538, %v3559
        %v3574 = vadd.f32 %v3543, %v3559
        %v3575 = vadd.f32 %v3548, %v3559
        %v3576 = vadd.f32 %v3553, %v3559
        %v3577 = vxor.u32 %v3561, 2147483648
        %v3578 = vxor.u32 %v3562, 2147483648
        %v3579 = vxor.u32 %v3563, 2147483648
        %v3580 = vxor.u32 %v3564, 2147483648
        %v3581 = vxor.u32 %v3565, 2147483648
        %v3582 = vxor.u32 %v3566, 2147483648
        %v3583 = vxor.u32 %v3567, 2147483648
        %v3584 = vxor.u32 %v3568, 2147483648
        %v3585 = vxor.u32 %v3569, 2147483648
        %v3586 = vxor.u32 %v3570, 2147483648
        %v3587 = vxor.u32 %v3571, 2147483648
        %v3588 = vxor.u32 %v3572, 2147483648
        %v3589 = vxor.u32 %v3573, 2147483648
        %v3590 = vxor.u32 %v3574, 2147483648
        %v3591 = vxor.u32 %v3575, 2147483648
        %v3592 = vxor.u32 %v3576, 2147483648
        %v3593 = vmul.f32 %v3577, 1.442695
        %v3594 = vpow.pop %v3593
        %v3595 = vmul.f32 %v3578, 1.442695
        %v3596 = vpow.pop %v3595
        %v3597 = vmul.f32 %v3579, 1.442695
        %v3598 = vpow.pop %v3597
        %v3599 = vmul.f32 %v3580, 1.442695
        %v3600 = vpow.pop %v3599
        %v3601 = vmul.f32 %v3581, 1.442695
        %v3602 = vpow.pop %v3601
        %v3603 = vmul.f32 %v3582, 1.442695
        %v3604 = vpow.pop %v3603
        %v3605 = vmul.f32 %v3583, 1.442695
        %v3606 = vpow.pop %v3605
        %v3607 = vmul.f32 %v3584, 1.442695
        %v3608 = vpow.pop %v3607
        %v3609 = vmul.f32 %v3585, 1.442695
        %v3610 = vpow.pop %v3609
        %v3611 = vmul.f32 %v3586, 1.442695
        %v3612 = vpow.pop %v3611
        %v3613 = vmul.f32 %v3587, 1.442695
        %v3614 = vpow.pop %v3613
        %v3615 = vmul.f32 %v3588, 1.442695
        %v3616 = vpow.pop %v3615
        %v3617 = vmul.f32 %v3589, 1.442695
        %v3618 = vpow.pop %v3617
        %v3619 = vmul.f32 %v3590, 1.442695
        %v3620 = vpow.pop %v3619
        %v3621 = vmul.f32 %v3591, 1.442695
        %v3622 = vpow.pop %v3621
        %v3623 = vmul.f32 %v3592, 1.442695
        %v3624 = vpow.pop %v3623
        %v3625 = vadd.f32 %v3594, 1.0
        %v3626 = vadd.f32 %v3596, 1.0
        %v3627 = vadd.f32 %v3598, 1.0
        %v3628 = vadd.f32 %v3600, 1.0
        %v3629 = vadd.f32 %v3602, 1.0
        %v3630 = vadd.f32 %v3604, 1.0
        %v3631 = vadd.f32 %v3606, 1.0
        %v3632 = vadd.f32 %v3608, 1.0
        %v3633 = vadd.f32 %v3610, 1.0
        %v3634 = vadd.f32 %v3612, 1.0
        %v3635 = vadd.f32 %v3614, 1.0
        %v3636 = vadd.f32 %v3616, 1.0
        %v3637 = vadd.f32 %v3618, 1.0
        %v3638 = vadd.f32 %v3620, 1.0
        %v3639 = vadd.f32 %v3622, 1.0
        %v3640 = vadd.f32 %v3624, 1.0
        %v3641 = vrcp.pop %v3625
        %v3642 = vmul.f32 1.0, %v3641
        %v3643 = vrcp.pop %v3626
        %v3644 = vmul.f32 1.0, %v3643
        %v3645 = vrcp.pop %v3627
        %v3646 = vmul.f32 1.0, %v3645
        %v3647 = vrcp.pop %v3628
        %v3648 = vmul.f32 1.0, %v3647
        %v3649 = vrcp.pop %v3629
        %v3650 = vmul.f32 1.0, %v3649
        %v3651 = vrcp.pop %v3630
        %v3652 = vmul.f32 1.0, %v3651
        %v3653 = vrcp.pop %v3631
        %v3654 = vmul.f32 1.0, %v3653
        %v3655 = vrcp.pop %v3632
        %v3656 = vmul.f32 1.0, %v3655
        %v3657 = vrcp.pop %v3633
        %v3658 = vmul.f32 1.0, %v3657
        %v3659 = vrcp.pop %v3634
        %v3660 = vmul.f32 1.0, %v3659
        %v3661 = vrcp.pop %v3635
        %v3662 = vmul.f32 1.0, %v3661
        %v3663 = vrcp.pop %v3636
        %v3664 = vmul.f32 1.0, %v3663
        %v3665 = vrcp.pop %v3637
        %v3666 = vmul.f32 1.0, %v3665
        %v3667 = vrcp.pop %v3638
        %v3668 = vmul.f32 1.0, %v3667
        %v3669 = vrcp.pop %v3639
        %v3670 = vmul.f32 1.0, %v3669
        %v3671 = vrcp.pop %v3640
        %v3672 = vmul.f32 1.0, %v3671
        %vm3673 = vcmask 7168
        %3674 = vst.msk [vmem:[%s410] sm:$0xff] %vm3673, %v3642
        %3675 = vst.msk [vmem:[%s410 + $0x8] sm:$0xff] %vm3673, %v3644
        %3676 = vst.msk [vmem:[%s410 + $0x10] sm:$0xff] %vm3673, %v3646
        %3677 = vst.msk [vmem:[%s410 + $0x18] sm:$0xff] %vm3673, %v3648
        %3678 = vst.msk [vmem:[%s410 + $0x20] sm:$0xff] %vm3673, %v3650
        %3679 = vst.msk [vmem:[%s410 + $0x28] sm:$0xff] %vm3673, %v3652
        %3680 = vst.msk [vmem:[%s410 + $0x30] sm:$0xff] %vm3673, %v3654
        %3681 = vst.msk [vmem:[%s410 + $0x38] sm:$0xff] %vm3673, %v3656
        %3682 = vst.msk [vmem:[%s410 + $0x40] sm:$0xff] %vm3673, %v3658
        %3683 = vst.msk [vmem:[%s410 + $0x48] sm:$0xff] %vm3673, %v3660
        %3684 = vst.msk [vmem:[%s410 + $0x50] sm:$0xff] %vm3673, %v3662
        %3685 = vst.msk [vmem:[%s410 + $0x58] sm:$0xff] %vm3673, %v3664
        %3686 = vst.msk [vmem:[%s410 + $0x60] sm:$0xff] %vm3673, %v3666
        %3687 = vst.msk [vmem:[%s410 + $0x68] sm:$0xff] %vm3673, %v3668
        %3688 = vst.msk [vmem:[%s410 + $0x70] sm:$0xff] %vm3673, %v3670
        %3689 = vst.msk [vmem:[%s410 + $0x78] sm:$0xff] %vm3673, %v3672
        %s3690 = smul.u32 16, %s27
        %p3691 = scmp.lt.s32.totalorder %s3690, 31
        %s3692 = scalar_select %p3691, %s3690, 31
        %s3693 = smul.addr %s3692, 8
        %s3694 = scalar_lea.vmem %s9, %s3693
        // Predicated region
        $region77: #{tpu_custom_call.1} parent=55 // pred_check
          %p3695 = pneg %p239
        $region78: #{tpu_custom_call.1} parent=55 // pred_check_branch
          %3697 = sbr.rel (%p3695) target = $region80
        $region79: #{tpu_custom_call.1} parent=55 // pred_region
          %s3698 = smul.u32 16, %s27
        $region80: #{tpu_custom_call.1} parent=55 // pred_fallthru
          _
      $region56: #{tpu_custom_call.1} parent=5 // pred_fallthru
        _
      %p3699 = scmp.le.s32.totalorder 2, %s22
      // Predicated region
      $region81: #{tpu_custom_call.1} parent=5 // pred_check
        %p3700 = pneg %p3699
      $region82: #{tpu_custom_call.1} parent=5 // pred_check_branch
        %3702 = sbr.rel (%p3700) target = $region84
      $region83: #{tpu_custom_call.1} parent=5 // pred_region
        %s3703 = ssub.s32 %s22, 2
        // Predicated region
        $region85: #{tpu_custom_call.1} parent=83 // pred_check
          %p3704 = pneg %p245
        $region86: #{tpu_custom_call.1} parent=83 // pred_check_branch
          %3706 = sbr.rel (%p3704) target = $region88
        $region87: #{tpu_custom_call.1} parent=83 // pred_region
          %s3707 = smul.u32 16, %s28
          %p3708 = scmp.lt.s32.totalorder %s3707, 31
          %s3709 = scalar_select %p3708, %s3707, 31
          %s3710 = smul.addr %s3709, 8
          %s3711 = scalar_lea.vmem %s9, %s3710
        $region88: #{tpu_custom_call.1} parent=83 // pred_fallthru
          _
      $region84: #{tpu_custom_call.1} parent=5 // pred_fallthru
        _
    $region6: #{tpu_custom_call.1} parent=1 // loop_footer
      %s26 = sadd.s32 1, %s22
    $region7: #{tpu_custom_call.1} parent=1 // loop_footer_branch
      %21 = sbr.rel target = $region3
    $region8: #{tpu_custom_call.1} parent=1 // loop_exit
      _
    %3712 = vsyncpa [#allocation4], 1
    %s3713 = scalar_lea.sflag [#allocation4], 1
    %3714 = vsyncpa %s3713, 1
    %3715 = vsyncpa [#allocation6], 1
    %3716 = vsyncpa [#allocation9], 1

</llo_original>
